<compile_context>
chip_gen: v5e
topology: v5e:2x2
jax: 0.10.0
libtpu: 0.0.40
codegen_flags: <defaults>
</compile_context>

<pallas_src>
import functools

import jax
import jax.numpy as jnp
from jax.experimental import pallas as pl
from jax.experimental.pallas import tpu as pltpu

# ---------------- configuration (small, consistent with the module) ----------------
BATCH             = 2
INPUT_CHANNELS    = 4
CONV_OUT_CHANNELS = 8
KERNEL_SIZE       = 3
HIDDEN_SIZE       = 16
NUM_LAYERS        = 2
OUTPUT_SIZE       = 4
N_EMBEDDINGS      = 32
EMBEDDING_DIM     = CONV_OUT_CHANNELS   # VQ codes live in conv-feature space
BETA              = 0.25
SEQ_LEN           = 16                  # input length L (even -> MaxPool1d(2,2) exact)
KAN_HIDDEN        = 128                 # KAN([hidden_size, 128, output_size])
GRID_SIZE         = 5                   # efficient-kan defaults
SPLINE_ORDER      = 3
GRID_RANGE        = (-1.0, 1.0)
LANE              = 128                 # lane-dense padding for the final output

# KAN uniform grid baked as compile-time constants (knots identical for every feature).
N_KNOTS = GRID_SIZE + 2 * SPLINE_ORDER + 1            # 12
N_BASIS = GRID_SIZE + SPLINE_ORDER                    # 8
H_STEP  = (GRID_RANGE[1] - GRID_RANGE[0]) / GRID_SIZE  # 0.4
KNOTS   = tuple(GRID_RANGE[0] + (j - SPLINE_ORDER) * H_STEP for j in range(N_KNOTS))

# Encoder: im2col width padded to 16 (12 receptive-field cols + 1 ones col + 3 zero).
K_AUG = 16

# ---- parameter-slab row offsets (all multiples of 8, lane width 128) ----
R_CONVW = 0                                # (16, 8)  rows 0-11 conv W, row 12 bias
R_EMB   = 16                               # (32, 8)  codebook e
R_EMBT  = 48                               # (8, 32)  codebook e^T
R_ESQ   = 56                               # (1, 32)  sum(e*e, axis=1)
R_WIH0  = 64                               # (8, 64)
R_WHH0  = 72                               # (16, 64)
R_B0    = 88                               # (1, 64)
R_WIH1  = 96                               # (16, 64)
R_WHH1  = 112                              # (16, 64)
R_B1    = 128                              # (1, 64)
R_WCAT1 = 136                              # (144, 128) fused KAN layer-1 weight
SLAB_ROWS = R_WCAT1 + HIDDEN_SIZE * (1 + N_BASIS)      # 280

VMEM_SPEC = pl.BlockSpec(memory_space=pltpu.MemorySpace.VMEM)
SMEM_SPEC = pl.BlockSpec(memory_space=pltpu.MemorySpace.SMEM)


# =====================================================================================
# Fused kernel: Encoder -> VQ -> LSTM -> KAN, everything resident in VMEM
# =====================================================================================
def _vqvae_kernel(xin_ref, slab_ref, wcat2_ref,
                  xhat_ref, stats_ref,
                  hseq_ref,
                  *, batch, steps, hidden, n_e, beta):
    f32 = jnp.float32
    tokens = steps * batch

    # ---------------- Encoder: Conv1d(+bias) + MaxPool1d(2,2) + ReLU ----------------
    # xin holds even-position receptive fields in rows [0:tokens) and odd positions in
    # rows [tokens:2*tokens), plus a ones column that folds in the conv bias.
    w_aug = slab_ref[R_CONVW:R_CONVW + K_AUG, 0:CONV_OUT_CHANNELS]      # (16, 8)
    acc = jnp.dot(xin_ref[...], w_aug, preferred_element_type=f32)      # (2*T*B, 8)
    z = jnp.maximum(jnp.maximum(acc[0:tokens, :], acc[tokens:2 * tokens, :]), 0.0)

    # ---------------- VectorQuantizer ------------------------------------------------
    # argmin is invariant to the per-row z^2 term, so d = e_sq - 2*(z . e) suffices.
    e_t   = slab_ref[R_EMBT:R_EMBT + EMBEDDING_DIM, 0:n_e]              # (D, n_e)
    e_sq  = slab_ref[R_ESQ:R_ESQ + 1, 0:n_e]                            # (1, n_e)
    cross = jnp.dot(z, e_t, preferred_element_type=f32)                 # (T*B, n_e)
    d = e_sq - 2.0 * cross
    d_min = jnp.min(d, axis=1, keepdims=True)
    lane = jax.lax.broadcasted_iota(jnp.int32, d.shape, 1)
    idx = jnp.min(jnp.where(d <= d_min, lane, n_e), axis=1, keepdims=True)   # 1st argmin
    onehot = (lane == idx).astype(f32)                                   # scatter_(1, idx, 1)
    emb = slab_ref[R_EMB:R_EMB + n_e, 0:EMBEDDING_DIM]                   # (n_e, D)
    z_q = jnp.dot(onehot, emb, preferred_element_type=f32)               # (T*B, D)
    diff = z_q - z
    # loss = mean((zq.detach()-z)^2) + beta*mean((zq-z.detach())^2)  (forward value)
    stats_ref[0] = (1.0 + beta) * jnp.mean(diff * diff)
    e_mean = jnp.mean(onehot, axis=0, keepdims=True)
    stats_ref[1] = jnp.exp(-jnp.sum(e_mean * jnp.log(e_mean + 1e-10)))

    # ---------------- Decoder part 1: 2-layer LSTM, keep out[:, -1, :] ---------------
    # Fused gate weights (in,4H)/(H,4H): one input projection per layer over all
    # timesteps + ONE recurrent matmul per step; sigmoid/tanh each applied once over
    # the (B,64) gate tensor, gate order [i, f, g, o] matches nn.LSTM.
    layer_w = (
        (slab_ref[R_WIH0:R_WIH0 + EMBEDDING_DIM, 0:4 * hidden],
         slab_ref[R_WHH0:R_WHH0 + hidden, 0:4 * hidden],
         slab_ref[R_B0:R_B0 + 1, 0:4 * hidden]),
        (slab_ref[R_WIH1:R_WIH1 + hidden, 0:4 * hidden],
         slab_ref[R_WHH1:R_WHH1 + hidden, 0:4 * hidden],
         slab_ref[R_B1:R_B1 + 1, 0:4 * hidden]),
    )
    h = jnp.zeros((batch, hidden), f32)
    for layer, (wih, whh, b) in enumerate(layer_w):
        inp = z_q if layer == 0 else hseq_ref[...]
        proj = jnp.dot(inp, wih, preferred_element_type=f32) + b         # (T*B, 4H)
        h = jnp.zeros((batch, hidden), f32)
        c = jnp.zeros((batch, hidden), f32)
        for t in range(steps):                                           # fully unrolled
            r = t * batch
            gates = proj[r:r + batch, :] + jnp.dot(h, whh, preferred_element_type=f32)
            sg = jax.nn.sigmoid(gates)                                   # 1 EUP push
            th = jnp.tanh(gates)                                         # 1 EUP push
            i_g = sg[:, 0:hidden]
            f_g = sg[:, hidden:2 * hidden]
            g_g = th[:, 2 * hidden:3 * hidden]
            o_g = sg[:, 3 * hidden:4 * hidden]
            c = f_g * c + i_g * g_g
            h = o_g * jnp.tanh(c)
            if layer == 0:
                hseq_ref[r:r + batch, :] = h                             # next layer input
    h_last = h                                                           # (B, H)

    # ---------------- Decoder part 2: KAN([hidden, 128, output]) ---------------------
    # efficient-kan KANLinear collapsed to ONE matmul per layer on
    # concat([silu(x), B_0(x), ..., B_7(x)]); uniform knots are compile-time constants,
    # Cox–de Boor denominators fold to constant multiplies (no divides, no grid refs).
    def kan_feats(x):
        nb0 = N_KNOTS - 1
        bases = [((x >= KNOTS[j]) & (x < KNOTS[j + 1])).astype(f32) for j in range(nb0)]
        for k in range(1, SPLINE_ORDER + 1):
            inv = 1.0 / (k * H_STEP)
            bases = [(x - KNOTS[j]) * inv * bases[j]
                     + (KNOTS[j + k + 1] - x) * inv * bases[j + 1]
                     for j in range(nb0 - k)]
        return jnp.concatenate([jax.nn.silu(x)] + bases, axis=1)

    wcat1 = slab_ref[R_WCAT1:R_WCAT1 + hidden * (1 + N_BASIS), :]        # (144, 128)
    h1 = jnp.dot(kan_feats(h_last), wcat1, preferred_element_type=f32)   # (B, 128)
    xhat_ref[...] = jnp.dot(kan_feats(h1), wcat2_ref[...],
                            preferred_element_type=f32)                  # (B, 128) lane-dense


# =====================================================================================
# Parameter initialization (deterministic, synthetic) -- packed kernel layouts
# =====================================================================================
def init_params(key):
    f32 = jnp.float32
    keys = jax.random.split(key, 20)

    # nn.Conv1d(input_channels, conv_out_channels, kernel_size): flatten so row k*C_in+c
    # matches the im2col feature order; row 12 holds the bias (ones-column fold).
    conv_w = 0.2 * jax.random.normal(
        keys[0], (CONV_OUT_CHANNELS, INPUT_CHANNELS, KERNEL_SIZE), f32)
    conv_b = 0.1 * jax.random.normal(keys[1], (CONV_OUT_CHANNELS,), f32)
    w_flat = jnp.transpose(conv_w, (2, 1, 0)).reshape(
        KERNEL_SIZE * INPUT_CHANNELS, CONV_OUT_CHANNELS)
    w_aug = jnp.zeros((K_AUG, CONV_OUT_CHANNELS), f32)
    w_aug = w_aug.at[:w_flat.shape[0]].set(w_flat)
    w_aug = w_aug.at[KERNEL_SIZE * INPUT_CHANNELS].set(conv_b)

    # VectorQuantizer codebook ~ U(-1/n_e, 1/n_e); pre-transposed + precomputed e_sq.
    emb = jax.random.uniform(keys[2], (N_EMBEDDINGS, EMBEDDING_DIM), f32,
                             minval=-1.0 / N_EMBEDDINGS, maxval=1.0 / N_EMBEDDINGS)
    emb_t = emb.T                                        # (D, n_e)
    e_sq = jnp.sum(emb * emb, axis=1)[None, :]           # (1, n_e)

    # nn.LSTM(conv_out_channels, hidden_size, 2, batch_first=True):
    # fused-gate layout (in,4H)/(H,4H)/(1,4H), gate order [i,f,g,o].
    lstm, k = [], 3
    for layer in range(NUM_LAYERS):
        in_dim = CONV_OUT_CHANNELS if layer == 0 else HIDDEN_SIZE
        w_ih = 0.1 * jax.random.normal(keys[k], (4 * HIDDEN_SIZE, in_dim), f32)
        w_hh = 0.1 * jax.random.normal(keys[k + 1], (4 * HIDDEN_SIZE, HIDDEN_SIZE), f32)
        b_ih = 0.1 * jax.random.normal(keys[k + 2], (4 * HIDDEN_SIZE,), f32)
        b_hh = 0.1 * jax.random.normal(keys[k + 3], (4 * HIDDEN_SIZE,), f32)
        k += 4
        lstm.append((w_ih.T, w_hh.T, (b_ih + b_hh)[None, :]))

    # KAN([hidden_size, 128, output_size]) -- fused per-layer weight on
    # concat([silu(x), B_0(x), ..., B_{n_basis-1}(x)]) features.
    kan_w = []
    dims = [HIDDEN_SIZE, KAN_HIDDEN, OUTPUT_SIZE]
    for layer in range(len(dims) - 1):
        in_f, out_f = dims[layer], dims[layer + 1]
        base_w = 0.1 * jax.random.normal(keys[k], (out_f, in_f), f32)
        spline_w = 0.1 * jax.random.normal(keys[k + 1], (out_f, in_f, N_BASIS), f32)
        spline_scaler = 1.0 + 0.05 * jax.random.normal(keys[k + 2], (out_f, in_f), f32)
        k += 3
        scaled = spline_w * spline_scaler[:, :, None]     # standalone scaler folded in
        w_cat = jnp.concatenate(
            [base_w.T] + [scaled[:, :, j].T for j in range(N_BASIS)], axis=0)
        if out_f < LANE:                                  # lane-dense output padding
            w_cat = jnp.pad(w_cat, ((0, 0), (0, LANE - out_f)))
        kan_w.append(w_cat)

    # Pack everything except the large KAN layer-2 weight into ONE (280,128) slab.
    pieces = [
        (R_CONVW, w_aug),
        (R_EMB, emb), (R_EMBT, emb_t), (R_ESQ, e_sq),
        (R_WIH0, lstm[0][0]), (R_WHH0, lstm[0][1]), (R_B0, lstm[0][2]),
        (R_WIH1, lstm[1][0]), (R_WHH1, lstm[1][1]), (R_B1, lstm[1][2]),
        (R_WCAT1, kan_w[0]),
    ]
    slab = jnp.zeros((SLAB_ROWS, LANE), f32)
    for r, a in pieces:
        slab = slab.at[r:r + a.shape[0], :a.shape[1]].set(a)
    return {'slab': slab, 'wcat2': kan_w[1]}


# =====================================================================================
# VQVAE.forward
# =====================================================================================
def vqvae_pallas(params, x):
    batch, c_in, length = x.shape
    ksize = KERNEL_SIZE
    pad = ksize // 2
    steps = length // 2

    # im2col of the conv receptive fields, token-major (t*B + b); even output positions
    # in the top half, odd in the bottom half (the in-kernel max = MaxPool1d(2,2));
    # a ones column folds in the conv bias; padded to K_AUG lanes.
    xpad = jnp.pad(x, ((0, 0), (0, 0), (pad, pad)))
    win = jnp.stack([xpad[:, :, k:k + length] for k in range(ksize)], axis=0)  # (K,B,C,L)
    win = jnp.transpose(win, (3, 1, 0, 2)).reshape(length, batch, ksize * c_in)
    x_even = win[0::2].reshape(steps * batch, ksize * c_in)
    x_odd = win[1::2].reshape(steps * batch, ksize * c_in)
    xin = jnp.concatenate([x_even, x_odd], axis=0)                             # (2TB, 12)
    xin = jnp.concatenate([xin, jnp.ones((2 * steps * batch, 1), jnp.float32)], axis=1)
    xin = jnp.pad(xin, ((0, 0), (0, K_AUG - xin.shape[1])))                    # (2TB, 16)

    kern = functools.partial(_vqvae_kernel, batch=batch, steps=steps,
                             hidden=HIDDEN_SIZE, n_e=N_EMBEDDINGS, beta=BETA)
    xhat_pad, stats = pl.pallas_call(
        kern,
        out_shape=(jax.ShapeDtypeStruct((batch, LANE), jnp.float32),   # lane-dense x_hat
                   jax.ShapeDtypeStruct((2,), jnp.float32)),           # [loss, perplexity]
        in_specs=[VMEM_SPEC, VMEM_SPEC, VMEM_SPEC],
        out_specs=(VMEM_SPEC, SMEM_SPEC),
        scratch_shapes=[pltpu.VMEM((steps * batch, HIDDEN_SIZE), jnp.float32)],
        compiler_params=pltpu.CompilerParams(vmem_limit_bytes=16 * 1024 * 1024),
    )(xin, params['slab'], params['wcat2'])
    return stats[0], xhat_pad[:, :OUTPUT_SIZE], stats[1]


vqvae_forward = jax.jit(vqvae_pallas)


if __name__ == "__main__":
    key = jax.random.PRNGKey(0)
    pkey, xkey = jax.random.split(key)
    params = init_params(pkey)
    x = jax.random.normal(xkey, (BATCH, INPUT_CHANNELS, SEQ_LEN), jnp.float32)
    emb_loss, x_hat, perplexity = vqvae_forward(params, x)
    jax.block_until_ready((emb_loss, x_hat, perplexity))
    assert x_hat.shape == (BATCH, OUTPUT_SIZE)
    assert emb_loss.shape == () and perplexity.shape == ()
    print("KERNEL_OK")
</pallas_src>

<mosaic_0001>
module attributes {stable_mosaic.version = 11 : i64} {
  func.func @_vqvae_kernel(%arg0: memref<32x16xf32, #tpu.memory_space<vmem>>, %arg1: memref<280x128xf32, #tpu.memory_space<vmem>>, %arg2: memref<1152x128xf32, #tpu.memory_space<vmem>>, %arg3: memref<2x128xf32, #tpu.memory_space<vmem>>, %arg4: memref<2xf32, #tpu.memory_space<smem>>, %arg5: memref<16x16xf32, #tpu.memory_space<vmem>>) attributes {dimension_semantics = [], scalar_prefetch = 0 : i64, scratch_operands = 1 : i64, tpu.core_type = #tpu.core_type<tc>} {
    %c0 = arith.constant 0 : index
    %c0_0 = arith.constant 0 : index
    %0 = vector.load %arg1[%c0, %c0_0] : memref<280x128xf32, #tpu.memory_space<vmem>>, vector<16x8xf32>
    %c0_1 = arith.constant 0 : index
    %c0_2 = arith.constant 0 : index
    %1 = vector.load %arg0[%c0_1, %c0_2] : memref<32x16xf32, #tpu.memory_space<vmem>>, vector<32x16xf32>
    %cst = arith.constant dense<0.000000e+00> : vector<32x8xf32>
    %2 = tpu.matmul %1, %0, %cst {dimension_numbers = #tpu.dot_dimension_numbers<[1], [0], [0], [1], [0, 0, 1, 1], [], []>} : vector<32x16xf32>, vector<16x8xf32>, vector<32x8xf32> -> vector<32x8xf32>
    %3 = vector.extract_strided_slice %2 {offsets = [0, 0], sizes = [16, 8], strides = [1, 1]} : vector<32x8xf32> to vector<16x8xf32>
    %4 = vector.extract_strided_slice %2 {offsets = [16, 0], sizes = [16, 8], strides = [1, 1]} : vector<32x8xf32> to vector<16x8xf32>
    %5 = arith.maximumf %3, %4 : vector<16x8xf32>
    %cst_3 = arith.constant 0.000000e+00 : f32
    %6 = vector.broadcast %cst_3 : f32 to vector<16x8xf32>
    %7 = arith.maximumf %5, %6 : vector<16x8xf32>
    %c48 = arith.constant 48 : index
    %c0_4 = arith.constant 0 : index
    %8 = vector.load %arg1[%c48, %c0_4] : memref<280x128xf32, #tpu.memory_space<vmem>>, vector<8x32xf32>
    %c56 = arith.constant 56 : index
    %c0_5 = arith.constant 0 : index
    %9 = vector.load %arg1[%c56, %c0_5] : memref<280x128xf32, #tpu.memory_space<vmem>>, vector<1x32xf32>
    %cst_6 = arith.constant dense<0.000000e+00> : vector<16x32xf32>
    %10 = tpu.matmul %7, %8, %cst_6 {dimension_numbers = #tpu.dot_dimension_numbers<[1], [0], [0], [1], [0, 0, 1, 1], [], []>} : vector<16x8xf32>, vector<8x32xf32>, vector<16x32xf32> -> vector<16x32xf32>
    %cst_7 = arith.constant 2.000000e+00 : f32
    %11 = vector.broadcast %cst_7 : f32 to vector<16x32xf32>
    %12 = arith.mulf %11, %10 : vector<16x32xf32>
    %13 = vector.broadcast %9 : vector<1x32xf32> to vector<16x32xf32>
    %14 = arith.subf %13, %12 : vector<16x32xf32>
    %cst_8 = arith.constant dense<0x7F800000> : vector<16xf32>
    %15 = vector.multi_reduction <minimumf>, %14, %cst_8 [1] : vector<16x32xf32> to vector<16xf32>
    %16 = vector.shape_cast %15 : vector<16xf32> to vector<16x1xf32>
    %17 = tpu.iota {dimensions = array<i32: 1>} : vector<16x32xi32>
    %18 = vector.broadcast %16 : vector<16x1xf32> to vector<16x32xf32>
    %19 = arith.cmpf ole, %14, %18 : vector<16x32xf32>
    %c32_i32 = arith.constant 32 : i32
    %20 = vector.broadcast %c32_i32 : i32 to vector<16x32xi32>
    %21 = arith.select %19, %17, %20 : vector<16x32xi1>, vector<16x32xi32>
    %cst_9 = arith.constant dense<2147483647> : vector<16xi32>
    %22 = vector.multi_reduction <minsi>, %21, %cst_9 [1] : vector<16x32xi32> to vector<16xi32>
    %23 = vector.shape_cast %22 : vector<16xi32> to vector<16x1xi32>
    %24 = vector.broadcast %23 : vector<16x1xi32> to vector<16x32xi32>
    %25 = arith.cmpi eq, %17, %24 : vector<16x32xi32>
    %26 = arith.extui %25 : vector<16x32xi1> to vector<16x32xi32>
    %27 = arith.sitofp %26 : vector<16x32xi32> to vector<16x32xf32>
    %c16 = arith.constant 16 : index
    %c0_10 = arith.constant 0 : index
    %28 = vector.load %arg1[%c16, %c0_10] : memref<280x128xf32, #tpu.memory_space<vmem>>, vector<32x8xf32>
    %cst_11 = arith.constant dense<0.000000e+00> : vector<16x8xf32>
    %29 = tpu.matmul %27, %28, %cst_11 {dimension_numbers = #tpu.dot_dimension_numbers<[1], [0], [0], [1], [0, 0, 1, 1], [], []>} : vector<16x32xf32>, vector<32x8xf32>, vector<16x8xf32> -> vector<16x8xf32>
    %30 = arith.subf %29, %7 : vector<16x8xf32>
    %31 = arith.mulf %30, %30 : vector<16x8xf32>
    %32 = vector.shape_cast %31 : vector<16x8xf32> to vector<1x16x8xf32>
    %cst_12 = arith.constant dense<0.000000e+00> : vector<1xf32>
    %33 = vector.multi_reduction <add>, %32, %cst_12 [1, 2] : vector<1x16x8xf32> to vector<1xf32>
    %34 = vector.shape_cast %33 : vector<1xf32> to vector<1x1x1xf32>
    %35 = vector.extract %34[0, 0, 0] : f32 from vector<1x1x1xf32>
    %cst_13 = arith.constant 1.280000e+02 : f32
    %36 = arith.divf %35, %cst_13 : f32
    %cst_14 = arith.constant 1.250000e+00 : f32
    %37 = arith.mulf %cst_14, %36 : f32
    %c0_15 = arith.constant 0 : index
    %38 = memref.load %arg4[%c0_15] : memref<2xf32, #tpu.memory_space<smem>>
    memref.store %37, %arg4[%c0_15] : memref<2xf32, #tpu.memory_space<smem>>
    %cst_16 = arith.constant dense<0.000000e+00> : vector<32xf32>
    %39 = vector.multi_reduction <add>, %27, %cst_16 [0] : vector<16x32xf32> to vector<32xf32>
    %40 = vector.shape_cast %39 : vector<32xf32> to vector<1x32xf32>
    %cst_17 = arith.constant 1.600000e+01 : f32
    %41 = vector.broadcast %cst_17 : f32 to vector<1x32xf32>
    %42 = arith.divf %40, %41 : vector<1x32xf32>
    %cst_18 = arith.constant 1.000000e-10 : f32
    %43 = vector.broadcast %cst_18 : f32 to vector<1x32xf32>
    %44 = arith.addf %42, %43 : vector<1x32xf32>
    %45 = math.log %44 : vector<1x32xf32>
    %46 = arith.mulf %42, %45 : vector<1x32xf32>
    %47 = vector.shape_cast %46 : vector<1x32xf32> to vector<1x1x32xf32>
    %cst_19 = arith.constant dense<0.000000e+00> : vector<1xf32>
    %48 = vector.multi_reduction <add>, %47, %cst_19 [1, 2] : vector<1x1x32xf32> to vector<1xf32>
    %49 = vector.shape_cast %48 : vector<1xf32> to vector<1x1x1xf32>
    %50 = vector.extract %49[0, 0, 0] : f32 from vector<1x1x1xf32>
    %cst_20 = arith.constant 0.000000e+00 : f32
    %51 = arith.subf %cst_20, %50 : f32
    %52 = math.exp %51 : f32
    %c1 = arith.constant 1 : index
    %53 = memref.load %arg4[%c1] : memref<2xf32, #tpu.memory_space<smem>>
    memref.store %52, %arg4[%c1] : memref<2xf32, #tpu.memory_space<smem>>
    %c64 = arith.constant 64 : index
    %c0_21 = arith.constant 0 : index
    %54 = vector.load %arg1[%c64, %c0_21] : memref<280x128xf32, #tpu.memory_space<vmem>>, vector<8x64xf32>
    %c72 = arith.constant 72 : index
    %c0_22 = arith.constant 0 : index
    %55 = vector.load %arg1[%c72, %c0_22] : memref<280x128xf32, #tpu.memory_space<vmem>>, vector<16x64xf32>
    %c88 = arith.constant 88 : index
    %c0_23 = arith.constant 0 : index
    %56 = vector.load %arg1[%c88, %c0_23] : memref<280x128xf32, #tpu.memory_space<vmem>>, vector<1x64xf32>
    %c96 = arith.constant 96 : index
    %c0_24 = arith.constant 0 : index
    %57 = vector.load %arg1[%c96, %c0_24] : memref<280x128xf32, #tpu.memory_space<vmem>>, vector<16x64xf32>
    %c112 = arith.constant 112 : index
    %c0_25 = arith.constant 0 : index
    %58 = vector.load %arg1[%c112, %c0_25] : memref<280x128xf32, #tpu.memory_space<vmem>>, vector<16x64xf32>
    %c128 = arith.constant 128 : index
    %c0_26 = arith.constant 0 : index
    %59 = vector.load %arg1[%c128, %c0_26] : memref<280x128xf32, #tpu.memory_space<vmem>>, vector<1x64xf32>
    %cst_27 = arith.constant dense<0.000000e+00> : vector<16x64xf32>
    %60 = tpu.matmul %29, %54, %cst_27 {dimension_numbers = #tpu.dot_dimension_numbers<[1], [0], [0], [1], [0, 0, 1, 1], [], []>} : vector<16x8xf32>, vector<8x64xf32>, vector<16x64xf32> -> vector<16x64xf32>
    %61 = vector.broadcast %56 : vector<1x64xf32> to vector<16x64xf32>
    %62 = arith.addf %60, %61 : vector<16x64xf32>
    %cst_28 = arith.constant 0.000000e+00 : f32
    %63 = vector.broadcast %cst_28 : f32 to vector<2x16xf32>
    %cst_29 = arith.constant 0.000000e+00 : f32
    %64 = vector.broadcast %cst_29 : f32 to vector<2x16xf32>
    %65 = vector.extract_strided_slice %62 {offsets = [0, 0], sizes = [2, 64], strides = [1, 1]} : vector<16x64xf32> to vector<2x64xf32>
    %cst_30 = arith.constant dense<0.000000e+00> : vector<2x64xf32>
    %66 = tpu.matmul %63, %55, %cst_30 {dimension_numbers = #tpu.dot_dimension_numbers<[1], [0], [0], [1], [0, 0, 1, 1], [], []>} : vector<2x16xf32>, vector<16x64xf32>, vector<2x64xf32> -> vector<2x64xf32>
    %67 = arith.addf %65, %66 : vector<2x64xf32>
    %68 = arith.negf %67 : vector<2x64xf32>
    %69 = math.exp %68 : vector<2x64xf32>
    %cst_31 = arith.constant 1.000000e+00 : f32
    %70 = vector.broadcast %cst_31 : f32 to vector<2x64xf32>
    %71 = arith.addf %70, %69 : vector<2x64xf32>
    %72 = arith.divf %70, %71 : vector<2x64xf32>
    %73 = math.tanh %67 : vector<2x64xf32>
    %74 = vector.extract_strided_slice %72 {offsets = [0, 0], sizes = [2, 16], strides = [1, 1]} : vector<2x64xf32> to vector<2x16xf32>
    %75 = vector.extract_strided_slice %72 {offsets = [0, 16], sizes = [2, 16], strides = [1, 1]} : vector<2x64xf32> to vector<2x16xf32>
    %76 = vector.extract_strided_slice %73 {offsets = [0, 32], sizes = [2, 16], strides = [1, 1]} : vector<2x64xf32> to vector<2x16xf32>
    %77 = vector.extract_strided_slice %72 {offsets = [0, 48], sizes = [2, 16], strides = [1, 1]} : vector<2x64xf32> to vector<2x16xf32>
    %78 = arith.mulf %75, %64 : vector<2x16xf32>
    %79 = arith.mulf %74, %76 : vector<2x16xf32>
    %80 = arith.addf %78, %79 : vector<2x16xf32>
    %81 = math.tanh %80 : vector<2x16xf32>
    %82 = arith.mulf %77, %81 : vector<2x16xf32>
    %c0_32 = arith.constant 0 : index
    %c0_33 = arith.constant 0 : index
    %83 = vector.load %arg5[%c0_32, %c0_33] : memref<16x16xf32, #tpu.memory_space<vmem>>, vector<2x16xf32>
    tpu.vector_store %arg5[%c0_32, %c0_33], %82 {strides = array<i32>} : memref<16x16xf32, #tpu.memory_space<vmem>>, vector<2x16xf32>,
    %84 = vector.extract_strided_slice %62 {offsets = [2, 0], sizes = [2, 64], strides = [1, 1]} : vector<16x64xf32> to vector<2x64xf32>
    %cst_34 = arith.constant dense<0.000000e+00> : vector<2x64xf32>
    %85 = tpu.matmul %82, %55, %cst_34 {dimension_numbers = #tpu.dot_dimension_numbers<[1], [0], [0], [1], [0, 0, 1, 1], [], []>} : vector<2x16xf32>, vector<16x64xf32>, vector<2x64xf32> -> vector<2x64xf32>
    %86 = arith.addf %84, %85 : vector<2x64xf32>
    %87 = arith.negf %86 : vector<2x64xf32>
    %88 = math.exp %87 : vector<2x64xf32>
    %cst_35 = arith.constant 1.000000e+00 : f32
    %89 = vector.broadcast %cst_35 : f32 to vector<2x64xf32>
    %90 = arith.addf %89, %88 : vector<2x64xf32>
    %91 = arith.divf %89, %90 : vector<2x64xf32>
    %92 = math.tanh %86 : vector<2x64xf32>
    %93 = vector.extract_strided_slice %91 {offsets = [0, 0], sizes = [2, 16], strides = [1, 1]} : vector<2x64xf32> to vector<2x16xf32>
    %94 = vector.extract_strided_slice %91 {offsets = [0, 16], sizes = [2, 16], strides = [1, 1]} : vector<2x64xf32> to vector<2x16xf32>
    %95 = vector.extract_strided_slice %92 {offsets = [0, 32], sizes = [2, 16], strides = [1, 1]} : vector<2x64xf32> to vector<2x16xf32>
    %96 = vector.extract_strided_slice %91 {offsets = [0, 48], sizes = [2, 16], strides = [1, 1]} : vector<2x64xf32> to vector<2x16xf32>
    %97 = arith.mulf %94, %80 : vector<2x16xf32>
    %98 = arith.mulf %93, %95 : vector<2x16xf32>
    %99 = arith.addf %97, %98 : vector<2x16xf32>
    %100 = math.tanh %99 : vector<2x16xf32>
    %101 = arith.mulf %96, %100 : vector<2x16xf32>
    %c2 = arith.constant 2 : index
    %c0_36 = arith.constant 0 : index
    %102 = vector.load %arg5[%c2, %c0_36] : memref<16x16xf32, #tpu.memory_space<vmem>>, vector<2x16xf32>
    tpu.vector_store %arg5[%c2, %c0_36], %101 {strides = array<i32>} : memref<16x16xf32, #tpu.memory_space<vmem>>, vector<2x16xf32>,
    %103 = vector.extract_strided_slice %62 {offsets = [4, 0], sizes = [2, 64], strides = [1, 1]} : vector<16x64xf32> to vector<2x64xf32>
    %cst_37 = arith.constant dense<0.000000e+00> : vector<2x64xf32>
    %104 = tpu.matmul %101, %55, %cst_37 {dimension_numbers = #tpu.dot_dimension_numbers<[1], [0], [0], [1], [0, 0, 1, 1], [], []>} : vector<2x16xf32>, vector<16x64xf32>, vector<2x64xf32> -> vector<2x64xf32>
    %105 = arith.addf %103, %104 : vector<2x64xf32>
    %106 = arith.negf %105 : vector<2x64xf32>
    %107 = math.exp %106 : vector<2x64xf32>
    %cst_38 = arith.constant 1.000000e+00 : f32
    %108 = vector.broadcast %cst_38 : f32 to vector<2x64xf32>
    %109 = arith.addf %108, %107 : vector<2x64xf32>
    %110 = arith.divf %108, %109 : vector<2x64xf32>
    %111 = math.tanh %105 : vector<2x64xf32>
    %112 = vector.extract_strided_slice %110 {offsets = [0, 0], sizes = [2, 16], strides = [1, 1]} : vector<2x64xf32> to vector<2x16xf32>
    %113 = vector.extract_strided_slice %110 {offsets = [0, 16], sizes = [2, 16], strides = [1, 1]} : vector<2x64xf32> to vector<2x16xf32>
    %114 = vector.extract_strided_slice %111 {offsets = [0, 32], sizes = [2, 16], strides = [1, 1]} : vector<2x64xf32> to vector<2x16xf32>
    %115 = vector.extract_strided_slice %110 {offsets = [0, 48], sizes = [2, 16], strides = [1, 1]} : vector<2x64xf32> to vector<2x16xf32>
    %116 = arith.mulf %113, %99 : vector<2x16xf32>
    %117 = arith.mulf %112, %114 : vector<2x16xf32>
    %118 = arith.addf %116, %117 : vector<2x16xf32>
    %119 = math.tanh %118 : vector<2x16xf32>
    %120 = arith.mulf %115, %119 : vector<2x16xf32>
    %c4 = arith.constant 4 : index
    %c0_39 = arith.constant 0 : index
    %121 = vector.load %arg5[%c4, %c0_39] : memref<16x16xf32, #tpu.memory_space<vmem>>, vector<2x16xf32>
    tpu.vector_store %arg5[%c4, %c0_39], %120 {strides = array<i32>} : memref<16x16xf32, #tpu.memory_space<vmem>>, vector<2x16xf32>,
    %122 = vector.extract_strided_slice %62 {offsets = [6, 0], sizes = [2, 64], strides = [1, 1]} : vector<16x64xf32> to vector<2x64xf32>
    %cst_40 = arith.constant dense<0.000000e+00> : vector<2x64xf32>
    %123 = tpu.matmul %120, %55, %cst_40 {dimension_numbers = #tpu.dot_dimension_numbers<[1], [0], [0], [1], [0, 0, 1, 1], [], []>} : vector<2x16xf32>, vector<16x64xf32>, vector<2x64xf32> -> vector<2x64xf32>
    %124 = arith.addf %122, %123 : vector<2x64xf32>
    %125 = arith.negf %124 : vector<2x64xf32>
    %126 = math.exp %125 : vector<2x64xf32>
    %cst_41 = arith.constant 1.000000e+00 : f32
    %127 = vector.broadcast %cst_41 : f32 to vector<2x64xf32>
    %128 = arith.addf %127, %126 : vector<2x64xf32>
    %129 = arith.divf %127, %128 : vector<2x64xf32>
    %130 = math.tanh %124 : vector<2x64xf32>
    %131 = vector.extract_strided_slice %129 {offsets = [0, 0], sizes = [2, 16], strides = [1, 1]} : vector<2x64xf32> to vector<2x16xf32>
    %132 = vector.extract_strided_slice %129 {offsets = [0, 16], sizes = [2, 16], strides = [1, 1]} : vector<2x64xf32> to vector<2x16xf32>
    %133 = vector.extract_strided_slice %130 {offsets = [0, 32], sizes = [2, 16], strides = [1, 1]} : vector<2x64xf32> to vector<2x16xf32>
    %134 = vector.extract_strided_slice %129 {offsets = [0, 48], sizes = [2, 16], strides = [1, 1]} : vector<2x64xf32> to vector<2x16xf32>
    %135 = arith.mulf %132, %118 : vector<2x16xf32>
    %136 = arith.mulf %131, %133 : vector<2x16xf32>
    %137 = arith.addf %135, %136 : vector<2x16xf32>
    %138 = math.tanh %137 : vector<2x16xf32>
    %139 = arith.mulf %134, %138 : vector<2x16xf32>
    %c6 = arith.constant 6 : index
    %c0_42 = arith.constant 0 : index
    %140 = vector.load %arg5[%c6, %c0_42] : memref<16x16xf32, #tpu.memory_space<vmem>>, vector<2x16xf32>
    tpu.vector_store %arg5[%c6, %c0_42], %139 {strides = array<i32>} : memref<16x16xf32, #tpu.memory_space<vmem>>, vector<2x16xf32>,
    %141 = vector.extract_strided_slice %62 {offsets = [8, 0], sizes = [2, 64], strides = [1, 1]} : vector<16x64xf32> to vector<2x64xf32>
    %cst_43 = arith.constant dense<0.000000e+00> : vector<2x64xf32>
    %142 = tpu.matmul %139, %55, %cst_43 {dimension_numbers = #tpu.dot_dimension_numbers<[1], [0], [0], [1], [0, 0, 1, 1], [], []>} : vector<2x16xf32>, vector<16x64xf32>, vector<2x64xf32> -> vector<2x64xf32>
    %143 = arith.addf %141, %142 : vector<2x64xf32>
    %144 = arith.negf %143 : vector<2x64xf32>
    %145 = math.exp %144 : vector<2x64xf32>
    %cst_44 = arith.constant 1.000000e+00 : f32
    %146 = vector.broadcast %cst_44 : f32 to vector<2x64xf32>
    %147 = arith.addf %146, %145 : vector<2x64xf32>
    %148 = arith.divf %146, %147 : vector<2x64xf32>
    %149 = math.tanh %143 : vector<2x64xf32>
    %150 = vector.extract_strided_slice %148 {offsets = [0, 0], sizes = [2, 16], strides = [1, 1]} : vector<2x64xf32> to vector<2x16xf32>
    %151 = vector.extract_strided_slice %148 {offsets = [0, 16], sizes = [2, 16], strides = [1, 1]} : vector<2x64xf32> to vector<2x16xf32>
    %152 = vector.extract_strided_slice %149 {offsets = [0, 32], sizes = [2, 16], strides = [1, 1]} : vector<2x64xf32> to vector<2x16xf32>
    %153 = vector.extract_strided_slice %148 {offsets = [0, 48], sizes = [2, 16], strides = [1, 1]} : vector<2x64xf32> to vector<2x16xf32>
    %154 = arith.mulf %151, %137 : vector<2x16xf32>
    %155 = arith.mulf %150, %152 : vector<2x16xf32>
    %156 = arith.addf %154, %155 : vector<2x16xf32>
    %157 = math.tanh %156 : vector<2x16xf32>
    %158 = arith.mulf %153, %157 : vector<2x16xf32>
    %c8 = arith.constant 8 : index
    %c0_45 = arith.constant 0 : index
    %159 = vector.load %arg5[%c8, %c0_45] : memref<16x16xf32, #tpu.memory_space<vmem>>, vector<2x16xf32>
    tpu.vector_store %arg5[%c8, %c0_45], %158 {strides = array<i32>} : memref<16x16xf32, #tpu.memory_space<vmem>>, vector<2x16xf32>,
    %160 = vector.extract_strided_slice %62 {offsets = [10, 0], sizes = [2, 64], strides = [1, 1]} : vector<16x64xf32> to vector<2x64xf32>
    %cst_46 = arith.constant dense<0.000000e+00> : vector<2x64xf32>
    %161 = tpu.matmul %158, %55, %cst_46 {dimension_numbers = #tpu.dot_dimension_numbers<[1], [0], [0], [1], [0, 0, 1, 1], [], []>} : vector<2x16xf32>, vector<16x64xf32>, vector<2x64xf32> -> vector<2x64xf32>
    %162 = arith.addf %160, %161 : vector<2x64xf32>
    %163 = arith.negf %162 : vector<2x64xf32>
    %164 = math.exp %163 : vector<2x64xf32>
    %cst_47 = arith.constant 1.000000e+00 : f32
    %165 = vector.broadcast %cst_47 : f32 to vector<2x64xf32>
    %166 = arith.addf %165, %164 : vector<2x64xf32>
    %167 = arith.divf %165, %166 : vector<2x64xf32>
    %168 = math.tanh %162 : vector<2x64xf32>
    %169 = vector.extract_strided_slice %167 {offsets = [0, 0], sizes = [2, 16], strides = [1, 1]} : vector<2x64xf32> to vector<2x16xf32>
    %170 = vector.extract_strided_slice %167 {offsets = [0, 16], sizes = [2, 16], strides = [1, 1]} : vector<2x64xf32> to vector<2x16xf32>
    %171 = vector.extract_strided_slice %168 {offsets = [0, 32], sizes = [2, 16], strides = [1, 1]} : vector<2x64xf32> to vector<2x16xf32>
    %172 = vector.extract_strided_slice %167 {offsets = [0, 48], sizes = [2, 16], strides = [1, 1]} : vector<2x64xf32> to vector<2x16xf32>
    %173 = arith.mulf %170, %156 : vector<2x16xf32>
    %174 = arith.mulf %169, %171 : vector<2x16xf32>
    %175 = arith.addf %173, %174 : vector<2x16xf32>
    %176 = math.tanh %175 : vector<2x16xf32>
    %177 = arith.mulf %172, %176 : vector<2x16xf32>
    %c10 = arith.constant 10 : index
    %c0_48 = arith.constant 0 : index
    %178 = vector.load %arg5[%c10, %c0_48] : memref<16x16xf32, #tpu.memory_space<vmem>>, vector<2x16xf32>
    tpu.vector_store %arg5[%c10, %c0_48], %177 {strides = array<i32>} : memref<16x16xf32, #tpu.memory_space<vmem>>, vector<2x16xf32>,
    %179 = vector.extract_strided_slice %62 {offsets = [12, 0], sizes = [2, 64], strides = [1, 1]} : vector<16x64xf32> to vector<2x64xf32>
    %cst_49 = arith.constant dense<0.000000e+00> : vector<2x64xf32>
    %180 = tpu.matmul %177, %55, %cst_49 {dimension_numbers = #tpu.dot_dimension_numbers<[1], [0], [0], [1], [0, 0, 1, 1], [], []>} : vector<2x16xf32>, vector<16x64xf32>, vector<2x64xf32> -> vector<2x64xf32>
    %181 = arith.addf %179, %180 : vector<2x64xf32>
    %182 = arith.negf %181 : vector<2x64xf32>
    %183 = math.exp %182 : vector<2x64xf32>
    %cst_50 = arith.constant 1.000000e+00 : f32
    %184 = vector.broadcast %cst_50 : f32 to vector<2x64xf32>
    %185 = arith.addf %184, %183 : vector<2x64xf32>
    %186 = arith.divf %184, %185 : vector<2x64xf32>
    %187 = math.tanh %181 : vector<2x64xf32>
    %188 = vector.extract_strided_slice %186 {offsets = [0, 0], sizes = [2, 16], strides = [1, 1]} : vector<2x64xf32> to vector<2x16xf32>
    %189 = vector.extract_strided_slice %186 {offsets = [0, 16], sizes = [2, 16], strides = [1, 1]} : vector<2x64xf32> to vector<2x16xf32>
    %190 = vector.extract_strided_slice %187 {offsets = [0, 32], sizes = [2, 16], strides = [1, 1]} : vector<2x64xf32> to vector<2x16xf32>
    %191 = vector.extract_strided_slice %186 {offsets = [0, 48], sizes = [2, 16], strides = [1, 1]} : vector<2x64xf32> to vector<2x16xf32>
    %192 = arith.mulf %189, %175 : vector<2x16xf32>
    %193 = arith.mulf %188, %190 : vector<2x16xf32>
    %194 = arith.addf %192, %193 : vector<2x16xf32>
    %195 = math.tanh %194 : vector<2x16xf32>
    %196 = arith.mulf %191, %195 : vector<2x16xf32>
    %c12 = arith.constant 12 : index
    %c0_51 = arith.constant 0 : index
    %197 = vector.load %arg5[%c12, %c0_51] : memref<16x16xf32, #tpu.memory_space<vmem>>, vector<2x16xf32>
    tpu.vector_store %arg5[%c12, %c0_51], %196 {strides = array<i32>} : memref<16x16xf32, #tpu.memory_space<vmem>>, vector<2x16xf32>,
    %198 = vector.extract_strided_slice %62 {offsets = [14, 0], sizes = [2, 64], strides = [1, 1]} : vector<16x64xf32> to vector<2x64xf32>
    %cst_52 = arith.constant dense<0.000000e+00> : vector<2x64xf32>
    %199 = tpu.matmul %196, %55, %cst_52 {dimension_numbers = #tpu.dot_dimension_numbers<[1], [0], [0], [1], [0, 0, 1, 1], [], []>} : vector<2x16xf32>, vector<16x64xf32>, vector<2x64xf32> -> vector<2x64xf32>
    %200 = arith.addf %198, %199 : vector<2x64xf32>
    %201 = arith.negf %200 : vector<2x64xf32>
    %202 = math.exp %201 : vector<2x64xf32>
    %cst_53 = arith.constant 1.000000e+00 : f32
    %203 = vector.broadcast %cst_53 : f32 to vector<2x64xf32>
    %204 = arith.addf %203, %202 : vector<2x64xf32>
    %205 = arith.divf %203, %204 : vector<2x64xf32>
    %206 = math.tanh %200 : vector<2x64xf32>
    %207 = vector.extract_strided_slice %205 {offsets = [0, 0], sizes = [2, 16], strides = [1, 1]} : vector<2x64xf32> to vector<2x16xf32>
    %208 = vector.extract_strided_slice %205 {offsets = [0, 16], sizes = [2, 16], strides = [1, 1]} : vector<2x64xf32> to vector<2x16xf32>
    %209 = vector.extract_strided_slice %206 {offsets = [0, 32], sizes = [2, 16], strides = [1, 1]} : vector<2x64xf32> to vector<2x16xf32>
    %210 = vector.extract_strided_slice %205 {offsets = [0, 48], sizes = [2, 16], strides = [1, 1]} : vector<2x64xf32> to vector<2x16xf32>
    %211 = arith.mulf %208, %194 : vector<2x16xf32>
    %212 = arith.mulf %207, %209 : vector<2x16xf32>
    %213 = arith.addf %211, %212 : vector<2x16xf32>
    %214 = math.tanh %213 : vector<2x16xf32>
    %215 = arith.mulf %210, %214 : vector<2x16xf32>
    %c14 = arith.constant 14 : index
    %c0_54 = arith.constant 0 : index
    %216 = vector.load %arg5[%c14, %c0_54] : memref<16x16xf32, #tpu.memory_space<vmem>>, vector<2x16xf32>
    tpu.vector_store %arg5[%c14, %c0_54], %215 {strides = array<i32>} : memref<16x16xf32, #tpu.memory_space<vmem>>, vector<2x16xf32>,
    %c0_55 = arith.constant 0 : index
    %c0_56 = arith.constant 0 : index
    %217 = vector.load %arg5[%c0_55, %c0_56] : memref<16x16xf32, #tpu.memory_space<vmem>>, vector<16x16xf32>
    %cst_57 = arith.constant dense<0.000000e+00> : vector<16x64xf32>
    %218 = tpu.matmul %217, %57, %cst_57 {dimension_numbers = #tpu.dot_dimension_numbers<[1], [0], [0], [1], [0, 0, 1, 1], [], []>} : vector<16x16xf32>, vector<16x64xf32>, vector<16x64xf32> -> vector<16x64xf32>
    %219 = vector.broadcast %59 : vector<1x64xf32> to vector<16x64xf32>
    %220 = arith.addf %218, %219 : vector<16x64xf32>
    %cst_58 = arith.constant 0.000000e+00 : f32
    %221 = vector.broadcast %cst_58 : f32 to vector<2x16xf32>
    %cst_59 = arith.constant 0.000000e+00 : f32
    %222 = vector.broadcast %cst_59 : f32 to vector<2x16xf32>
    %223 = vector.extract_strided_slice %220 {offsets = [0, 0], sizes = [2, 64], strides = [1, 1]} : vector<16x64xf32> to vector<2x64xf32>
    %cst_60 = arith.constant dense<0.000000e+00> : vector<2x64xf32>
    %224 = tpu.matmul %221, %58, %cst_60 {dimension_numbers = #tpu.dot_dimension_numbers<[1], [0], [0], [1], [0, 0, 1, 1], [], []>} : vector<2x16xf32>, vector<16x64xf32>, vector<2x64xf32> -> vector<2x64xf32>
    %225 = arith.addf %223, %224 : vector<2x64xf32>
    %226 = arith.negf %225 : vector<2x64xf32>
    %227 = math.exp %226 : vector<2x64xf32>
    %cst_61 = arith.constant 1.000000e+00 : f32
    %228 = vector.broadcast %cst_61 : f32 to vector<2x64xf32>
    %229 = arith.addf %228, %227 : vector<2x64xf32>
    %230 = arith.divf %228, %229 : vector<2x64xf32>
    %231 = math.tanh %225 : vector<2x64xf32>
    %232 = vector.extract_strided_slice %230 {offsets = [0, 0], sizes = [2, 16], strides = [1, 1]} : vector<2x64xf32> to vector<2x16xf32>
    %233 = vector.extract_strided_slice %230 {offsets = [0, 16], sizes = [2, 16], strides = [1, 1]} : vector<2x64xf32> to vector<2x16xf32>
    %234 = vector.extract_strided_slice %231 {offsets = [0, 32], sizes = [2, 16], strides = [1, 1]} : vector<2x64xf32> to vector<2x16xf32>
    %235 = vector.extract_strided_slice %230 {offsets = [0, 48], sizes = [2, 16], strides = [1, 1]} : vector<2x64xf32> to vector<2x16xf32>
    %236 = arith.mulf %233, %222 : vector<2x16xf32>
    %237 = arith.mulf %232, %234 : vector<2x16xf32>
    %238 = arith.addf %236, %237 : vector<2x16xf32>
    %239 = math.tanh %238 : vector<2x16xf32>
    %240 = arith.mulf %235, %239 : vector<2x16xf32>
    %241 = vector.extract_strided_slice %220 {offsets = [2, 0], sizes = [2, 64], strides = [1, 1]} : vector<16x64xf32> to vector<2x64xf32>
    %cst_62 = arith.constant dense<0.000000e+00> : vector<2x64xf32>
    %242 = tpu.matmul %240, %58, %cst_62 {dimension_numbers = #tpu.dot_dimension_numbers<[1], [0], [0], [1], [0, 0, 1, 1], [], []>} : vector<2x16xf32>, vector<16x64xf32>, vector<2x64xf32> -> vector<2x64xf32>
    %243 = arith.addf %241, %242 : vector<2x64xf32>
    %244 = arith.negf %243 : vector<2x64xf32>
    %245 = math.exp %244 : vector<2x64xf32>
    %cst_63 = arith.constant 1.000000e+00 : f32
    %246 = vector.broadcast %cst_63 : f32 to vector<2x64xf32>
    %247 = arith.addf %246, %245 : vector<2x64xf32>
    %248 = arith.divf %246, %247 : vector<2x64xf32>
    %249 = math.tanh %243 : vector<2x64xf32>
    %250 = vector.extract_strided_slice %248 {offsets = [0, 0], sizes = [2, 16], strides = [1, 1]} : vector<2x64xf32> to vector<2x16xf32>
    %251 = vector.extract_strided_slice %248 {offsets = [0, 16], sizes = [2, 16], strides = [1, 1]} : vector<2x64xf32> to vector<2x16xf32>
    %252 = vector.extract_strided_slice %249 {offsets = [0, 32], sizes = [2, 16], strides = [1, 1]} : vector<2x64xf32> to vector<2x16xf32>
    %253 = vector.extract_strided_slice %248 {offsets = [0, 48], sizes = [2, 16], strides = [1, 1]} : vector<2x64xf32> to vector<2x16xf32>
    %254 = arith.mulf %251, %238 : vector<2x16xf32>
    %255 = arith.mulf %250, %252 : vector<2x16xf32>
    %256 = arith.addf %254, %255 : vector<2x16xf32>
    %257 = math.tanh %256 : vector<2x16xf32>
    %258 = arith.mulf %253, %257 : vector<2x16xf32>
    %259 = vector.extract_strided_slice %220 {offsets = [4, 0], sizes = [2, 64], strides = [1, 1]} : vector<16x64xf32> to vector<2x64xf32>
    %cst_64 = arith.constant dense<0.000000e+00> : vector<2x64xf32>
    %260 = tpu.matmul %258, %58, %cst_64 {dimension_numbers = #tpu.dot_dimension_numbers<[1], [0], [0], [1], [0, 0, 1, 1], [], []>} : vector<2x16xf32>, vector<16x64xf32>, vector<2x64xf32> -> vector<2x64xf32>
    %261 = arith.addf %259, %260 : vector<2x64xf32>
    %262 = arith.negf %261 : vector<2x64xf32>
    %263 = math.exp %262 : vector<2x64xf32>
    %cst_65 = arith.constant 1.000000e+00 : f32
    %264 = vector.broadcast %cst_65 : f32 to vector<2x64xf32>
    %265 = arith.addf %264, %263 : vector<2x64xf32>
    %266 = arith.divf %264, %265 : vector<2x64xf32>
    %267 = math.tanh %261 : vector<2x64xf32>
    %268 = vector.extract_strided_slice %266 {offsets = [0, 0], sizes = [2, 16], strides = [1, 1]} : vector<2x64xf32> to vector<2x16xf32>
    %269 = vector.extract_strided_slice %266 {offsets = [0, 16], sizes = [2, 16], strides = [1, 1]} : vector<2x64xf32> to vector<2x16xf32>
    %270 = vector.extract_strided_slice %267 {offsets = [0, 32], sizes = [2, 16], strides = [1, 1]} : vector<2x64xf32> to vector<2x16xf32>
    %271 = vector.extract_strided_slice %266 {offsets = [0, 48], sizes = [2, 16], strides = [1, 1]} : vector<2x64xf32> to vector<2x16xf32>
    %272 = arith.mulf %269, %256 : vector<2x16xf32>
    %273 = arith.mulf %268, %270 : vector<2x16xf32>
    %274 = arith.addf %272, %273 : vector<2x16xf32>
    %275 = math.tanh %274 : vector<2x16xf32>
    %276 = arith.mulf %271, %275 : vector<2x16xf32>
    %277 = vector.extract_strided_slice %220 {offsets = [6, 0], sizes = [2, 64], strides = [1, 1]} : vector<16x64xf32> to vector<2x64xf32>
    %cst_66 = arith.constant dense<0.000000e+00> : vector<2x64xf32>
    %278 = tpu.matmul %276, %58, %cst_66 {dimension_numbers = #tpu.dot_dimension_numbers<[1], [0], [0], [1], [0, 0, 1, 1], [], []>} : vector<2x16xf32>, vector<16x64xf32>, vector<2x64xf32> -> vector<2x64xf32>
    %279 = arith.addf %277, %278 : vector<2x64xf32>
    %280 = arith.negf %279 : vector<2x64xf32>
    %281 = math.exp %280 : vector<2x64xf32>
    %cst_67 = arith.constant 1.000000e+00 : f32
    %282 = vector.broadcast %cst_67 : f32 to vector<2x64xf32>
    %283 = arith.addf %282, %281 : vector<2x64xf32>
    %284 = arith.divf %282, %283 : vector<2x64xf32>
    %285 = math.tanh %279 : vector<2x64xf32>
    %286 = vector.extract_strided_slice %284 {offsets = [0, 0], sizes = [2, 16], strides = [1, 1]} : vector<2x64xf32> to vector<2x16xf32>
    %287 = vector.extract_strided_slice %284 {offsets = [0, 16], sizes = [2, 16], strides = [1, 1]} : vector<2x64xf32> to vector<2x16xf32>
    %288 = vector.extract_strided_slice %285 {offsets = [0, 32], sizes = [2, 16], strides = [1, 1]} : vector<2x64xf32> to vector<2x16xf32>
    %289 = vector.extract_strided_slice %284 {offsets = [0, 48], sizes = [2, 16], strides = [1, 1]} : vector<2x64xf32> to vector<2x16xf32>
    %290 = arith.mulf %287, %274 : vector<2x16xf32>
    %291 = arith.mulf %286, %288 : vector<2x16xf32>
    %292 = arith.addf %290, %291 : vector<2x16xf32>
    %293 = math.tanh %292 : vector<2x16xf32>
    %294 = arith.mulf %289, %293 : vector<2x16xf32>
    %295 = vector.extract_strided_slice %220 {offsets = [8, 0], sizes = [2, 64], strides = [1, 1]} : vector<16x64xf32> to vector<2x64xf32>
    %cst_68 = arith.constant dense<0.000000e+00> : vector<2x64xf32>
    %296 = tpu.matmul %294, %58, %cst_68 {dimension_numbers = #tpu.dot_dimension_numbers<[1], [0], [0], [1], [0, 0, 1, 1], [], []>} : vector<2x16xf32>, vector<16x64xf32>, vector<2x64xf32> -> vector<2x64xf32>
    %297 = arith.addf %295, %296 : vector<2x64xf32>
    %298 = arith.negf %297 : vector<2x64xf32>
    %299 = math.exp %298 : vector<2x64xf32>
    %cst_69 = arith.constant 1.000000e+00 : f32
    %300 = vector.broadcast %cst_69 : f32 to vector<2x64xf32>
    %301 = arith.addf %300, %299 : vector<2x64xf32>
    %302 = arith.divf %300, %301 : vector<2x64xf32>
    %303 = math.tanh %297 : vector<2x64xf32>
    %304 = vector.extract_strided_slice %302 {offsets = [0, 0], sizes = [2, 16], strides = [1, 1]} : vector<2x64xf32> to vector<2x16xf32>
    %305 = vector.extract_strided_slice %302 {offsets = [0, 16], sizes = [2, 16], strides = [1, 1]} : vector<2x64xf32> to vector<2x16xf32>
    %306 = vector.extract_strided_slice %303 {offsets = [0, 32], sizes = [2, 16], strides = [1, 1]} : vector<2x64xf32> to vector<2x16xf32>
    %307 = vector.extract_strided_slice %302 {offsets = [0, 48], sizes = [2, 16], strides = [1, 1]} : vector<2x64xf32> to vector<2x16xf32>
    %308 = arith.mulf %305, %292 : vector<2x16xf32>
    %309 = arith.mulf %304, %306 : vector<2x16xf32>
    %310 = arith.addf %308, %309 : vector<2x16xf32>
    %311 = math.tanh %310 : vector<2x16xf32>
    %312 = arith.mulf %307, %311 : vector<2x16xf32>
    %313 = vector.extract_strided_slice %220 {offsets = [10, 0], sizes = [2, 64], strides = [1, 1]} : vector<16x64xf32> to vector<2x64xf32>
    %cst_70 = arith.constant dense<0.000000e+00> : vector<2x64xf32>
    %314 = tpu.matmul %312, %58, %cst_70 {dimension_numbers = #tpu.dot_dimension_numbers<[1], [0], [0], [1], [0, 0, 1, 1], [], []>} : vector<2x16xf32>, vector<16x64xf32>, vector<2x64xf32> -> vector<2x64xf32>
    %315 = arith.addf %313, %314 : vector<2x64xf32>
    %316 = arith.negf %315 : vector<2x64xf32>
    %317 = math.exp %316 : vector<2x64xf32>
    %cst_71 = arith.constant 1.000000e+00 : f32
    %318 = vector.broadcast %cst_71 : f32 to vector<2x64xf32>
    %319 = arith.addf %318, %317 : vector<2x64xf32>
    %320 = arith.divf %318, %319 : vector<2x64xf32>
    %321 = math.tanh %315 : vector<2x64xf32>
    %322 = vector.extract_strided_slice %320 {offsets = [0, 0], sizes = [2, 16], strides = [1, 1]} : vector<2x64xf32> to vector<2x16xf32>
    %323 = vector.extract_strided_slice %320 {offsets = [0, 16], sizes = [2, 16], strides = [1, 1]} : vector<2x64xf32> to vector<2x16xf32>
    %324 = vector.extract_strided_slice %321 {offsets = [0, 32], sizes = [2, 16], strides = [1, 1]} : vector<2x64xf32> to vector<2x16xf32>
    %325 = vector.extract_strided_slice %320 {offsets = [0, 48], sizes = [2, 16], strides = [1, 1]} : vector<2x64xf32> to vector<2x16xf32>
    %326 = arith.mulf %323, %310 : vector<2x16xf32>
    %327 = arith.mulf %322, %324 : vector<2x16xf32>
    %328 = arith.addf %326, %327 : vector<2x16xf32>
    %329 = math.tanh %328 : vector<2x16xf32>
    %330 = arith.mulf %325, %329 : vector<2x16xf32>
    %331 = vector.extract_strided_slice %220 {offsets = [12, 0], sizes = [2, 64], strides = [1, 1]} : vector<16x64xf32> to vector<2x64xf32>
    %cst_72 = arith.constant dense<0.000000e+00> : vector<2x64xf32>
    %332 = tpu.matmul %330, %58, %cst_72 {dimension_numbers = #tpu.dot_dimension_numbers<[1], [0], [0], [1], [0, 0, 1, 1], [], []>} : vector<2x16xf32>, vector<16x64xf32>, vector<2x64xf32> -> vector<2x64xf32>
    %333 = arith.addf %331, %332 : vector<2x64xf32>
    %334 = arith.negf %333 : vector<2x64xf32>
    %335 = math.exp %334 : vector<2x64xf32>
    %cst_73 = arith.constant 1.000000e+00 : f32
    %336 = vector.broadcast %cst_73 : f32 to vector<2x64xf32>
    %337 = arith.addf %336, %335 : vector<2x64xf32>
    %338 = arith.divf %336, %337 : vector<2x64xf32>
    %339 = math.tanh %333 : vector<2x64xf32>
    %340 = vector.extract_strided_slice %338 {offsets = [0, 0], sizes = [2, 16], strides = [1, 1]} : vector<2x64xf32> to vector<2x16xf32>
    %341 = vector.extract_strided_slice %338 {offsets = [0, 16], sizes = [2, 16], strides = [1, 1]} : vector<2x64xf32> to vector<2x16xf32>
    %342 = vector.extract_strided_slice %339 {offsets = [0, 32], sizes = [2, 16], strides = [1, 1]} : vector<2x64xf32> to vector<2x16xf32>
    %343 = vector.extract_strided_slice %338 {offsets = [0, 48], sizes = [2, 16], strides = [1, 1]} : vector<2x64xf32> to vector<2x16xf32>
    %344 = arith.mulf %341, %328 : vector<2x16xf32>
    %345 = arith.mulf %340, %342 : vector<2x16xf32>
    %346 = arith.addf %344, %345 : vector<2x16xf32>
    %347 = math.tanh %346 : vector<2x16xf32>
    %348 = arith.mulf %343, %347 : vector<2x16xf32>
    %349 = vector.extract_strided_slice %220 {offsets = [14, 0], sizes = [2, 64], strides = [1, 1]} : vector<16x64xf32> to vector<2x64xf32>
    %cst_74 = arith.constant dense<0.000000e+00> : vector<2x64xf32>
    %350 = tpu.matmul %348, %58, %cst_74 {dimension_numbers = #tpu.dot_dimension_numbers<[1], [0], [0], [1], [0, 0, 1, 1], [], []>} : vector<2x16xf32>, vector<16x64xf32>, vector<2x64xf32> -> vector<2x64xf32>
    %351 = arith.addf %349, %350 : vector<2x64xf32>
    %352 = arith.negf %351 : vector<2x64xf32>
    %353 = math.exp %352 : vector<2x64xf32>
    %cst_75 = arith.constant 1.000000e+00 : f32
    %354 = vector.broadcast %cst_75 : f32 to vector<2x64xf32>
    %355 = arith.addf %354, %353 : vector<2x64xf32>
    %356 = arith.divf %354, %355 : vector<2x64xf32>
    %357 = math.tanh %351 : vector<2x64xf32>
    %358 = vector.extract_strided_slice %356 {offsets = [0, 0], sizes = [2, 16], strides = [1, 1]} : vector<2x64xf32> to vector<2x16xf32>
    %359 = vector.extract_strided_slice %356 {offsets = [0, 16], sizes = [2, 16], strides = [1, 1]} : vector<2x64xf32> to vector<2x16xf32>
    %360 = vector.extract_strided_slice %357 {offsets = [0, 32], sizes = [2, 16], strides = [1, 1]} : vector<2x64xf32> to vector<2x16xf32>
    %361 = vector.extract_strided_slice %356 {offsets = [0, 48], sizes = [2, 16], strides = [1, 1]} : vector<2x64xf32> to vector<2x16xf32>
    %362 = arith.mulf %359, %346 : vector<2x16xf32>
    %363 = arith.mulf %358, %360 : vector<2x16xf32>
    %364 = arith.addf %362, %363 : vector<2x16xf32>
    %365 = math.tanh %364 : vector<2x16xf32>
    %366 = arith.mulf %361, %365 : vector<2x16xf32>
    %c136 = arith.constant 136 : index
    %c0_76 = arith.constant 0 : index
    %367 = vector.load %arg1[%c136, %c0_76] : memref<280x128xf32, #tpu.memory_space<vmem>>, vector<144x128xf32>
    %cst_77 = arith.constant -2.200000e+00 : f32
    %368 = vector.broadcast %cst_77 : f32 to vector<2x16xf32>
    %369 = arith.cmpf oge, %366, %368 : vector<2x16xf32>
    %cst_78 = arith.constant -1.800000e+00 : f32
    %370 = vector.broadcast %cst_78 : f32 to vector<2x16xf32>
    %371 = arith.cmpf olt, %366, %370 : vector<2x16xf32>
    %372 = arith.andi %369, %371 : vector<2x16xi1>
    %373 = arith.extui %372 : vector<2x16xi1> to vector<2x16xi32>
    %374 = arith.sitofp %373 : vector<2x16xi32> to vector<2x16xf32>
    %cst_79 = arith.constant -1.800000e+00 : f32
    %375 = vector.broadcast %cst_79 : f32 to vector<2x16xf32>
    %376 = arith.cmpf oge, %366, %375 : vector<2x16xf32>
    %cst_80 = arith.constant -1.400000e+00 : f32
    %377 = vector.broadcast %cst_80 : f32 to vector<2x16xf32>
    %378 = arith.cmpf olt, %366, %377 : vector<2x16xf32>
    %379 = arith.andi %376, %378 : vector<2x16xi1>
    %380 = arith.extui %379 : vector<2x16xi1> to vector<2x16xi32>
    %381 = arith.sitofp %380 : vector<2x16xi32> to vector<2x16xf32>
    %cst_81 = arith.constant -1.400000e+00 : f32
    %382 = vector.broadcast %cst_81 : f32 to vector<2x16xf32>
    %383 = arith.cmpf oge, %366, %382 : vector<2x16xf32>
    %cst_82 = arith.constant -1.000000e+00 : f32
    %384 = vector.broadcast %cst_82 : f32 to vector<2x16xf32>
    %385 = arith.cmpf olt, %366, %384 : vector<2x16xf32>
    %386 = arith.andi %383, %385 : vector<2x16xi1>
    %387 = arith.extui %386 : vector<2x16xi1> to vector<2x16xi32>
    %388 = arith.sitofp %387 : vector<2x16xi32> to vector<2x16xf32>
    %cst_83 = arith.constant -1.000000e+00 : f32
    %389 = vector.broadcast %cst_83 : f32 to vector<2x16xf32>
    %390 = arith.cmpf oge, %366, %389 : vector<2x16xf32>
    %cst_84 = arith.constant -6.000000e-01 : f32
    %391 = vector.broadcast %cst_84 : f32 to vector<2x16xf32>
    %392 = arith.cmpf olt, %366, %391 : vector<2x16xf32>
    %393 = arith.andi %390, %392 : vector<2x16xi1>
    %394 = arith.extui %393 : vector<2x16xi1> to vector<2x16xi32>
    %395 = arith.sitofp %394 : vector<2x16xi32> to vector<2x16xf32>
    %cst_85 = arith.constant -6.000000e-01 : f32
    %396 = vector.broadcast %cst_85 : f32 to vector<2x16xf32>
    %397 = arith.cmpf oge, %366, %396 : vector<2x16xf32>
    %cst_86 = arith.constant -2.000000e-01 : f32
    %398 = vector.broadcast %cst_86 : f32 to vector<2x16xf32>
    %399 = arith.cmpf olt, %366, %398 : vector<2x16xf32>
    %400 = arith.andi %397, %399 : vector<2x16xi1>
    %401 = arith.extui %400 : vector<2x16xi1> to vector<2x16xi32>
    %402 = arith.sitofp %401 : vector<2x16xi32> to vector<2x16xf32>
    %cst_87 = arith.constant -2.000000e-01 : f32
    %403 = vector.broadcast %cst_87 : f32 to vector<2x16xf32>
    %404 = arith.cmpf oge, %366, %403 : vector<2x16xf32>
    %cst_88 = arith.constant 2.000000e-01 : f32
    %405 = vector.broadcast %cst_88 : f32 to vector<2x16xf32>
    %406 = arith.cmpf olt, %366, %405 : vector<2x16xf32>
    %407 = arith.andi %404, %406 : vector<2x16xi1>
    %408 = arith.extui %407 : vector<2x16xi1> to vector<2x16xi32>
    %409 = arith.sitofp %408 : vector<2x16xi32> to vector<2x16xf32>
    %cst_89 = arith.constant 2.000000e-01 : f32
    %410 = vector.broadcast %cst_89 : f32 to vector<2x16xf32>
    %411 = arith.cmpf oge, %366, %410 : vector<2x16xf32>
    %cst_90 = arith.constant 6.000000e-01 : f32
    %412 = vector.broadcast %cst_90 : f32 to vector<2x16xf32>
    %413 = arith.cmpf olt, %366, %412 : vector<2x16xf32>
    %414 = arith.andi %411, %413 : vector<2x16xi1>
    %415 = arith.extui %414 : vector<2x16xi1> to vector<2x16xi32>
    %416 = arith.sitofp %415 : vector<2x16xi32> to vector<2x16xf32>
    %cst_91 = arith.constant 6.000000e-01 : f32
    %417 = vector.broadcast %cst_91 : f32 to vector<2x16xf32>
    %418 = arith.cmpf oge, %366, %417 : vector<2x16xf32>
    %cst_92 = arith.constant 1.000000e+00 : f32
    %419 = vector.broadcast %cst_92 : f32 to vector<2x16xf32>
    %420 = arith.cmpf olt, %366, %419 : vector<2x16xf32>
    %421 = arith.andi %418, %420 : vector<2x16xi1>
    %422 = arith.extui %421 : vector<2x16xi1> to vector<2x16xi32>
    %423 = arith.sitofp %422 : vector<2x16xi32> to vector<2x16xf32>
    %cst_93 = arith.constant 1.000000e+00 : f32
    %424 = vector.broadcast %cst_93 : f32 to vector<2x16xf32>
    %425 = arith.cmpf oge, %366, %424 : vector<2x16xf32>
    %cst_94 = arith.constant 1.400000e+00 : f32
    %426 = vector.broadcast %cst_94 : f32 to vector<2x16xf32>
    %427 = arith.cmpf olt, %366, %426 : vector<2x16xf32>
    %428 = arith.andi %425, %427 : vector<2x16xi1>
    %429 = arith.extui %428 : vector<2x16xi1> to vector<2x16xi32>
    %430 = arith.sitofp %429 : vector<2x16xi32> to vector<2x16xf32>
    %cst_95 = arith.constant 1.400000e+00 : f32
    %431 = vector.broadcast %cst_95 : f32 to vector<2x16xf32>
    %432 = arith.cmpf oge, %366, %431 : vector<2x16xf32>
    %cst_96 = arith.constant 1.800000e+00 : f32
    %433 = vector.broadcast %cst_96 : f32 to vector<2x16xf32>
    %434 = arith.cmpf olt, %366, %433 : vector<2x16xf32>
    %435 = arith.andi %432, %434 : vector<2x16xi1>
    %436 = arith.extui %435 : vector<2x16xi1> to vector<2x16xi32>
    %437 = arith.sitofp %436 : vector<2x16xi32> to vector<2x16xf32>
    %cst_97 = arith.constant 1.800000e+00 : f32
    %438 = vector.broadcast %cst_97 : f32 to vector<2x16xf32>
    %439 = arith.cmpf oge, %366, %438 : vector<2x16xf32>
    %cst_98 = arith.constant 2.200000e+00 : f32
    %440 = vector.broadcast %cst_98 : f32 to vector<2x16xf32>
    %441 = arith.cmpf olt, %366, %440 : vector<2x16xf32>
    %442 = arith.andi %439, %441 : vector<2x16xi1>
    %443 = arith.extui %442 : vector<2x16xi1> to vector<2x16xi32>
    %444 = arith.sitofp %443 : vector<2x16xi32> to vector<2x16xf32>
    %cst_99 = arith.constant -2.200000e+00 : f32
    %445 = vector.broadcast %cst_99 : f32 to vector<2x16xf32>
    %446 = arith.subf %366, %445 : vector<2x16xf32>
    %cst_100 = arith.constant 2.500000e+00 : f32
    %447 = vector.broadcast %cst_100 : f32 to vector<2x16xf32>
    %448 = arith.mulf %446, %447 : vector<2x16xf32>
    %449 = arith.mulf %448, %374 : vector<2x16xf32>
    %cst_101 = arith.constant -1.400000e+00 : f32
    %450 = vector.broadcast %cst_101 : f32 to vector<2x16xf32>
    %451 = arith.subf %450, %366 : vector<2x16xf32>
    %cst_102 = arith.constant 2.500000e+00 : f32
    %452 = vector.broadcast %cst_102 : f32 to vector<2x16xf32>
    %453 = arith.mulf %451, %452 : vector<2x16xf32>
    %454 = arith.mulf %453, %381 : vector<2x16xf32>
    %455 = arith.addf %449, %454 : vector<2x16xf32>
    %cst_103 = arith.constant -1.800000e+00 : f32
    %456 = vector.broadcast %cst_103 : f32 to vector<2x16xf32>
    %457 = arith.subf %366, %456 : vector<2x16xf32>
    %cst_104 = arith.constant 2.500000e+00 : f32
    %458 = vector.broadcast %cst_104 : f32 to vector<2x16xf32>
    %459 = arith.mulf %457, %458 : vector<2x16xf32>
    %460 = arith.mulf %459, %381 : vector<2x16xf32>
    %cst_105 = arith.constant -1.000000e+00 : f32
    %461 = vector.broadcast %cst_105 : f32 to vector<2x16xf32>
    %462 = arith.subf %461, %366 : vector<2x16xf32>
    %cst_106 = arith.constant 2.500000e+00 : f32
    %463 = vector.broadcast %cst_106 : f32 to vector<2x16xf32>
    %464 = arith.mulf %462, %463 : vector<2x16xf32>
    %465 = arith.mulf %464, %388 : vector<2x16xf32>
    %466 = arith.addf %460, %465 : vector<2x16xf32>
    %cst_107 = arith.constant -1.400000e+00 : f32
    %467 = vector.broadcast %cst_107 : f32 to vector<2x16xf32>
    %468 = arith.subf %366, %467 : vector<2x16xf32>
    %cst_108 = arith.constant 2.500000e+00 : f32
    %469 = vector.broadcast %cst_108 : f32 to vector<2x16xf32>
    %470 = arith.mulf %468, %469 : vector<2x16xf32>
    %471 = arith.mulf %470, %388 : vector<2x16xf32>
    %cst_109 = arith.constant -6.000000e-01 : f32
    %472 = vector.broadcast %cst_109 : f32 to vector<2x16xf32>
    %473 = arith.subf %472, %366 : vector<2x16xf32>
    %cst_110 = arith.constant 2.500000e+00 : f32
    %474 = vector.broadcast %cst_110 : f32 to vector<2x16xf32>
    %475 = arith.mulf %473, %474 : vector<2x16xf32>
    %476 = arith.mulf %475, %395 : vector<2x16xf32>
    %477 = arith.addf %471, %476 : vector<2x16xf32>
    %cst_111 = arith.constant -1.000000e+00 : f32
    %478 = vector.broadcast %cst_111 : f32 to vector<2x16xf32>
    %479 = arith.subf %366, %478 : vector<2x16xf32>
    %cst_112 = arith.constant 2.500000e+00 : f32
    %480 = vector.broadcast %cst_112 : f32 to vector<2x16xf32>
    %481 = arith.mulf %479, %480 : vector<2x16xf32>
    %482 = arith.mulf %481, %395 : vector<2x16xf32>
    %cst_113 = arith.constant -2.000000e-01 : f32
    %483 = vector.broadcast %cst_113 : f32 to vector<2x16xf32>
    %484 = arith.subf %483, %366 : vector<2x16xf32>
    %cst_114 = arith.constant 2.500000e+00 : f32
    %485 = vector.broadcast %cst_114 : f32 to vector<2x16xf32>
    %486 = arith.mulf %484, %485 : vector<2x16xf32>
    %487 = arith.mulf %486, %402 : vector<2x16xf32>
    %488 = arith.addf %482, %487 : vector<2x16xf32>
    %cst_115 = arith.constant -6.000000e-01 : f32
    %489 = vector.broadcast %cst_115 : f32 to vector<2x16xf32>
    %490 = arith.subf %366, %489 : vector<2x16xf32>
    %cst_116 = arith.constant 2.500000e+00 : f32
    %491 = vector.broadcast %cst_116 : f32 to vector<2x16xf32>
    %492 = arith.mulf %490, %491 : vector<2x16xf32>
    %493 = arith.mulf %492, %402 : vector<2x16xf32>
    %cst_117 = arith.constant 2.000000e-01 : f32
    %494 = vector.broadcast %cst_117 : f32 to vector<2x16xf32>
    %495 = arith.subf %494, %366 : vector<2x16xf32>
    %cst_118 = arith.constant 2.500000e+00 : f32
    %496 = vector.broadcast %cst_118 : f32 to vector<2x16xf32>
    %497 = arith.mulf %495, %496 : vector<2x16xf32>
    %498 = arith.mulf %497, %409 : vector<2x16xf32>
    %499 = arith.addf %493, %498 : vector<2x16xf32>
    %cst_119 = arith.constant -2.000000e-01 : f32
    %500 = vector.broadcast %cst_119 : f32 to vector<2x16xf32>
    %501 = arith.subf %366, %500 : vector<2x16xf32>
    %cst_120 = arith.constant 2.500000e+00 : f32
    %502 = vector.broadcast %cst_120 : f32 to vector<2x16xf32>
    %503 = arith.mulf %501, %502 : vector<2x16xf32>
    %504 = arith.mulf %503, %409 : vector<2x16xf32>
    %cst_121 = arith.constant 6.000000e-01 : f32
    %505 = vector.broadcast %cst_121 : f32 to vector<2x16xf32>
    %506 = arith.subf %505, %366 : vector<2x16xf32>
    %cst_122 = arith.constant 2.500000e+00 : f32
    %507 = vector.broadcast %cst_122 : f32 to vector<2x16xf32>
    %508 = arith.mulf %506, %507 : vector<2x16xf32>
    %509 = arith.mulf %508, %416 : vector<2x16xf32>
    %510 = arith.addf %504, %509 : vector<2x16xf32>
    %cst_123 = arith.constant 2.000000e-01 : f32
    %511 = vector.broadcast %cst_123 : f32 to vector<2x16xf32>
    %512 = arith.subf %366, %511 : vector<2x16xf32>
    %cst_124 = arith.constant 2.500000e+00 : f32
    %513 = vector.broadcast %cst_124 : f32 to vector<2x16xf32>
    %514 = arith.mulf %512, %513 : vector<2x16xf32>
    %515 = arith.mulf %514, %416 : vector<2x16xf32>
    %cst_125 = arith.constant 1.000000e+00 : f32
    %516 = vector.broadcast %cst_125 : f32 to vector<2x16xf32>
    %517 = arith.subf %516, %366 : vector<2x16xf32>
    %cst_126 = arith.constant 2.500000e+00 : f32
    %518 = vector.broadcast %cst_126 : f32 to vector<2x16xf32>
    %519 = arith.mulf %517, %518 : vector<2x16xf32>
    %520 = arith.mulf %519, %423 : vector<2x16xf32>
    %521 = arith.addf %515, %520 : vector<2x16xf32>
    %cst_127 = arith.constant 6.000000e-01 : f32
    %522 = vector.broadcast %cst_127 : f32 to vector<2x16xf32>
    %523 = arith.subf %366, %522 : vector<2x16xf32>
    %cst_128 = arith.constant 2.500000e+00 : f32
    %524 = vector.broadcast %cst_128 : f32 to vector<2x16xf32>
    %525 = arith.mulf %523, %524 : vector<2x16xf32>
    %526 = arith.mulf %525, %423 : vector<2x16xf32>
    %cst_129 = arith.constant 1.400000e+00 : f32
    %527 = vector.broadcast %cst_129 : f32 to vector<2x16xf32>
    %528 = arith.subf %527, %366 : vector<2x16xf32>
    %cst_130 = arith.constant 2.500000e+00 : f32
    %529 = vector.broadcast %cst_130 : f32 to vector<2x16xf32>
    %530 = arith.mulf %528, %529 : vector<2x16xf32>
    %531 = arith.mulf %530, %430 : vector<2x16xf32>
    %532 = arith.addf %526, %531 : vector<2x16xf32>
    %cst_131 = arith.constant 1.000000e+00 : f32
    %533 = vector.broadcast %cst_131 : f32 to vector<2x16xf32>
    %534 = arith.subf %366, %533 : vector<2x16xf32>
    %cst_132 = arith.constant 2.500000e+00 : f32
    %535 = vector.broadcast %cst_132 : f32 to vector<2x16xf32>
    %536 = arith.mulf %534, %535 : vector<2x16xf32>
    %537 = arith.mulf %536, %430 : vector<2x16xf32>
    %cst_133 = arith.constant 1.800000e+00 : f32
    %538 = vector.broadcast %cst_133 : f32 to vector<2x16xf32>
    %539 = arith.subf %538, %366 : vector<2x16xf32>
    %cst_134 = arith.constant 2.500000e+00 : f32
    %540 = vector.broadcast %cst_134 : f32 to vector<2x16xf32>
    %541 = arith.mulf %539, %540 : vector<2x16xf32>
    %542 = arith.mulf %541, %437 : vector<2x16xf32>
    %543 = arith.addf %537, %542 : vector<2x16xf32>
    %cst_135 = arith.constant 1.400000e+00 : f32
    %544 = vector.broadcast %cst_135 : f32 to vector<2x16xf32>
    %545 = arith.subf %366, %544 : vector<2x16xf32>
    %cst_136 = arith.constant 2.500000e+00 : f32
    %546 = vector.broadcast %cst_136 : f32 to vector<2x16xf32>
    %547 = arith.mulf %545, %546 : vector<2x16xf32>
    %548 = arith.mulf %547, %437 : vector<2x16xf32>
    %cst_137 = arith.constant 2.200000e+00 : f32
    %549 = vector.broadcast %cst_137 : f32 to vector<2x16xf32>
    %550 = arith.subf %549, %366 : vector<2x16xf32>
    %cst_138 = arith.constant 2.500000e+00 : f32
    %551 = vector.broadcast %cst_138 : f32 to vector<2x16xf32>
    %552 = arith.mulf %550, %551 : vector<2x16xf32>
    %553 = arith.mulf %552, %444 : vector<2x16xf32>
    %554 = arith.addf %548, %553 : vector<2x16xf32>
    %cst_139 = arith.constant -2.200000e+00 : f32
    %555 = vector.broadcast %cst_139 : f32 to vector<2x16xf32>
    %556 = arith.subf %366, %555 : vector<2x16xf32>
    %cst_140 = arith.constant 1.250000e+00 : f32
    %557 = vector.broadcast %cst_140 : f32 to vector<2x16xf32>
    %558 = arith.mulf %556, %557 : vector<2x16xf32>
    %559 = arith.mulf %558, %455 : vector<2x16xf32>
    %cst_141 = arith.constant -1.000000e+00 : f32
    %560 = vector.broadcast %cst_141 : f32 to vector<2x16xf32>
    %561 = arith.subf %560, %366 : vector<2x16xf32>
    %cst_142 = arith.constant 1.250000e+00 : f32
    %562 = vector.broadcast %cst_142 : f32 to vector<2x16xf32>
    %563 = arith.mulf %561, %562 : vector<2x16xf32>
    %564 = arith.mulf %563, %466 : vector<2x16xf32>
    %565 = arith.addf %559, %564 : vector<2x16xf32>
    %cst_143 = arith.constant -1.800000e+00 : f32
    %566 = vector.broadcast %cst_143 : f32 to vector<2x16xf32>
    %567 = arith.subf %366, %566 : vector<2x16xf32>
    %cst_144 = arith.constant 1.250000e+00 : f32
    %568 = vector.broadcast %cst_144 : f32 to vector<2x16xf32>
    %569 = arith.mulf %567, %568 : vector<2x16xf32>
    %570 = arith.mulf %569, %466 : vector<2x16xf32>
    %cst_145 = arith.constant -6.000000e-01 : f32
    %571 = vector.broadcast %cst_145 : f32 to vector<2x16xf32>
    %572 = arith.subf %571, %366 : vector<2x16xf32>
    %cst_146 = arith.constant 1.250000e+00 : f32
    %573 = vector.broadcast %cst_146 : f32 to vector<2x16xf32>
    %574 = arith.mulf %572, %573 : vector<2x16xf32>
    %575 = arith.mulf %574, %477 : vector<2x16xf32>
    %576 = arith.addf %570, %575 : vector<2x16xf32>
    %cst_147 = arith.constant -1.400000e+00 : f32
    %577 = vector.broadcast %cst_147 : f32 to vector<2x16xf32>
    %578 = arith.subf %366, %577 : vector<2x16xf32>
    %cst_148 = arith.constant 1.250000e+00 : f32
    %579 = vector.broadcast %cst_148 : f32 to vector<2x16xf32>
    %580 = arith.mulf %578, %579 : vector<2x16xf32>
    %581 = arith.mulf %580, %477 : vector<2x16xf32>
    %cst_149 = arith.constant -2.000000e-01 : f32
    %582 = vector.broadcast %cst_149 : f32 to vector<2x16xf32>
    %583 = arith.subf %582, %366 : vector<2x16xf32>
    %cst_150 = arith.constant 1.250000e+00 : f32
    %584 = vector.broadcast %cst_150 : f32 to vector<2x16xf32>
    %585 = arith.mulf %583, %584 : vector<2x16xf32>
    %586 = arith.mulf %585, %488 : vector<2x16xf32>
    %587 = arith.addf %581, %586 : vector<2x16xf32>
    %cst_151 = arith.constant -1.000000e+00 : f32
    %588 = vector.broadcast %cst_151 : f32 to vector<2x16xf32>
    %589 = arith.subf %366, %588 : vector<2x16xf32>
    %cst_152 = arith.constant 1.250000e+00 : f32
    %590 = vector.broadcast %cst_152 : f32 to vector<2x16xf32>
    %591 = arith.mulf %589, %590 : vector<2x16xf32>
    %592 = arith.mulf %591, %488 : vector<2x16xf32>
    %cst_153 = arith.constant 2.000000e-01 : f32
    %593 = vector.broadcast %cst_153 : f32 to vector<2x16xf32>
    %594 = arith.subf %593, %366 : vector<2x16xf32>
    %cst_154 = arith.constant 1.250000e+00 : f32
    %595 = vector.broadcast %cst_154 : f32 to vector<2x16xf32>
    %596 = arith.mulf %594, %595 : vector<2x16xf32>
    %597 = arith.mulf %596, %499 : vector<2x16xf32>
    %598 = arith.addf %592, %597 : vector<2x16xf32>
    %cst_155 = arith.constant -6.000000e-01 : f32
    %599 = vector.broadcast %cst_155 : f32 to vector<2x16xf32>
    %600 = arith.subf %366, %599 : vector<2x16xf32>
    %cst_156 = arith.constant 1.250000e+00 : f32
    %601 = vector.broadcast %cst_156 : f32 to vector<2x16xf32>
    %602 = arith.mulf %600, %601 : vector<2x16xf32>
    %603 = arith.mulf %602, %499 : vector<2x16xf32>
    %cst_157 = arith.constant 6.000000e-01 : f32
    %604 = vector.broadcast %cst_157 : f32 to vector<2x16xf32>
    %605 = arith.subf %604, %366 : vector<2x16xf32>
    %cst_158 = arith.constant 1.250000e+00 : f32
    %606 = vector.broadcast %cst_158 : f32 to vector<2x16xf32>
    %607 = arith.mulf %605, %606 : vector<2x16xf32>
    %608 = arith.mulf %607, %510 : vector<2x16xf32>
    %609 = arith.addf %603, %608 : vector<2x16xf32>
    %cst_159 = arith.constant -2.000000e-01 : f32
    %610 = vector.broadcast %cst_159 : f32 to vector<2x16xf32>
    %611 = arith.subf %366, %610 : vector<2x16xf32>
    %cst_160 = arith.constant 1.250000e+00 : f32
    %612 = vector.broadcast %cst_160 : f32 to vector<2x16xf32>
    %613 = arith.mulf %611, %612 : vector<2x16xf32>
    %614 = arith.mulf %613, %510 : vector<2x16xf32>
    %cst_161 = arith.constant 1.000000e+00 : f32
    %615 = vector.broadcast %cst_161 : f32 to vector<2x16xf32>
    %616 = arith.subf %615, %366 : vector<2x16xf32>
    %cst_162 = arith.constant 1.250000e+00 : f32
    %617 = vector.broadcast %cst_162 : f32 to vector<2x16xf32>
    %618 = arith.mulf %616, %617 : vector<2x16xf32>
    %619 = arith.mulf %618, %521 : vector<2x16xf32>
    %620 = arith.addf %614, %619 : vector<2x16xf32>
    %cst_163 = arith.constant 2.000000e-01 : f32
    %621 = vector.broadcast %cst_163 : f32 to vector<2x16xf32>
    %622 = arith.subf %366, %621 : vector<2x16xf32>
    %cst_164 = arith.constant 1.250000e+00 : f32
    %623 = vector.broadcast %cst_164 : f32 to vector<2x16xf32>
    %624 = arith.mulf %622, %623 : vector<2x16xf32>
    %625 = arith.mulf %624, %521 : vector<2x16xf32>
    %cst_165 = arith.constant 1.400000e+00 : f32
    %626 = vector.broadcast %cst_165 : f32 to vector<2x16xf32>
    %627 = arith.subf %626, %366 : vector<2x16xf32>
    %cst_166 = arith.constant 1.250000e+00 : f32
    %628 = vector.broadcast %cst_166 : f32 to vector<2x16xf32>
    %629 = arith.mulf %627, %628 : vector<2x16xf32>
    %630 = arith.mulf %629, %532 : vector<2x16xf32>
    %631 = arith.addf %625, %630 : vector<2x16xf32>
    %cst_167 = arith.constant 6.000000e-01 : f32
    %632 = vector.broadcast %cst_167 : f32 to vector<2x16xf32>
    %633 = arith.subf %366, %632 : vector<2x16xf32>
    %cst_168 = arith.constant 1.250000e+00 : f32
    %634 = vector.broadcast %cst_168 : f32 to vector<2x16xf32>
    %635 = arith.mulf %633, %634 : vector<2x16xf32>
    %636 = arith.mulf %635, %532 : vector<2x16xf32>
    %cst_169 = arith.constant 1.800000e+00 : f32
    %637 = vector.broadcast %cst_169 : f32 to vector<2x16xf32>
    %638 = arith.subf %637, %366 : vector<2x16xf32>
    %cst_170 = arith.constant 1.250000e+00 : f32
    %639 = vector.broadcast %cst_170 : f32 to vector<2x16xf32>
    %640 = arith.mulf %638, %639 : vector<2x16xf32>
    %641 = arith.mulf %640, %543 : vector<2x16xf32>
    %642 = arith.addf %636, %641 : vector<2x16xf32>
    %cst_171 = arith.constant 1.000000e+00 : f32
    %643 = vector.broadcast %cst_171 : f32 to vector<2x16xf32>
    %644 = arith.subf %366, %643 : vector<2x16xf32>
    %cst_172 = arith.constant 1.250000e+00 : f32
    %645 = vector.broadcast %cst_172 : f32 to vector<2x16xf32>
    %646 = arith.mulf %644, %645 : vector<2x16xf32>
    %647 = arith.mulf %646, %543 : vector<2x16xf32>
    %cst_173 = arith.constant 2.200000e+00 : f32
    %648 = vector.broadcast %cst_173 : f32 to vector<2x16xf32>
    %649 = arith.subf %648, %366 : vector<2x16xf32>
    %cst_174 = arith.constant 1.250000e+00 : f32
    %650 = vector.broadcast %cst_174 : f32 to vector<2x16xf32>
    %651 = arith.mulf %649, %650 : vector<2x16xf32>
    %652 = arith.mulf %651, %554 : vector<2x16xf32>
    %653 = arith.addf %647, %652 : vector<2x16xf32>
    %cst_175 = arith.constant -2.200000e+00 : f32
    %654 = vector.broadcast %cst_175 : f32 to vector<2x16xf32>
    %655 = arith.subf %366, %654 : vector<2x16xf32>
    %cst_176 = arith.constant 0.833333313 : f32
    %656 = vector.broadcast %cst_176 : f32 to vector<2x16xf32>
    %657 = arith.mulf %655, %656 : vector<2x16xf32>
    %658 = arith.mulf %657, %565 : vector<2x16xf32>
    %cst_177 = arith.constant -6.000000e-01 : f32
    %659 = vector.broadcast %cst_177 : f32 to vector<2x16xf32>
    %660 = arith.subf %659, %366 : vector<2x16xf32>
    %cst_178 = arith.constant 0.833333313 : f32
    %661 = vector.broadcast %cst_178 : f32 to vector<2x16xf32>
    %662 = arith.mulf %660, %661 : vector<2x16xf32>
    %663 = arith.mulf %662, %576 : vector<2x16xf32>
    %664 = arith.addf %658, %663 : vector<2x16xf32>
    %cst_179 = arith.constant -1.800000e+00 : f32
    %665 = vector.broadcast %cst_179 : f32 to vector<2x16xf32>
    %666 = arith.subf %366, %665 : vector<2x16xf32>
    %cst_180 = arith.constant 0.833333313 : f32
    %667 = vector.broadcast %cst_180 : f32 to vector<2x16xf32>
    %668 = arith.mulf %666, %667 : vector<2x16xf32>
    %669 = arith.mulf %668, %576 : vector<2x16xf32>
    %cst_181 = arith.constant -2.000000e-01 : f32
    %670 = vector.broadcast %cst_181 : f32 to vector<2x16xf32>
    %671 = arith.subf %670, %366 : vector<2x16xf32>
    %cst_182 = arith.constant 0.833333313 : f32
    %672 = vector.broadcast %cst_182 : f32 to vector<2x16xf32>
    %673 = arith.mulf %671, %672 : vector<2x16xf32>
    %674 = arith.mulf %673, %587 : vector<2x16xf32>
    %675 = arith.addf %669, %674 : vector<2x16xf32>
    %cst_183 = arith.constant -1.400000e+00 : f32
    %676 = vector.broadcast %cst_183 : f32 to vector<2x16xf32>
    %677 = arith.subf %366, %676 : vector<2x16xf32>
    %cst_184 = arith.constant 0.833333313 : f32
    %678 = vector.broadcast %cst_184 : f32 to vector<2x16xf32>
    %679 = arith.mulf %677, %678 : vector<2x16xf32>
    %680 = arith.mulf %679, %587 : vector<2x16xf32>
    %cst_185 = arith.constant 2.000000e-01 : f32
    %681 = vector.broadcast %cst_185 : f32 to vector<2x16xf32>
    %682 = arith.subf %681, %366 : vector<2x16xf32>
    %cst_186 = arith.constant 0.833333313 : f32
    %683 = vector.broadcast %cst_186 : f32 to vector<2x16xf32>
    %684 = arith.mulf %682, %683 : vector<2x16xf32>
    %685 = arith.mulf %684, %598 : vector<2x16xf32>
    %686 = arith.addf %680, %685 : vector<2x16xf32>
    %cst_187 = arith.constant -1.000000e+00 : f32
    %687 = vector.broadcast %cst_187 : f32 to vector<2x16xf32>
    %688 = arith.subf %366, %687 : vector<2x16xf32>
    %cst_188 = arith.constant 0.833333313 : f32
    %689 = vector.broadcast %cst_188 : f32 to vector<2x16xf32>
    %690 = arith.mulf %688, %689 : vector<2x16xf32>
    %691 = arith.mulf %690, %598 : vector<2x16xf32>
    %cst_189 = arith.constant 6.000000e-01 : f32
    %692 = vector.broadcast %cst_189 : f32 to vector<2x16xf32>
    %693 = arith.subf %692, %366 : vector<2x16xf32>
    %cst_190 = arith.constant 0.833333313 : f32
    %694 = vector.broadcast %cst_190 : f32 to vector<2x16xf32>
    %695 = arith.mulf %693, %694 : vector<2x16xf32>
    %696 = arith.mulf %695, %609 : vector<2x16xf32>
    %697 = arith.addf %691, %696 : vector<2x16xf32>
    %cst_191 = arith.constant -6.000000e-01 : f32
    %698 = vector.broadcast %cst_191 : f32 to vector<2x16xf32>
    %699 = arith.subf %366, %698 : vector<2x16xf32>
    %cst_192 = arith.constant 0.833333313 : f32
    %700 = vector.broadcast %cst_192 : f32 to vector<2x16xf32>
    %701 = arith.mulf %699, %700 : vector<2x16xf32>
    %702 = arith.mulf %701, %609 : vector<2x16xf32>
    %cst_193 = arith.constant 1.000000e+00 : f32
    %703 = vector.broadcast %cst_193 : f32 to vector<2x16xf32>
    %704 = arith.subf %703, %366 : vector<2x16xf32>
    %cst_194 = arith.constant 0.833333313 : f32
    %705 = vector.broadcast %cst_194 : f32 to vector<2x16xf32>
    %706 = arith.mulf %704, %705 : vector<2x16xf32>
    %707 = arith.mulf %706, %620 : vector<2x16xf32>
    %708 = arith.addf %702, %707 : vector<2x16xf32>
    %cst_195 = arith.constant -2.000000e-01 : f32
    %709 = vector.broadcast %cst_195 : f32 to vector<2x16xf32>
    %710 = arith.subf %366, %709 : vector<2x16xf32>
    %cst_196 = arith.constant 0.833333313 : f32
    %711 = vector.broadcast %cst_196 : f32 to vector<2x16xf32>
    %712 = arith.mulf %710, %711 : vector<2x16xf32>
    %713 = arith.mulf %712, %620 : vector<2x16xf32>
    %cst_197 = arith.constant 1.400000e+00 : f32
    %714 = vector.broadcast %cst_197 : f32 to vector<2x16xf32>
    %715 = arith.subf %714, %366 : vector<2x16xf32>
    %cst_198 = arith.constant 0.833333313 : f32
    %716 = vector.broadcast %cst_198 : f32 to vector<2x16xf32>
    %717 = arith.mulf %715, %716 : vector<2x16xf32>
    %718 = arith.mulf %717, %631 : vector<2x16xf32>
    %719 = arith.addf %713, %718 : vector<2x16xf32>
    %cst_199 = arith.constant 2.000000e-01 : f32
    %720 = vector.broadcast %cst_199 : f32 to vector<2x16xf32>
    %721 = arith.subf %366, %720 : vector<2x16xf32>
    %cst_200 = arith.constant 0.833333313 : f32
    %722 = vector.broadcast %cst_200 : f32 to vector<2x16xf32>
    %723 = arith.mulf %721, %722 : vector<2x16xf32>
    %724 = arith.mulf %723, %631 : vector<2x16xf32>
    %cst_201 = arith.constant 1.800000e+00 : f32
    %725 = vector.broadcast %cst_201 : f32 to vector<2x16xf32>
    %726 = arith.subf %725, %366 : vector<2x16xf32>
    %cst_202 = arith.constant 0.833333313 : f32
    %727 = vector.broadcast %cst_202 : f32 to vector<2x16xf32>
    %728 = arith.mulf %726, %727 : vector<2x16xf32>
    %729 = arith.mulf %728, %642 : vector<2x16xf32>
    %730 = arith.addf %724, %729 : vector<2x16xf32>
    %cst_203 = arith.constant 6.000000e-01 : f32
    %731 = vector.broadcast %cst_203 : f32 to vector<2x16xf32>
    %732 = arith.subf %366, %731 : vector<2x16xf32>
    %cst_204 = arith.constant 0.833333313 : f32
    %733 = vector.broadcast %cst_204 : f32 to vector<2x16xf32>
    %734 = arith.mulf %732, %733 : vector<2x16xf32>
    %735 = arith.mulf %734, %642 : vector<2x16xf32>
    %cst_205 = arith.constant 2.200000e+00 : f32
    %736 = vector.broadcast %cst_205 : f32 to vector<2x16xf32>
    %737 = arith.subf %736, %366 : vector<2x16xf32>
    %cst_206 = arith.constant 0.833333313 : f32
    %738 = vector.broadcast %cst_206 : f32 to vector<2x16xf32>
    %739 = arith.mulf %737, %738 : vector<2x16xf32>
    %740 = arith.mulf %739, %653 : vector<2x16xf32>
    %741 = arith.addf %735, %740 : vector<2x16xf32>
    %742 = arith.negf %366 : vector<2x16xf32>
    %743 = math.exp %742 : vector<2x16xf32>
    %cst_207 = arith.constant 1.000000e+00 : f32
    %744 = vector.broadcast %cst_207 : f32 to vector<2x16xf32>
    %745 = arith.addf %744, %743 : vector<2x16xf32>
    %746 = arith.divf %744, %745 : vector<2x16xf32>
    %747 = arith.mulf %366, %746 : vector<2x16xf32>
    %748 = tpu.concatenate %747, %664, %675, %686, %697, %708, %719, %730, %741 in 1 : vector<2x16xf32>, vector<2x16xf32>, vector<2x16xf32>, vector<2x16xf32>, vector<2x16xf32>, vector<2x16xf32>, vector<2x16xf32>, vector<2x16xf32>, vector<2x16xf32> -> vector<2x144xf32>
    %cst_208 = arith.constant dense<0.000000e+00> : vector<2x128xf32>
    %749 = tpu.matmul %748, %367, %cst_208 {dimension_numbers = #tpu.dot_dimension_numbers<[1], [0], [0], [1], [0, 0, 1, 1], [], []>} : vector<2x144xf32>, vector<144x128xf32>, vector<2x128xf32> -> vector<2x128xf32>
    %cst_209 = arith.constant -2.200000e+00 : f32
    %750 = vector.broadcast %cst_209 : f32 to vector<2x128xf32>
    %751 = arith.cmpf oge, %749, %750 : vector<2x128xf32>
    %cst_210 = arith.constant -1.800000e+00 : f32
    %752 = vector.broadcast %cst_210 : f32 to vector<2x128xf32>
    %753 = arith.cmpf olt, %749, %752 : vector<2x128xf32>
    %754 = arith.andi %751, %753 : vector<2x128xi1>
    %755 = arith.extui %754 : vector<2x128xi1> to vector<2x128xi32>
    %756 = arith.sitofp %755 : vector<2x128xi32> to vector<2x128xf32>
    %cst_211 = arith.constant -1.800000e+00 : f32
    %757 = vector.broadcast %cst_211 : f32 to vector<2x128xf32>
    %758 = arith.cmpf oge, %749, %757 : vector<2x128xf32>
    %cst_212 = arith.constant -1.400000e+00 : f32
    %759 = vector.broadcast %cst_212 : f32 to vector<2x128xf32>
    %760 = arith.cmpf olt, %749, %759 : vector<2x128xf32>
    %761 = arith.andi %758, %760 : vector<2x128xi1>
    %762 = arith.extui %761 : vector<2x128xi1> to vector<2x128xi32>
    %763 = arith.sitofp %762 : vector<2x128xi32> to vector<2x128xf32>
    %cst_213 = arith.constant -1.400000e+00 : f32
    %764 = vector.broadcast %cst_213 : f32 to vector<2x128xf32>
    %765 = arith.cmpf oge, %749, %764 : vector<2x128xf32>
    %cst_214 = arith.constant -1.000000e+00 : f32
    %766 = vector.broadcast %cst_214 : f32 to vector<2x128xf32>
    %767 = arith.cmpf olt, %749, %766 : vector<2x128xf32>
    %768 = arith.andi %765, %767 : vector<2x128xi1>
    %769 = arith.extui %768 : vector<2x128xi1> to vector<2x128xi32>
    %770 = arith.sitofp %769 : vector<2x128xi32> to vector<2x128xf32>
    %cst_215 = arith.constant -1.000000e+00 : f32
    %771 = vector.broadcast %cst_215 : f32 to vector<2x128xf32>
    %772 = arith.cmpf oge, %749, %771 : vector<2x128xf32>
    %cst_216 = arith.constant -6.000000e-01 : f32
    %773 = vector.broadcast %cst_216 : f32 to vector<2x128xf32>
    %774 = arith.cmpf olt, %749, %773 : vector<2x128xf32>
    %775 = arith.andi %772, %774 : vector<2x128xi1>
    %776 = arith.extui %775 : vector<2x128xi1> to vector<2x128xi32>
    %777 = arith.sitofp %776 : vector<2x128xi32> to vector<2x128xf32>
    %cst_217 = arith.constant -6.000000e-01 : f32
    %778 = vector.broadcast %cst_217 : f32 to vector<2x128xf32>
    %779 = arith.cmpf oge, %749, %778 : vector<2x128xf32>
    %cst_218 = arith.constant -2.000000e-01 : f32
    %780 = vector.broadcast %cst_218 : f32 to vector<2x128xf32>
    %781 = arith.cmpf olt, %749, %780 : vector<2x128xf32>
    %782 = arith.andi %779, %781 : vector<2x128xi1>
    %783 = arith.extui %782 : vector<2x128xi1> to vector<2x128xi32>
    %784 = arith.sitofp %783 : vector<2x128xi32> to vector<2x128xf32>
    %cst_219 = arith.constant -2.000000e-01 : f32
    %785 = vector.broadcast %cst_219 : f32 to vector<2x128xf32>
    %786 = arith.cmpf oge, %749, %785 : vector<2x128xf32>
    %cst_220 = arith.constant 2.000000e-01 : f32
    %787 = vector.broadcast %cst_220 : f32 to vector<2x128xf32>
    %788 = arith.cmpf olt, %749, %787 : vector<2x128xf32>
    %789 = arith.andi %786, %788 : vector<2x128xi1>
    %790 = arith.extui %789 : vector<2x128xi1> to vector<2x128xi32>
    %791 = arith.sitofp %790 : vector<2x128xi32> to vector<2x128xf32>
    %cst_221 = arith.constant 2.000000e-01 : f32
    %792 = vector.broadcast %cst_221 : f32 to vector<2x128xf32>
    %793 = arith.cmpf oge, %749, %792 : vector<2x128xf32>
    %cst_222 = arith.constant 6.000000e-01 : f32
    %794 = vector.broadcast %cst_222 : f32 to vector<2x128xf32>
    %795 = arith.cmpf olt, %749, %794 : vector<2x128xf32>
    %796 = arith.andi %793, %795 : vector<2x128xi1>
    %797 = arith.extui %796 : vector<2x128xi1> to vector<2x128xi32>
    %798 = arith.sitofp %797 : vector<2x128xi32> to vector<2x128xf32>
    %cst_223 = arith.constant 6.000000e-01 : f32
    %799 = vector.broadcast %cst_223 : f32 to vector<2x128xf32>
    %800 = arith.cmpf oge, %749, %799 : vector<2x128xf32>
    %cst_224 = arith.constant 1.000000e+00 : f32
    %801 = vector.broadcast %cst_224 : f32 to vector<2x128xf32>
    %802 = arith.cmpf olt, %749, %801 : vector<2x128xf32>
    %803 = arith.andi %800, %802 : vector<2x128xi1>
    %804 = arith.extui %803 : vector<2x128xi1> to vector<2x128xi32>
    %805 = arith.sitofp %804 : vector<2x128xi32> to vector<2x128xf32>
    %cst_225 = arith.constant 1.000000e+00 : f32
    %806 = vector.broadcast %cst_225 : f32 to vector<2x128xf32>
    %807 = arith.cmpf oge, %749, %806 : vector<2x128xf32>
    %cst_226 = arith.constant 1.400000e+00 : f32
    %808 = vector.broadcast %cst_226 : f32 to vector<2x128xf32>
    %809 = arith.cmpf olt, %749, %808 : vector<2x128xf32>
    %810 = arith.andi %807, %809 : vector<2x128xi1>
    %811 = arith.extui %810 : vector<2x128xi1> to vector<2x128xi32>
    %812 = arith.sitofp %811 : vector<2x128xi32> to vector<2x128xf32>
    %cst_227 = arith.constant 1.400000e+00 : f32
    %813 = vector.broadcast %cst_227 : f32 to vector<2x128xf32>
    %814 = arith.cmpf oge, %749, %813 : vector<2x128xf32>
    %cst_228 = arith.constant 1.800000e+00 : f32
    %815 = vector.broadcast %cst_228 : f32 to vector<2x128xf32>
    %816 = arith.cmpf olt, %749, %815 : vector<2x128xf32>
    %817 = arith.andi %814, %816 : vector<2x128xi1>
    %818 = arith.extui %817 : vector<2x128xi1> to vector<2x128xi32>
    %819 = arith.sitofp %818 : vector<2x128xi32> to vector<2x128xf32>
    %cst_229 = arith.constant 1.800000e+00 : f32
    %820 = vector.broadcast %cst_229 : f32 to vector<2x128xf32>
    %821 = arith.cmpf oge, %749, %820 : vector<2x128xf32>
    %cst_230 = arith.constant 2.200000e+00 : f32
    %822 = vector.broadcast %cst_230 : f32 to vector<2x128xf32>
    %823 = arith.cmpf olt, %749, %822 : vector<2x128xf32>
    %824 = arith.andi %821, %823 : vector<2x128xi1>
    %825 = arith.extui %824 : vector<2x128xi1> to vector<2x128xi32>
    %826 = arith.sitofp %825 : vector<2x128xi32> to vector<2x128xf32>
    %cst_231 = arith.constant -2.200000e+00 : f32
    %827 = vector.broadcast %cst_231 : f32 to vector<2x128xf32>
    %828 = arith.subf %749, %827 : vector<2x128xf32>
    %cst_232 = arith.constant 2.500000e+00 : f32
    %829 = vector.broadcast %cst_232 : f32 to vector<2x128xf32>
    %830 = arith.mulf %828, %829 : vector<2x128xf32>
    %831 = arith.mulf %830, %756 : vector<2x128xf32>
    %cst_233 = arith.constant -1.400000e+00 : f32
    %832 = vector.broadcast %cst_233 : f32 to vector<2x128xf32>
    %833 = arith.subf %832, %749 : vector<2x128xf32>
    %cst_234 = arith.constant 2.500000e+00 : f32
    %834 = vector.broadcast %cst_234 : f32 to vector<2x128xf32>
    %835 = arith.mulf %833, %834 : vector<2x128xf32>
    %836 = arith.mulf %835, %763 : vector<2x128xf32>
    %837 = arith.addf %831, %836 : vector<2x128xf32>
    %cst_235 = arith.constant -1.800000e+00 : f32
    %838 = vector.broadcast %cst_235 : f32 to vector<2x128xf32>
    %839 = arith.subf %749, %838 : vector<2x128xf32>
    %cst_236 = arith.constant 2.500000e+00 : f32
    %840 = vector.broadcast %cst_236 : f32 to vector<2x128xf32>
    %841 = arith.mulf %839, %840 : vector<2x128xf32>
    %842 = arith.mulf %841, %763 : vector<2x128xf32>
    %cst_237 = arith.constant -1.000000e+00 : f32
    %843 = vector.broadcast %cst_237 : f32 to vector<2x128xf32>
    %844 = arith.subf %843, %749 : vector<2x128xf32>
    %cst_238 = arith.constant 2.500000e+00 : f32
    %845 = vector.broadcast %cst_238 : f32 to vector<2x128xf32>
    %846 = arith.mulf %844, %845 : vector<2x128xf32>
    %847 = arith.mulf %846, %770 : vector<2x128xf32>
    %848 = arith.addf %842, %847 : vector<2x128xf32>
    %cst_239 = arith.constant -1.400000e+00 : f32
    %849 = vector.broadcast %cst_239 : f32 to vector<2x128xf32>
    %850 = arith.subf %749, %849 : vector<2x128xf32>
    %cst_240 = arith.constant 2.500000e+00 : f32
    %851 = vector.broadcast %cst_240 : f32 to vector<2x128xf32>
    %852 = arith.mulf %850, %851 : vector<2x128xf32>
    %853 = arith.mulf %852, %770 : vector<2x128xf32>
    %cst_241 = arith.constant -6.000000e-01 : f32
    %854 = vector.broadcast %cst_241 : f32 to vector<2x128xf32>
    %855 = arith.subf %854, %749 : vector<2x128xf32>
    %cst_242 = arith.constant 2.500000e+00 : f32
    %856 = vector.broadcast %cst_242 : f32 to vector<2x128xf32>
    %857 = arith.mulf %855, %856 : vector<2x128xf32>
    %858 = arith.mulf %857, %777 : vector<2x128xf32>
    %859 = arith.addf %853, %858 : vector<2x128xf32>
    %cst_243 = arith.constant -1.000000e+00 : f32
    %860 = vector.broadcast %cst_243 : f32 to vector<2x128xf32>
    %861 = arith.subf %749, %860 : vector<2x128xf32>
    %cst_244 = arith.constant 2.500000e+00 : f32
    %862 = vector.broadcast %cst_244 : f32 to vector<2x128xf32>
    %863 = arith.mulf %861, %862 : vector<2x128xf32>
    %864 = arith.mulf %863, %777 : vector<2x128xf32>
    %cst_245 = arith.constant -2.000000e-01 : f32
    %865 = vector.broadcast %cst_245 : f32 to vector<2x128xf32>
    %866 = arith.subf %865, %749 : vector<2x128xf32>
    %cst_246 = arith.constant 2.500000e+00 : f32
    %867 = vector.broadcast %cst_246 : f32 to vector<2x128xf32>
    %868 = arith.mulf %866, %867 : vector<2x128xf32>
    %869 = arith.mulf %868, %784 : vector<2x128xf32>
    %870 = arith.addf %864, %869 : vector<2x128xf32>
    %cst_247 = arith.constant -6.000000e-01 : f32
    %871 = vector.broadcast %cst_247 : f32 to vector<2x128xf32>
    %872 = arith.subf %749, %871 : vector<2x128xf32>
    %cst_248 = arith.constant 2.500000e+00 : f32
    %873 = vector.broadcast %cst_248 : f32 to vector<2x128xf32>
    %874 = arith.mulf %872, %873 : vector<2x128xf32>
    %875 = arith.mulf %874, %784 : vector<2x128xf32>
    %cst_249 = arith.constant 2.000000e-01 : f32
    %876 = vector.broadcast %cst_249 : f32 to vector<2x128xf32>
    %877 = arith.subf %876, %749 : vector<2x128xf32>
    %cst_250 = arith.constant 2.500000e+00 : f32
    %878 = vector.broadcast %cst_250 : f32 to vector<2x128xf32>
    %879 = arith.mulf %877, %878 : vector<2x128xf32>
    %880 = arith.mulf %879, %791 : vector<2x128xf32>
    %881 = arith.addf %875, %880 : vector<2x128xf32>
    %cst_251 = arith.constant -2.000000e-01 : f32
    %882 = vector.broadcast %cst_251 : f32 to vector<2x128xf32>
    %883 = arith.subf %749, %882 : vector<2x128xf32>
    %cst_252 = arith.constant 2.500000e+00 : f32
    %884 = vector.broadcast %cst_252 : f32 to vector<2x128xf32>
    %885 = arith.mulf %883, %884 : vector<2x128xf32>
    %886 = arith.mulf %885, %791 : vector<2x128xf32>
    %cst_253 = arith.constant 6.000000e-01 : f32
    %887 = vector.broadcast %cst_253 : f32 to vector<2x128xf32>
    %888 = arith.subf %887, %749 : vector<2x128xf32>
    %cst_254 = arith.constant 2.500000e+00 : f32
    %889 = vector.broadcast %cst_254 : f32 to vector<2x128xf32>
    %890 = arith.mulf %888, %889 : vector<2x128xf32>
    %891 = arith.mulf %890, %798 : vector<2x128xf32>
    %892 = arith.addf %886, %891 : vector<2x128xf32>
    %cst_255 = arith.constant 2.000000e-01 : f32
    %893 = vector.broadcast %cst_255 : f32 to vector<2x128xf32>
    %894 = arith.subf %749, %893 : vector<2x128xf32>
    %cst_256 = arith.constant 2.500000e+00 : f32
    %895 = vector.broadcast %cst_256 : f32 to vector<2x128xf32>
    %896 = arith.mulf %894, %895 : vector<2x128xf32>
    %897 = arith.mulf %896, %798 : vector<2x128xf32>
    %cst_257 = arith.constant 1.000000e+00 : f32
    %898 = vector.broadcast %cst_257 : f32 to vector<2x128xf32>
    %899 = arith.subf %898, %749 : vector<2x128xf32>
    %cst_258 = arith.constant 2.500000e+00 : f32
    %900 = vector.broadcast %cst_258 : f32 to vector<2x128xf32>
    %901 = arith.mulf %899, %900 : vector<2x128xf32>
    %902 = arith.mulf %901, %805 : vector<2x128xf32>
    %903 = arith.addf %897, %902 : vector<2x128xf32>
    %cst_259 = arith.constant 6.000000e-01 : f32
    %904 = vector.broadcast %cst_259 : f32 to vector<2x128xf32>
    %905 = arith.subf %749, %904 : vector<2x128xf32>
    %cst_260 = arith.constant 2.500000e+00 : f32
    %906 = vector.broadcast %cst_260 : f32 to vector<2x128xf32>
    %907 = arith.mulf %905, %906 : vector<2x128xf32>
    %908 = arith.mulf %907, %805 : vector<2x128xf32>
    %cst_261 = arith.constant 1.400000e+00 : f32
    %909 = vector.broadcast %cst_261 : f32 to vector<2x128xf32>
    %910 = arith.subf %909, %749 : vector<2x128xf32>
    %cst_262 = arith.constant 2.500000e+00 : f32
    %911 = vector.broadcast %cst_262 : f32 to vector<2x128xf32>
    %912 = arith.mulf %910, %911 : vector<2x128xf32>
    %913 = arith.mulf %912, %812 : vector<2x128xf32>
    %914 = arith.addf %908, %913 : vector<2x128xf32>
    %cst_263 = arith.constant 1.000000e+00 : f32
    %915 = vector.broadcast %cst_263 : f32 to vector<2x128xf32>
    %916 = arith.subf %749, %915 : vector<2x128xf32>
    %cst_264 = arith.constant 2.500000e+00 : f32
    %917 = vector.broadcast %cst_264 : f32 to vector<2x128xf32>
    %918 = arith.mulf %916, %917 : vector<2x128xf32>
    %919 = arith.mulf %918, %812 : vector<2x128xf32>
    %cst_265 = arith.constant 1.800000e+00 : f32
    %920 = vector.broadcast %cst_265 : f32 to vector<2x128xf32>
    %921 = arith.subf %920, %749 : vector<2x128xf32>
    %cst_266 = arith.constant 2.500000e+00 : f32
    %922 = vector.broadcast %cst_266 : f32 to vector<2x128xf32>
    %923 = arith.mulf %921, %922 : vector<2x128xf32>
    %924 = arith.mulf %923, %819 : vector<2x128xf32>
    %925 = arith.addf %919, %924 : vector<2x128xf32>
    %cst_267 = arith.constant 1.400000e+00 : f32
    %926 = vector.broadcast %cst_267 : f32 to vector<2x128xf32>
    %927 = arith.subf %749, %926 : vector<2x128xf32>
    %cst_268 = arith.constant 2.500000e+00 : f32
    %928 = vector.broadcast %cst_268 : f32 to vector<2x128xf32>
    %929 = arith.mulf %927, %928 : vector<2x128xf32>
    %930 = arith.mulf %929, %819 : vector<2x128xf32>
    %cst_269 = arith.constant 2.200000e+00 : f32
    %931 = vector.broadcast %cst_269 : f32 to vector<2x128xf32>
    %932 = arith.subf %931, %749 : vector<2x128xf32>
    %cst_270 = arith.constant 2.500000e+00 : f32
    %933 = vector.broadcast %cst_270 : f32 to vector<2x128xf32>
    %934 = arith.mulf %932, %933 : vector<2x128xf32>
    %935 = arith.mulf %934, %826 : vector<2x128xf32>
    %936 = arith.addf %930, %935 : vector<2x128xf32>
    %cst_271 = arith.constant -2.200000e+00 : f32
    %937 = vector.broadcast %cst_271 : f32 to vector<2x128xf32>
    %938 = arith.subf %749, %937 : vector<2x128xf32>
    %cst_272 = arith.constant 1.250000e+00 : f32
    %939 = vector.broadcast %cst_272 : f32 to vector<2x128xf32>
    %940 = arith.mulf %938, %939 : vector<2x128xf32>
    %941 = arith.mulf %940, %837 : vector<2x128xf32>
    %cst_273 = arith.constant -1.000000e+00 : f32
    %942 = vector.broadcast %cst_273 : f32 to vector<2x128xf32>
    %943 = arith.subf %942, %749 : vector<2x128xf32>
    %cst_274 = arith.constant 1.250000e+00 : f32
    %944 = vector.broadcast %cst_274 : f32 to vector<2x128xf32>
    %945 = arith.mulf %943, %944 : vector<2x128xf32>
    %946 = arith.mulf %945, %848 : vector<2x128xf32>
    %947 = arith.addf %941, %946 : vector<2x128xf32>
    %cst_275 = arith.constant -1.800000e+00 : f32
    %948 = vector.broadcast %cst_275 : f32 to vector<2x128xf32>
    %949 = arith.subf %749, %948 : vector<2x128xf32>
    %cst_276 = arith.constant 1.250000e+00 : f32
    %950 = vector.broadcast %cst_276 : f32 to vector<2x128xf32>
    %951 = arith.mulf %949, %950 : vector<2x128xf32>
    %952 = arith.mulf %951, %848 : vector<2x128xf32>
    %cst_277 = arith.constant -6.000000e-01 : f32
    %953 = vector.broadcast %cst_277 : f32 to vector<2x128xf32>
    %954 = arith.subf %953, %749 : vector<2x128xf32>
    %cst_278 = arith.constant 1.250000e+00 : f32
    %955 = vector.broadcast %cst_278 : f32 to vector<2x128xf32>
    %956 = arith.mulf %954, %955 : vector<2x128xf32>
    %957 = arith.mulf %956, %859 : vector<2x128xf32>
    %958 = arith.addf %952, %957 : vector<2x128xf32>
    %cst_279 = arith.constant -1.400000e+00 : f32
    %959 = vector.broadcast %cst_279 : f32 to vector<2x128xf32>
    %960 = arith.subf %749, %959 : vector<2x128xf32>
    %cst_280 = arith.constant 1.250000e+00 : f32
    %961 = vector.broadcast %cst_280 : f32 to vector<2x128xf32>
    %962 = arith.mulf %960, %961 : vector<2x128xf32>
    %963 = arith.mulf %962, %859 : vector<2x128xf32>
    %cst_281 = arith.constant -2.000000e-01 : f32
    %964 = vector.broadcast %cst_281 : f32 to vector<2x128xf32>
    %965 = arith.subf %964, %749 : vector<2x128xf32>
    %cst_282 = arith.constant 1.250000e+00 : f32
    %966 = vector.broadcast %cst_282 : f32 to vector<2x128xf32>
    %967 = arith.mulf %965, %966 : vector<2x128xf32>
    %968 = arith.mulf %967, %870 : vector<2x128xf32>
    %969 = arith.addf %963, %968 : vector<2x128xf32>
    %cst_283 = arith.constant -1.000000e+00 : f32
    %970 = vector.broadcast %cst_283 : f32 to vector<2x128xf32>
    %971 = arith.subf %749, %970 : vector<2x128xf32>
    %cst_284 = arith.constant 1.250000e+00 : f32
    %972 = vector.broadcast %cst_284 : f32 to vector<2x128xf32>
    %973 = arith.mulf %971, %972 : vector<2x128xf32>
    %974 = arith.mulf %973, %870 : vector<2x128xf32>
    %cst_285 = arith.constant 2.000000e-01 : f32
    %975 = vector.broadcast %cst_285 : f32 to vector<2x128xf32>
    %976 = arith.subf %975, %749 : vector<2x128xf32>
    %cst_286 = arith.constant 1.250000e+00 : f32
    %977 = vector.broadcast %cst_286 : f32 to vector<2x128xf32>
    %978 = arith.mulf %976, %977 : vector<2x128xf32>
    %979 = arith.mulf %978, %881 : vector<2x128xf32>
    %980 = arith.addf %974, %979 : vector<2x128xf32>
    %cst_287 = arith.constant -6.000000e-01 : f32
    %981 = vector.broadcast %cst_287 : f32 to vector<2x128xf32>
    %982 = arith.subf %749, %981 : vector<2x128xf32>
    %cst_288 = arith.constant 1.250000e+00 : f32
    %983 = vector.broadcast %cst_288 : f32 to vector<2x128xf32>
    %984 = arith.mulf %982, %983 : vector<2x128xf32>
    %985 = arith.mulf %984, %881 : vector<2x128xf32>
    %cst_289 = arith.constant 6.000000e-01 : f32
    %986 = vector.broadcast %cst_289 : f32 to vector<2x128xf32>
    %987 = arith.subf %986, %749 : vector<2x128xf32>
    %cst_290 = arith.constant 1.250000e+00 : f32
    %988 = vector.broadcast %cst_290 : f32 to vector<2x128xf32>
    %989 = arith.mulf %987, %988 : vector<2x128xf32>
    %990 = arith.mulf %989, %892 : vector<2x128xf32>
    %991 = arith.addf %985, %990 : vector<2x128xf32>
    %cst_291 = arith.constant -2.000000e-01 : f32
    %992 = vector.broadcast %cst_291 : f32 to vector<2x128xf32>
    %993 = arith.subf %749, %992 : vector<2x128xf32>
    %cst_292 = arith.constant 1.250000e+00 : f32
    %994 = vector.broadcast %cst_292 : f32 to vector<2x128xf32>
    %995 = arith.mulf %993, %994 : vector<2x128xf32>
    %996 = arith.mulf %995, %892 : vector<2x128xf32>
    %cst_293 = arith.constant 1.000000e+00 : f32
    %997 = vector.broadcast %cst_293 : f32 to vector<2x128xf32>
    %998 = arith.subf %997, %749 : vector<2x128xf32>
    %cst_294 = arith.constant 1.250000e+00 : f32
    %999 = vector.broadcast %cst_294 : f32 to vector<2x128xf32>
    %1000 = arith.mulf %998, %999 : vector<2x128xf32>
    %1001 = arith.mulf %1000, %903 : vector<2x128xf32>
    %1002 = arith.addf %996, %1001 : vector<2x128xf32>
    %cst_295 = arith.constant 2.000000e-01 : f32
    %1003 = vector.broadcast %cst_295 : f32 to vector<2x128xf32>
    %1004 = arith.subf %749, %1003 : vector<2x128xf32>
    %cst_296 = arith.constant 1.250000e+00 : f32
    %1005 = vector.broadcast %cst_296 : f32 to vector<2x128xf32>
    %1006 = arith.mulf %1004, %1005 : vector<2x128xf32>
    %1007 = arith.mulf %1006, %903 : vector<2x128xf32>
    %cst_297 = arith.constant 1.400000e+00 : f32
    %1008 = vector.broadcast %cst_297 : f32 to vector<2x128xf32>
    %1009 = arith.subf %1008, %749 : vector<2x128xf32>
    %cst_298 = arith.constant 1.250000e+00 : f32
    %1010 = vector.broadcast %cst_298 : f32 to vector<2x128xf32>
    %1011 = arith.mulf %1009, %1010 : vector<2x128xf32>
    %1012 = arith.mulf %1011, %914 : vector<2x128xf32>
    %1013 = arith.addf %1007, %1012 : vector<2x128xf32>
    %cst_299 = arith.constant 6.000000e-01 : f32
    %1014 = vector.broadcast %cst_299 : f32 to vector<2x128xf32>
    %1015 = arith.subf %749, %1014 : vector<2x128xf32>
    %cst_300 = arith.constant 1.250000e+00 : f32
    %1016 = vector.broadcast %cst_300 : f32 to vector<2x128xf32>
    %1017 = arith.mulf %1015, %1016 : vector<2x128xf32>
    %1018 = arith.mulf %1017, %914 : vector<2x128xf32>
    %cst_301 = arith.constant 1.800000e+00 : f32
    %1019 = vector.broadcast %cst_301 : f32 to vector<2x128xf32>
    %1020 = arith.subf %1019, %749 : vector<2x128xf32>
    %cst_302 = arith.constant 1.250000e+00 : f32
    %1021 = vector.broadcast %cst_302 : f32 to vector<2x128xf32>
    %1022 = arith.mulf %1020, %1021 : vector<2x128xf32>
    %1023 = arith.mulf %1022, %925 : vector<2x128xf32>
    %1024 = arith.addf %1018, %1023 : vector<2x128xf32>
    %cst_303 = arith.constant 1.000000e+00 : f32
    %1025 = vector.broadcast %cst_303 : f32 to vector<2x128xf32>
    %1026 = arith.subf %749, %1025 : vector<2x128xf32>
    %cst_304 = arith.constant 1.250000e+00 : f32
    %1027 = vector.broadcast %cst_304 : f32 to vector<2x128xf32>
    %1028 = arith.mulf %1026, %1027 : vector<2x128xf32>
    %1029 = arith.mulf %1028, %925 : vector<2x128xf32>
    %cst_305 = arith.constant 2.200000e+00 : f32
    %1030 = vector.broadcast %cst_305 : f32 to vector<2x128xf32>
    %1031 = arith.subf %1030, %749 : vector<2x128xf32>
    %cst_306 = arith.constant 1.250000e+00 : f32
    %1032 = vector.broadcast %cst_306 : f32 to vector<2x128xf32>
    %1033 = arith.mulf %1031, %1032 : vector<2x128xf32>
    %1034 = arith.mulf %1033, %936 : vector<2x128xf32>
    %1035 = arith.addf %1029, %1034 : vector<2x128xf32>
    %cst_307 = arith.constant -2.200000e+00 : f32
    %1036 = vector.broadcast %cst_307 : f32 to vector<2x128xf32>
    %1037 = arith.subf %749, %1036 : vector<2x128xf32>
    %cst_308 = arith.constant 0.833333313 : f32
    %1038 = vector.broadcast %cst_308 : f32 to vector<2x128xf32>
    %1039 = arith.mulf %1037, %1038 : vector<2x128xf32>
    %1040 = arith.mulf %1039, %947 : vector<2x128xf32>
    %cst_309 = arith.constant -6.000000e-01 : f32
    %1041 = vector.broadcast %cst_309 : f32 to vector<2x128xf32>
    %1042 = arith.subf %1041, %749 : vector<2x128xf32>
    %cst_310 = arith.constant 0.833333313 : f32
    %1043 = vector.broadcast %cst_310 : f32 to vector<2x128xf32>
    %1044 = arith.mulf %1042, %1043 : vector<2x128xf32>
    %1045 = arith.mulf %1044, %958 : vector<2x128xf32>
    %1046 = arith.addf %1040, %1045 : vector<2x128xf32>
    %cst_311 = arith.constant -1.800000e+00 : f32
    %1047 = vector.broadcast %cst_311 : f32 to vector<2x128xf32>
    %1048 = arith.subf %749, %1047 : vector<2x128xf32>
    %cst_312 = arith.constant 0.833333313 : f32
    %1049 = vector.broadcast %cst_312 : f32 to vector<2x128xf32>
    %1050 = arith.mulf %1048, %1049 : vector<2x128xf32>
    %1051 = arith.mulf %1050, %958 : vector<2x128xf32>
    %cst_313 = arith.constant -2.000000e-01 : f32
    %1052 = vector.broadcast %cst_313 : f32 to vector<2x128xf32>
    %1053 = arith.subf %1052, %749 : vector<2x128xf32>
    %cst_314 = arith.constant 0.833333313 : f32
    %1054 = vector.broadcast %cst_314 : f32 to vector<2x128xf32>
    %1055 = arith.mulf %1053, %1054 : vector<2x128xf32>
    %1056 = arith.mulf %1055, %969 : vector<2x128xf32>
    %1057 = arith.addf %1051, %1056 : vector<2x128xf32>
    %cst_315 = arith.constant -1.400000e+00 : f32
    %1058 = vector.broadcast %cst_315 : f32 to vector<2x128xf32>
    %1059 = arith.subf %749, %1058 : vector<2x128xf32>
    %cst_316 = arith.constant 0.833333313 : f32
    %1060 = vector.broadcast %cst_316 : f32 to vector<2x128xf32>
    %1061 = arith.mulf %1059, %1060 : vector<2x128xf32>
    %1062 = arith.mulf %1061, %969 : vector<2x128xf32>
    %cst_317 = arith.constant 2.000000e-01 : f32
    %1063 = vector.broadcast %cst_317 : f32 to vector<2x128xf32>
    %1064 = arith.subf %1063, %749 : vector<2x128xf32>
    %cst_318 = arith.constant 0.833333313 : f32
    %1065 = vector.broadcast %cst_318 : f32 to vector<2x128xf32>
    %1066 = arith.mulf %1064, %1065 : vector<2x128xf32>
    %1067 = arith.mulf %1066, %980 : vector<2x128xf32>
    %1068 = arith.addf %1062, %1067 : vector<2x128xf32>
    %cst_319 = arith.constant -1.000000e+00 : f32
    %1069 = vector.broadcast %cst_319 : f32 to vector<2x128xf32>
    %1070 = arith.subf %749, %1069 : vector<2x128xf32>
    %cst_320 = arith.constant 0.833333313 : f32
    %1071 = vector.broadcast %cst_320 : f32 to vector<2x128xf32>
    %1072 = arith.mulf %1070, %1071 : vector<2x128xf32>
    %1073 = arith.mulf %1072, %980 : vector<2x128xf32>
    %cst_321 = arith.constant 6.000000e-01 : f32
    %1074 = vector.broadcast %cst_321 : f32 to vector<2x128xf32>
    %1075 = arith.subf %1074, %749 : vector<2x128xf32>
    %cst_322 = arith.constant 0.833333313 : f32
    %1076 = vector.broadcast %cst_322 : f32 to vector<2x128xf32>
    %1077 = arith.mulf %1075, %1076 : vector<2x128xf32>
    %1078 = arith.mulf %1077, %991 : vector<2x128xf32>
    %1079 = arith.addf %1073, %1078 : vector<2x128xf32>
    %cst_323 = arith.constant -6.000000e-01 : f32
    %1080 = vector.broadcast %cst_323 : f32 to vector<2x128xf32>
    %1081 = arith.subf %749, %1080 : vector<2x128xf32>
    %cst_324 = arith.constant 0.833333313 : f32
    %1082 = vector.broadcast %cst_324 : f32 to vector<2x128xf32>
    %1083 = arith.mulf %1081, %1082 : vector<2x128xf32>
    %1084 = arith.mulf %1083, %991 : vector<2x128xf32>
    %cst_325 = arith.constant 1.000000e+00 : f32
    %1085 = vector.broadcast %cst_325 : f32 to vector<2x128xf32>
    %1086 = arith.subf %1085, %749 : vector<2x128xf32>
    %cst_326 = arith.constant 0.833333313 : f32
    %1087 = vector.broadcast %cst_326 : f32 to vector<2x128xf32>
    %1088 = arith.mulf %1086, %1087 : vector<2x128xf32>
    %1089 = arith.mulf %1088, %1002 : vector<2x128xf32>
    %1090 = arith.addf %1084, %1089 : vector<2x128xf32>
    %cst_327 = arith.constant -2.000000e-01 : f32
    %1091 = vector.broadcast %cst_327 : f32 to vector<2x128xf32>
    %1092 = arith.subf %749, %1091 : vector<2x128xf32>
    %cst_328 = arith.constant 0.833333313 : f32
    %1093 = vector.broadcast %cst_328 : f32 to vector<2x128xf32>
    %1094 = arith.mulf %1092, %1093 : vector<2x128xf32>
    %1095 = arith.mulf %1094, %1002 : vector<2x128xf32>
    %cst_329 = arith.constant 1.400000e+00 : f32
    %1096 = vector.broadcast %cst_329 : f32 to vector<2x128xf32>
    %1097 = arith.subf %1096, %749 : vector<2x128xf32>
    %cst_330 = arith.constant 0.833333313 : f32
    %1098 = vector.broadcast %cst_330 : f32 to vector<2x128xf32>
    %1099 = arith.mulf %1097, %1098 : vector<2x128xf32>
    %1100 = arith.mulf %1099, %1013 : vector<2x128xf32>
    %1101 = arith.addf %1095, %1100 : vector<2x128xf32>
    %cst_331 = arith.constant 2.000000e-01 : f32
    %1102 = vector.broadcast %cst_331 : f32 to vector<2x128xf32>
    %1103 = arith.subf %749, %1102 : vector<2x128xf32>
    %cst_332 = arith.constant 0.833333313 : f32
    %1104 = vector.broadcast %cst_332 : f32 to vector<2x128xf32>
    %1105 = arith.mulf %1103, %1104 : vector<2x128xf32>
    %1106 = arith.mulf %1105, %1013 : vector<2x128xf32>
    %cst_333 = arith.constant 1.800000e+00 : f32
    %1107 = vector.broadcast %cst_333 : f32 to vector<2x128xf32>
    %1108 = arith.subf %1107, %749 : vector<2x128xf32>
    %cst_334 = arith.constant 0.833333313 : f32
    %1109 = vector.broadcast %cst_334 : f32 to vector<2x128xf32>
    %1110 = arith.mulf %1108, %1109 : vector<2x128xf32>
    %1111 = arith.mulf %1110, %1024 : vector<2x128xf32>
    %1112 = arith.addf %1106, %1111 : vector<2x128xf32>
    %cst_335 = arith.constant 6.000000e-01 : f32
    %1113 = vector.broadcast %cst_335 : f32 to vector<2x128xf32>
    %1114 = arith.subf %749, %1113 : vector<2x128xf32>
    %cst_336 = arith.constant 0.833333313 : f32
    %1115 = vector.broadcast %cst_336 : f32 to vector<2x128xf32>
    %1116 = arith.mulf %1114, %1115 : vector<2x128xf32>
    %1117 = arith.mulf %1116, %1024 : vector<2x128xf32>
    %cst_337 = arith.constant 2.200000e+00 : f32
    %1118 = vector.broadcast %cst_337 : f32 to vector<2x128xf32>
    %1119 = arith.subf %1118, %749 : vector<2x128xf32>
    %cst_338 = arith.constant 0.833333313 : f32
    %1120 = vector.broadcast %cst_338 : f32 to vector<2x128xf32>
    %1121 = arith.mulf %1119, %1120 : vector<2x128xf32>
    %1122 = arith.mulf %1121, %1035 : vector<2x128xf32>
    %1123 = arith.addf %1117, %1122 : vector<2x128xf32>
    %1124 = arith.negf %749 : vector<2x128xf32>
    %1125 = math.exp %1124 : vector<2x128xf32>
    %cst_339 = arith.constant 1.000000e+00 : f32
    %1126 = vector.broadcast %cst_339 : f32 to vector<2x128xf32>
    %1127 = arith.addf %1126, %1125 : vector<2x128xf32>
    %1128 = arith.divf %1126, %1127 : vector<2x128xf32>
    %1129 = arith.mulf %749, %1128 : vector<2x128xf32>
    %1130 = tpu.concatenate %1129, %1046, %1057, %1068, %1079, %1090, %1101, %1112, %1123 in 1 : vector<2x128xf32>, vector<2x128xf32>, vector<2x128xf32>, vector<2x128xf32>, vector<2x128xf32>, vector<2x128xf32>, vector<2x128xf32>, vector<2x128xf32>, vector<2x128xf32> -> vector<2x1152xf32>
    %c0_340 = arith.constant 0 : index
    %c0_341 = arith.constant 0 : index
    %1131 = vector.load %arg2[%c0_340, %c0_341] : memref<1152x128xf32, #tpu.memory_space<vmem>>, vector<1152x128xf32>
    %cst_342 = arith.constant dense<0.000000e+00> : vector<2x128xf32>
    %1132 = tpu.matmul %1130, %1131, %cst_342 {dimension_numbers = #tpu.dot_dimension_numbers<[1], [0], [0], [1], [0, 0, 1, 1], [], []>} : vector<2x1152xf32>, vector<1152x128xf32>, vector<2x128xf32> -> vector<2x128xf32>
    %c0_343 = arith.constant 0 : index
    %c0_344 = arith.constant 0 : index
    %1133 = vector.load %arg3[%c0_343, %c0_344] : memref<2x128xf32, #tpu.memory_space<vmem>>, vector<2x128xf32>
    tpu.vector_store %arg3[%c0_343, %c0_344], %1132 {strides = array<i32>} : memref<2x128xf32, #tpu.memory_space<vmem>>, vector<2x128xf32>,
    return
  }
}

</mosaic_0001>

<llo_original>
// kernel: vqvae_pallas.1
$region0: #{vqvae_pallas.1}
  #allocation0 [shape = 'u32[]', space=smem, size = 0x4, offset = 0x4, fixed_abs, tag = 'smem constant byte address 0x4 - core index']
  #allocation1 [shape = 'u32[72,128]{1,0:T(1,128)}', space=vmem, size = 0x9000, scoped, tag = 'internal scratch']
  #allocation2 [shape = 'f32[16,16]{1,0:T(8,128)}', space=vmem, size = 0x2000, scoped, tag = 'scratch operand']
  %s0 = inlined_call_operand.vmem [shape: f32[32,16], index: 0, kind: input, shape index: {}]
  %s1 = inlined_call_operand.vmem [shape: f32[280,128], index: 1, kind: input, shape index: {}]
  %s2 = inlined_call_operand.hbm [shape: f32[1152,128], index: 2, kind: input, shape index: {}]
  %s3 = inlined_call_operand.hbm [shape: f32[2,128], index: 3, kind: output, shape index: {0}]
  %s4 = inlined_call_operand.vmem [shape: f32[2], index: 4, kind: output, shape index: {1}]
  %5 = xla_tuple %s3, %s4
  %s6 = sld [smem:[#allocation0]]
  $region34: #{vqvae_pallas.1} parent=0
    _
  %s8 = ssub.s32 1, %s6
  %s9 = scalar_select 0, %s8, %s6
  $region1: #{vqvae_pallas.1} parent=0
    #allocation3 [shape = 'u8[589824]{0}', space=vmem, size = 0x90000, scoped, tag = 'input window, operand 2, single buffered']
    #allocation4 [shape = 's32[1]{0}', space=sflag, size = 0x4, scoped, tag = 'scoped memory for vqvae_pallas.1']
    #allocation5 [shape = 's32[1]{0}', space=sflag, size = 0x4, scoped, tag = 'scoped memory for vqvae_pallas.1']
    #allocation6 [shape = 's32[1]{0}', space=sflag, size = 0x4, scoped, tag = 'scoped memory for vqvae_pallas.1']
    #allocation7 [shape = 'u8[1024]{0}', space=vmem, size = 0x400, scoped, tag = 'output window, operand 0, single buffered']
    #allocation8 [shape = 'u8[512]{0}', space=smem, size = 0x200, scoped, tag = 'output window, operand 1, single buffered']
    %10 = vsyncpa [#allocation4], 0
    %11 = vsyncpa [#allocation5], 0
    %12 = vsyncpa [#allocation6], 0
    // Predicated region
    $region2: #{vqvae_pallas.1} parent=1 // pred_check
      _
    $region3: #{vqvae_pallas.1} parent=1 // pred_check_branch
      %14 = sbr.rel (0) target = $region5
    $region4: #{vqvae_pallas.1} parent=1 // pred_region
      _
    $region5: #{vqvae_pallas.1} parent=1 // pred_fallthru
      _
    // Predicated region
    $region6: #{vqvae_pallas.1} parent=1 // pred_check
      _
    $region7: #{vqvae_pallas.1} parent=1 // pred_check_branch
      %16 = sbr.rel (0) target = $region9
    $region8: #{vqvae_pallas.1} parent=1 // pred_region
      _
    $region9: #{vqvae_pallas.1} parent=1 // pred_fallthru
      _
    // Predicated region
    $region10: #{vqvae_pallas.1} parent=1 // pred_check
      _
    $region11: #{vqvae_pallas.1} parent=1 // pred_check_branch
      %18 = sbr.rel (0) target = $region13
    $region12: #{vqvae_pallas.1} parent=1 // pred_region
      %20 = vsyncadd [#allocation4], 0
      %s21 = sshll.u32 %s2, 4
      %s22 = int_to_ptr.hbm [resolvable:$true] %s21
      %s23 = sshll.u32 [#allocation3], 4
      %s24 = int_to_ptr.vmem [resolvable:$true] %s23
      %29 = dma.hbm_to_vmem [thread:$0]  %s22, 18432, %s24, [#allocation4], 128, 128, 8
    $region13: #{vqvae_pallas.1} parent=1 // pred_fallthru
      _
    // Predicated region
    $region14: #{vqvae_pallas.1} parent=1 // pred_check
      _
    $region15: #{vqvae_pallas.1} parent=1 // pred_check_branch
      %31 = sbr.rel (0) target = $region17
    $region16: #{vqvae_pallas.1} parent=1 // pred_region
      %33 = dma.done [#allocation4], 18432
    $region17: #{vqvae_pallas.1} parent=1 // pred_fallthru
      _
    %v34 = vld [vmem:[%s1] sm:$0xff]
    %v35 = vld [vmem:[%s1 + $0x8] sm:$0xff]
    %v36 = vld [vmem:[%s0] sm:$0xff]
    %v37 = vld [vmem:[%s0 + $0x8] sm:$0xff]
    %v38 = vld [vmem:[%s0 + $0x10] sm:$0xff]
    %v39 = vld [vmem:[%s0 + $0x18] sm:$0xff]
    %vm40 = vcmask 130048
    %v42 = vsel %vm40, %v36, 0
    %v45 = vsel %vm40, %v37, 0
    %v48 = vsel %vm40, %v38, 0
    %v51 = vsel %vm40, %v39, 0
    %53 = vmatpush.msra.mxu0 0.0
    %54 = vmatpush.msra.mxu0 0.0
    %55 = vmatpush.msra.mxu0 0.0
    %56 = vmatpush.msra.mxu0 0.0
    %57 = vmatpush.msra.mxu0 0.0
    %58 = vmatpush.msra.mxu0 0.0
    %59 = vmatpush.msra.mxu0 0.0
    %60 = vmatpush.msra.mxu0 0.0
    %61 = vmatpush.msra.mxu0 0.0
    %62 = vmatpush.msra.mxu0 0.0
    %63 = vmatpush.msra.mxu0 0.0
    %64 = vmatpush.msra.mxu0 0.0
    %65 = vmatpush.msra.mxu0 0.0
    %66 = vmatpush.msra.mxu0 0.0
    %67 = vmatpush.msra.mxu0 %v35
    %68 = vmatpush.msra.mxu0 %v34
    %69 = vmatmul.f32.gmra.mxu0 %v42
    %v70 = vpop.f32.mrf.mxu0
    %v71 = vadd.f32 0.0, %v70
    %72 = vmatmul.f32.gmra.mxu0 %v45
    %v73 = vpop.f32.mrf.mxu0
    %v74 = vadd.f32 0.0, %v73
    %75 = vmatmul.f32.gmra.mxu0 %v48
    %v76 = vpop.f32.mrf.mxu0
    %v77 = vadd.f32 0.0, %v76
    %78 = vmatmul.f32.gmra.mxu0 %v51
    %v79 = vpop.f32.mrf.mxu0
    %v80 = vadd.f32 0.0, %v79
    %81 = vdwg.mxu0
    %v82 = vmax.f32 %v71, %v77
    %v83 = vmax.f32 %v74, %v80
    %v84 = vmax.f32 %v82, 0.0
    %v85 = vmax.f32 %v83, 0.0
    %v86 = vld [vmem:[%s1 + $0x30] sm:$0xff]
    %v87 = vld [vmem:[%s1 + $0x38] sm:$0x1]
    %vm88 = vcmask 64512
    %v90 = vsel %vm88, %v84, 0
    %v93 = vsel %vm88, %v85, 0
    %95 = vmatpush.msra.mxu0 0.0
    %96 = vmatpush.msra.mxu0 0.0
    %97 = vmatpush.msra.mxu0 0.0
    %98 = vmatpush.msra.mxu0 0.0
    %99 = vmatpush.msra.mxu0 0.0
    %100 = vmatpush.msra.mxu0 0.0
    %101 = vmatpush.msra.mxu0 0.0
    %102 = vmatpush.msra.mxu0 0.0
    %103 = vmatpush.msra.mxu0 0.0
    %104 = vmatpush.msra.mxu0 0.0
    %105 = vmatpush.msra.mxu0 0.0
    %106 = vmatpush.msra.mxu0 0.0
    %107 = vmatpush.msra.mxu0 0.0
    %108 = vmatpush.msra.mxu0 0.0
    %109 = vmatpush.msra.mxu0 0.0
    %110 = vmatpush.msra.mxu0 %v86
    %111 = vmatmul.f32.gmra.mxu0 %v90
    %v112 = vpop.f32.mrf.mxu0
    %v113 = vadd.f32 0.0, %v112
    %114 = vmatmul.f32.gmra.mxu0 %v93
    %v115 = vpop.f32.mrf.mxu0
    %v116 = vadd.f32 0.0, %v115
    %117 = vdwg.mxu0
    %v118 = vmul.f32 %v113, 2.0
    %v119 = vmul.f32 %v116, 2.0
    %v120 = vperm.slane %v87, 0
    %v121 = vsub.f32 %v120, %v118
    %v122 = vsub.f32 %v120, %v119
    %vm123 = vcmask 261120
    %v124 = vsel %vm123, %v121, inf
    %125 = vmin.xlane.f32.xlu0 %v124
    %v126 = vpop.xlane.xlu0 %125
    %v127 = vsel %vm123, %v122, inf
    %128 = vmin.xlane.f32.xlu0 %v127
    %v129 = vpop.xlane.xlu0 %128
    %v130 = vlaneseq
    %v131 = vand.u32 %v130, 127
    %vm132 = vcmp.le.f32.partialorder %v121, %v126
    %vm133 = vcmp.le.f32.partialorder %v122, %v129
    %v134 = vsel %vm132, %v131, 32
    %v135 = vsel %vm133, %v131, 32
    %v136 = vsel %vm123, %v134, 2147483647
    %v137 = vand.u32 %v136, 65535
    %v138 = vshra.s32 %v136, 16
    %v139 = vcvt.s32.f32 %v137
    %v140 = vcvt.s32.f32 %v138
    %141 = vmin.xlane.f32.xlu0 %v140
    %v142 = vpop.xlane.xlu0 %141
    %vm143 = vcmp.eq.f32.partialorder %v140, %v142
    %v144 = vsel %vm143, %v139, inf
    %145 = vmin.xlane.f32.xlu0 %v144
    %v146 = vpop.xlane.xlu0 %145
    %v147 = vcvt.f32.s32 %v146
    %v148 = vcvt.f32.s32 %v142
    %v149 = vshll.u32 %v148, 16
    %v150 = vadd.s32 %v149, %v147
    %v151 = vsel %vm123, %v135, 2147483647
    %v152 = vand.u32 %v151, 65535
    %v153 = vshra.s32 %v151, 16
    %v154 = vcvt.s32.f32 %v152
    %v155 = vcvt.s32.f32 %v153
    %156 = vmin.xlane.f32.xlu0 %v155
    %v157 = vpop.xlane.xlu0 %156
    %vm158 = vcmp.eq.f32.partialorder %v155, %v157
    %v159 = vsel %vm158, %v154, inf
    %160 = vmin.xlane.f32.xlu0 %v159
    %v161 = vpop.xlane.xlu0 %160
    %v162 = vcvt.f32.s32 %v161
    %v163 = vcvt.f32.s32 %v157
    %v164 = vshll.u32 %v163, 16
    %v165 = vadd.s32 %v164, %v162
    %vm166 = vcmp.eq.s32.totalorder %v131, %v150
    %vm167 = vcmp.eq.s32.totalorder %v131, %v165
    %v168 = vsel %vm166, 1, 0
    %v169 = vsel %vm167, 1, 0
    %v170 = vcvt.s32.f32 %v168
    %v171 = vcvt.s32.f32 %v169
    %v172 = vld [vmem:[%s1 + $0x10] sm:$0xff]
    %v173 = vld [vmem:[%s1 + $0x18] sm:$0xff]
    %v174 = vld [vmem:[%s1 + $0x20] sm:$0xff]
    %v175 = vld [vmem:[%s1 + $0x28] sm:$0xff]
    %v177 = vsel %vm123, %v170, 0
    %v180 = vsel %vm123, %v171, 0
    %182 = vmatpush.msra.mxu0 0.0
    %183 = vmatpush.msra.mxu0 0.0
    %184 = vmatpush.msra.mxu0 0.0
    %185 = vmatpush.msra.mxu0 0.0
    %186 = vmatpush.msra.mxu0 0.0
    %187 = vmatpush.msra.mxu0 0.0
    %188 = vmatpush.msra.mxu0 0.0
    %189 = vmatpush.msra.mxu0 0.0
    %190 = vmatpush.msra.mxu0 0.0
    %191 = vmatpush.msra.mxu0 0.0
    %192 = vmatpush.msra.mxu0 0.0
    %193 = vmatpush.msra.mxu0 0.0
    %194 = vmatpush.msra.mxu0 %v175
    %195 = vmatpush.msra.mxu0 %v174
    %196 = vmatpush.msra.mxu0 %v173
    %197 = vmatpush.msra.mxu0 %v172
    %198 = vmatmul.f32.gmra.mxu0 %v177
    %v199 = vpop.f32.mrf.mxu0
    %v200 = vadd.f32 0.0, %v199
    %201 = vmatmul.f32.gmra.mxu0 %v180
    %v202 = vpop.f32.mrf.mxu0
    %v203 = vadd.f32 0.0, %v202
    %204 = vdwg.mxu0
    %v205 = vsub.f32 %v200, %v84
    %v206 = vsub.f32 %v203, %v85
    %v207 = vmul.f32 %v205, %v205
    %v208 = vmul.f32 %v206, %v206
    %v209 = vsel %vm88, %v207, 0.0
    %v210 = vsel %vm88, %v208, 0.0
    %v211 = vadd.f32 %v209, %v210
    %212 = vadd.xlane.f32.xlu0 %v211
    %v213 = vpop.xlane.xlu0 %212
    %v214 = vrot.slane %v213, 4
    %v215 = vadd.f32 %v213, %v214
    %v216 = vrot.slane %v215, 2
    %v217 = vadd.f32 %v215, %v216
    %v218 = vrot.slane %v217, 1
    %v219 = vadd.f32 %v217, %v218
    %s220 = vtos %v219
    %v221 = vrcp.pop 128.0
    %v222 = vmul.f32 128.0, %v221
    %v223 = vsub.f32 1.0, %v222
    %v224 = vmul.f32 %v221, %v223
    %v225 = vadd.f32 %v221, %v224
    %vm226 = vweird.f32 %v221
    %v227 = vsel %vm226, %v221, %v225
    %s228 = vtos %v227
    %s229 = smul.f32 %s220, %s228
    %s230 = smul.f32 %s229, 1.25
    %s231 = scalar_lea.smem [#allocation8], 0
    %232 = sst [smem:[%s231]] %s230
    %v233 = vsel %vm123, %v170, 0.0
    %v234 = vsel %vm123, %v171, 0.0
    %v235 = vadd.f32 %v233, %v234
    %v236 = vrot.slane %v235, 4
    %v237 = vadd.f32 %v235, %v236
    %v238 = vrot.slane %v237, 2
    %v239 = vadd.f32 %v237, %v238
    %v240 = vrot.slane %v239, 1
    %v241 = vadd.f32 %v239, %v240
    %v242 = vrcp.pop 16.0
    %v243 = vmul.f32 16.0, %v242
    %v244 = vsub.f32 1.0, %v243
    %v245 = vmul.f32 %v242, %v244
    %v246 = vadd.f32 %v242, %v245
    %vm247 = vweird.f32 %v242
    %v248 = vsel %vm247, %v242, %v246
    %v249 = vmul.f32 %v241, %v248
    %v250 = vadd.f32 %v249, 1e-10
    %v251 = vlog2.pop %v250
    %v252 = vmul.f32 %v251, 0.6931472
    %v253 = vmul.f32 %v249, %v252
    %vm254 = vcmask 253952
    %v255 = vsel %vm254, %v253, 0.0
    %256 = vadd.xlane.f32.xlu0 %v255
    %v257 = vpop.xlane.xlu0 %256
    %v258 = vrot.slane %v257, 4
    %v259 = vadd.f32 %v257, %v258
    %v260 = vrot.slane %v259, 2
    %v261 = vadd.f32 %v259, %v260
    %v262 = vrot.slane %v261, 1
    %v263 = vadd.f32 %v261, %v262
    %s264 = vtos %v263
    %s265 = ssub.f32 0.0, %s264
    %v266 = vstv %s265
    %v267 = vmul.f32 %v266, 1.442695
    %v268 = vpow.pop %v267
    %s269 = vtos %v268
    %s270 = scalar_lea.smem [#allocation8], 1
    %271 = sst [smem:[%s270]] %s269
    %v272 = vld [vmem:[%s1 + $0x40] sm:$0xff]
    %v273 = vld [vmem:[%s1 + $0x48] sm:$0xff]
    %v274 = vld [vmem:[%s1 + $0x50] sm:$0xff]
    %v275 = vld [vmem:[%s1 + $0x58] sm:$0x1]
    %v276 = vld [vmem:[%s1 + $0x60] sm:$0xff]
    %v277 = vld [vmem:[%s1 + $0x68] sm:$0xff]
    %v278 = vld [vmem:[%s1 + $0x70] sm:$0xff]
    %v279 = vld [vmem:[%s1 + $0x78] sm:$0xff]
    %v280 = vld [vmem:[%s1 + $0x80] sm:$0x1]
    %v281 = vperm.slane %v275, 0
    %v283 = vsel %vm88, %v200, 0
    %v286 = vsel %vm88, %v203, 0
    %288 = vmatpush.msra.mxu0 0.0
    %289 = vmatpush.msra.mxu0 0.0
    %290 = vmatpush.msra.mxu0 0.0
    %291 = vmatpush.msra.mxu0 0.0
    %292 = vmatpush.msra.mxu0 0.0
    %293 = vmatpush.msra.mxu0 0.0
    %294 = vmatpush.msra.mxu0 0.0
    %295 = vmatpush.msra.mxu0 0.0
    %296 = vmatpush.msra.mxu0 0.0
    %297 = vmatpush.msra.mxu0 0.0
    %298 = vmatpush.msra.mxu0 0.0
    %299 = vmatpush.msra.mxu0 0.0
    %300 = vmatpush.msra.mxu0 0.0
    %301 = vmatpush.msra.mxu0 0.0
    %302 = vmatpush.msra.mxu0 0.0
    %303 = vmatpush.msra.mxu0 %v272
    %304 = vmatmul.f32.gmra.mxu0 %v283
    %v305 = vpop.f32.mrf.mxu0
    %v306 = vadd.f32 %v281, %v305
    %307 = vmatmul.f32.gmra.mxu0 %v286
    %v308 = vpop.f32.mrf.mxu0
    %v309 = vadd.f32 %v281, %v308
    %310 = vdwg.mxu0
    %v312 = vsel %vm40, 0.0, 0
    %314 = vmatpush.msra.mxu0 0.0
    %315 = vmatpush.msra.mxu0 0.0
    %316 = vmatpush.msra.mxu0 0.0
    %317 = vmatpush.msra.mxu0 0.0
    %318 = vmatpush.msra.mxu0 0.0
    %319 = vmatpush.msra.mxu0 0.0
    %320 = vmatpush.msra.mxu0 0.0
    %321 = vmatpush.msra.mxu0 0.0
    %322 = vmatpush.msra.mxu0 0.0
    %323 = vmatpush.msra.mxu0 0.0
    %324 = vmatpush.msra.mxu0 0.0
    %325 = vmatpush.msra.mxu0 0.0
    %326 = vmatpush.msra.mxu0 0.0
    %327 = vmatpush.msra.mxu0 0.0
    %328 = vmatpush.msra.mxu0 %v274
    %329 = vmatpush.msra.mxu0 %v273
    %330 = vmatmul.f32.gmra.mxu0 %v312
    %v331 = vpop.f32.mrf.mxu0
    %v332 = vadd.f32 0.0, %v331
    %333 = vdwg.mxu0
    %v334 = vadd.f32 %v306, %v332
    %v335 = vxor.u32 %v334, 2147483648
    %v336 = vmul.f32 %v335, 1.442695
    %v337 = vpow.pop %v336
    %v338 = vadd.f32 %v337, 1.0
    %v339 = vrcp.pop %v338
    %v340 = vmul.f32 %v338, %v339
    %v341 = vsub.f32 1.0, %v340
    %v342 = vmul.f32 %v339, %v341
    %v343 = vadd.f32 %v339, %v342
    %vm344 = vweird.f32 %v338
    %vm345 = vweird.f32 %v339
    %vm346 = vmor %vm344, %vm345
    %v347 = vsel %vm346, %v339, %v343
    %v348 = vand.u32 2147483647, %v338
    %vm349 = vcmp.eq.f32.partialorder %v348, 8.507059e+37
    %v350 = vand.u32 %v338, 2147483648
    %v351 = vor.u32 1.1754944e-38, %v350
    %v352 = vsel %vm349, %v351, %v347
    %v353 = vmul.f32 1.0, %v352
    %v354 = vtanh.pop %v334
    %v355 = vmul.f32 %v353, 0.0
    %357 = vrot.lane.b32.xlu0 %v354, 96
    %v358 = vpop.permute.xlu0 %357
    %v360 = vmul.f32 %v353, %v358
    %362 = vrot.lane.b32.xlu0 %v360, 16
    %v363 = vpop.permute.xlu0 %362
    %v365 = vadd.f32 %v355, %v363
    %v366 = vtanh.pop %v365
    %368 = vrot.lane.b32.xlu0 %v366, 32
    %v369 = vpop.permute.xlu0 %368
    %v371 = vmul.f32 %v353, %v369
    %373 = vrot.lane.b32.xlu0 %v371, 80
    %v374 = vpop.permute.xlu0 %373
    %vm376 = vcmask 123904
    %377 = vst.msk [vmem:[#allocation2] sm:$0x3] %vm376, %v374
    %v378 = vsel %vm40, %v374, 0
    %380 = vmatpush.msra.mxu0 0.0
    %381 = vmatpush.msra.mxu0 0.0
    %382 = vmatpush.msra.mxu0 0.0
    %383 = vmatpush.msra.mxu0 0.0
    %384 = vmatpush.msra.mxu0 0.0
    %385 = vmatpush.msra.mxu0 0.0
    %386 = vmatpush.msra.mxu0 0.0
    %387 = vmatpush.msra.mxu0 0.0
    %388 = vmatpush.msra.mxu0 0.0
    %389 = vmatpush.msra.mxu0 0.0
    %390 = vmatpush.msra.mxu0 0.0
    %391 = vmatpush.msra.mxu0 0.0
    %392 = vmatpush.msra.mxu0 0.0
    %393 = vmatpush.msra.mxu0 0.0
    %394 = vmatpush.msra.mxu0 %v274
    %395 = vmatpush.msra.mxu0 %v273
    %396 = vmatmul.f32.gmra.mxu0 %v378
    %v397 = vpop.f32.mrf.mxu0
    %v398 = vadd.f32 0.0, %v397
    %399 = vdwg.mxu0
    %v401 = vrot.slane %v398, 6
    %v403 = vadd.f32 %v306, %v401
    %v404 = vxor.u32 %v403, 2147483648
    %v405 = vmul.f32 %v404, 1.442695
    %v406 = vpow.pop %v405
    %v407 = vadd.f32 %v406, 1.0
    %v408 = vrcp.pop %v407
    %v409 = vmul.f32 %v407, %v408
    %v410 = vsub.f32 1.0, %v409
    %v411 = vmul.f32 %v408, %v410
    %v412 = vadd.f32 %v408, %v411
    %vm413 = vweird.f32 %v407
    %vm414 = vweird.f32 %v408
    %vm415 = vmor %vm413, %vm414
    %v416 = vsel %vm415, %v408, %v412
    %v417 = vand.u32 2147483647, %v407
    %vm418 = vcmp.eq.f32.partialorder %v417, 8.507059e+37
    %v419 = vand.u32 %v407, 2147483648
    %v420 = vor.u32 1.1754944e-38, %v419
    %v421 = vsel %vm418, %v420, %v416
    %v422 = vmul.f32 1.0, %v421
    %v423 = vtanh.pop %v403
    %v425 = vrot.slane %v365, 6
    %v427 = vmul.f32 %v422, %v425
    %429 = vrot.lane.b32.xlu0 %v423, 96
    %v430 = vpop.permute.xlu0 %429
    %v432 = vmul.f32 %v422, %v430
    %434 = vrot.lane.b32.xlu0 %v432, 16
    %v435 = vpop.permute.xlu0 %434
    %v437 = vadd.f32 %v427, %v435
    %v438 = vtanh.pop %v437
    %440 = vrot.lane.b32.xlu0 %v438, 32
    %v441 = vpop.permute.xlu0 %440
    %v443 = vmul.f32 %v422, %v441
    %445 = vrot.lane.b32.xlu0 %v443, 80
    %v446 = vpop.permute.xlu0 %445
    %vm448 = vcmask 125954
    %449 = vst.msk [vmem:[#allocation2] sm:$0xc] %vm448, %v446
    %v450 = vrot.slane %v443, 2
    %451 = vrot.lane.b32.xlu0 %v450, 80
    %v452 = vpop.permute.xlu0 %451
    %v453 = vsel %vm40, %v452, 0
    %455 = vmatpush.msra.mxu0 0.0
    %456 = vmatpush.msra.mxu0 0.0
    %457 = vmatpush.msra.mxu0 0.0
    %458 = vmatpush.msra.mxu0 0.0
    %459 = vmatpush.msra.mxu0 0.0
    %460 = vmatpush.msra.mxu0 0.0
    %461 = vmatpush.msra.mxu0 0.0
    %462 = vmatpush.msra.mxu0 0.0
    %463 = vmatpush.msra.mxu0 0.0
    %464 = vmatpush.msra.mxu0 0.0
    %465 = vmatpush.msra.mxu0 0.0
    %466 = vmatpush.msra.mxu0 0.0
    %467 = vmatpush.msra.mxu0 0.0
    %468 = vmatpush.msra.mxu0 0.0
    %469 = vmatpush.msra.mxu0 %v274
    %470 = vmatpush.msra.mxu0 %v273
    %471 = vmatmul.f32.gmra.mxu0 %v453
    %v472 = vpop.f32.mrf.mxu0
    %v473 = vadd.f32 0.0, %v472
    %474 = vdwg.mxu0
    %v476 = vrot.slane %v473, 4
    %v478 = vadd.f32 %v306, %v476
    %v479 = vxor.u32 %v478, 2147483648
    %v480 = vmul.f32 %v479, 1.442695
    %v481 = vpow.pop %v480
    %v482 = vadd.f32 %v481, 1.0
    %v483 = vrcp.pop %v482
    %v484 = vmul.f32 %v482, %v483
    %v485 = vsub.f32 1.0, %v484
    %v486 = vmul.f32 %v483, %v485
    %v487 = vadd.f32 %v483, %v486
    %vm488 = vweird.f32 %v482
    %vm489 = vweird.f32 %v483
    %vm490 = vmor %vm488, %vm489
    %v491 = vsel %vm490, %v483, %v487
    %v492 = vand.u32 2147483647, %v482
    %vm493 = vcmp.eq.f32.partialorder %v492, 8.507059e+37
    %v494 = vand.u32 %v482, 2147483648
    %v495 = vor.u32 1.1754944e-38, %v494
    %v496 = vsel %vm493, %v495, %v491
    %v497 = vmul.f32 1.0, %v496
    %v498 = vtanh.pop %v478
    %v500 = vrot.slane %v437, 6
    %v502 = vmul.f32 %v497, %v500
    %504 = vrot.lane.b32.xlu0 %v498, 96
    %v505 = vpop.permute.xlu0 %504
    %v507 = vmul.f32 %v497, %v505
    %509 = vrot.lane.b32.xlu0 %v507, 16
    %v510 = vpop.permute.xlu0 %509
    %v512 = vadd.f32 %v502, %v510
    %v513 = vtanh.pop %v512
    %515 = vrot.lane.b32.xlu0 %v513, 32
    %v516 = vpop.permute.xlu0 %515
    %v518 = vmul.f32 %v497, %v516
    %520 = vrot.lane.b32.xlu0 %v518, 80
    %v521 = vpop.permute.xlu0 %520
    %vm523 = vcmask 128004
    %524 = vst.msk [vmem:[#allocation2] sm:$0x30] %vm523, %v521
    %v525 = vrot.slane %v518, 4
    %526 = vrot.lane.b32.xlu0 %v525, 80
    %v527 = vpop.permute.xlu0 %526
    %v528 = vsel %vm40, %v527, 0
    %530 = vmatpush.msra.mxu0 0.0
    %531 = vmatpush.msra.mxu0 0.0
    %532 = vmatpush.msra.mxu0 0.0
    %533 = vmatpush.msra.mxu0 0.0
    %534 = vmatpush.msra.mxu0 0.0
    %535 = vmatpush.msra.mxu0 0.0
    %536 = vmatpush.msra.mxu0 0.0
    %537 = vmatpush.msra.mxu0 0.0
    %538 = vmatpush.msra.mxu0 0.0
    %539 = vmatpush.msra.mxu0 0.0
    %540 = vmatpush.msra.mxu0 0.0
    %541 = vmatpush.msra.mxu0 0.0
    %542 = vmatpush.msra.mxu0 0.0
    %543 = vmatpush.msra.mxu0 0.0
    %544 = vmatpush.msra.mxu0 %v274
    %545 = vmatpush.msra.mxu0 %v273
    %546 = vmatmul.f32.gmra.mxu0 %v528
    %v547 = vpop.f32.mrf.mxu0
    %v548 = vadd.f32 0.0, %v547
    %549 = vdwg.mxu0
    %v551 = vrot.slane %v548, 2
    %v553 = vadd.f32 %v306, %v551
    %v554 = vxor.u32 %v553, 2147483648
    %v555 = vmul.f32 %v554, 1.442695
    %v556 = vpow.pop %v555
    %v557 = vadd.f32 %v556, 1.0
    %v558 = vrcp.pop %v557
    %v559 = vmul.f32 %v557, %v558
    %v560 = vsub.f32 1.0, %v559
    %v561 = vmul.f32 %v558, %v560
    %v562 = vadd.f32 %v558, %v561
    %vm563 = vweird.f32 %v557
    %vm564 = vweird.f32 %v558
    %vm565 = vmor %vm563, %vm564
    %v566 = vsel %vm565, %v558, %v562
    %v567 = vand.u32 2147483647, %v557
    %vm568 = vcmp.eq.f32.partialorder %v567, 8.507059e+37
    %v569 = vand.u32 %v557, 2147483648
    %v570 = vor.u32 1.1754944e-38, %v569
    %v571 = vsel %vm568, %v570, %v566
    %v572 = vmul.f32 1.0, %v571
    %v573 = vtanh.pop %v553
    %v575 = vrot.slane %v512, 6
    %v577 = vmul.f32 %v572, %v575
    %579 = vrot.lane.b32.xlu0 %v573, 96
    %v580 = vpop.permute.xlu0 %579
    %v582 = vmul.f32 %v572, %v580
    %584 = vrot.lane.b32.xlu0 %v582, 16
    %v585 = vpop.permute.xlu0 %584
    %v587 = vadd.f32 %v577, %v585
    %v588 = vtanh.pop %v587
    %590 = vrot.lane.b32.xlu0 %v588, 32
    %v591 = vpop.permute.xlu0 %590
    %v593 = vmul.f32 %v572, %v591
    %595 = vrot.lane.b32.xlu0 %v593, 80
    %v596 = vpop.permute.xlu0 %595
    %vm598 = vcmask 130054
    %599 = vst.msk [vmem:[#allocation2] sm:$0xc0] %vm598, %v596
    %v600 = vrot.slane %v593, 6
    %601 = vrot.lane.b32.xlu0 %v600, 80
    %v602 = vpop.permute.xlu0 %601
    %v603 = vsel %vm40, %v602, 0
    %605 = vmatpush.msra.mxu0 0.0
    %606 = vmatpush.msra.mxu0 0.0
    %607 = vmatpush.msra.mxu0 0.0
    %608 = vmatpush.msra.mxu0 0.0
    %609 = vmatpush.msra.mxu0 0.0
    %610 = vmatpush.msra.mxu0 0.0
    %611 = vmatpush.msra.mxu0 0.0
    %612 = vmatpush.msra.mxu0 0.0
    %613 = vmatpush.msra.mxu0 0.0
    %614 = vmatpush.msra.mxu0 0.0
    %615 = vmatpush.msra.mxu0 0.0
    %616 = vmatpush.msra.mxu0 0.0
    %617 = vmatpush.msra.mxu0 0.0
    %618 = vmatpush.msra.mxu0 0.0
    %619 = vmatpush.msra.mxu0 %v274
    %620 = vmatpush.msra.mxu0 %v273
    %621 = vmatmul.f32.gmra.mxu0 %v603
    %v622 = vpop.f32.mrf.mxu0
    %v623 = vadd.f32 0.0, %v622
    %624 = vdwg.mxu0
    %v625 = vadd.f32 %v309, %v623
    %v626 = vxor.u32 %v625, 2147483648
    %v627 = vmul.f32 %v626, 1.442695
    %v628 = vpow.pop %v627
    %v629 = vadd.f32 %v628, 1.0
    %v630 = vrcp.pop %v629
    %v631 = vmul.f32 %v629, %v630
    %v632 = vsub.f32 1.0, %v631
    %v633 = vmul.f32 %v630, %v632
    %v634 = vadd.f32 %v630, %v633
    %vm635 = vweird.f32 %v629
    %vm636 = vweird.f32 %v630
    %vm637 = vmor %vm635, %vm636
    %v638 = vsel %vm637, %v630, %v634
    %v639 = vand.u32 2147483647, %v629
    %vm640 = vcmp.eq.f32.partialorder %v639, 8.507059e+37
    %v641 = vand.u32 %v629, 2147483648
    %v642 = vor.u32 1.1754944e-38, %v641
    %v643 = vsel %vm640, %v642, %v638
    %v644 = vmul.f32 1.0, %v643
    %v645 = vtanh.pop %v625
    %v647 = vrot.slane %v587, 6
    %v649 = vmul.f32 %v644, %v647
    %651 = vrot.lane.b32.xlu0 %v645, 96
    %v652 = vpop.permute.xlu0 %651
    %v654 = vmul.f32 %v644, %v652
    %656 = vrot.lane.b32.xlu0 %v654, 16
    %v657 = vpop.permute.xlu0 %656
    %v659 = vadd.f32 %v649, %v657
    %v660 = vtanh.pop %v659
    %662 = vrot.lane.b32.xlu0 %v660, 32
    %v663 = vpop.permute.xlu0 %662
    %v665 = vmul.f32 %v644, %v663
    %667 = vrot.lane.b32.xlu0 %v665, 80
    %v668 = vpop.permute.xlu0 %667
    %670 = vst.msk [vmem:[#allocation2 + $0x8] sm:$0x3] %vm376, %v668
    %v671 = vsel %vm40, %v668, 0
    %673 = vmatpush.msra.mxu0 0.0
    %674 = vmatpush.msra.mxu0 0.0
    %675 = vmatpush.msra.mxu0 0.0
    %676 = vmatpush.msra.mxu0 0.0
    %677 = vmatpush.msra.mxu0 0.0
    %678 = vmatpush.msra.mxu0 0.0
    %679 = vmatpush.msra.mxu0 0.0
    %680 = vmatpush.msra.mxu0 0.0
    %681 = vmatpush.msra.mxu0 0.0
    %682 = vmatpush.msra.mxu0 0.0
    %683 = vmatpush.msra.mxu0 0.0
    %684 = vmatpush.msra.mxu0 0.0
    %685 = vmatpush.msra.mxu0 0.0
    %686 = vmatpush.msra.mxu0 0.0
    %687 = vmatpush.msra.mxu0 %v274
    %688 = vmatpush.msra.mxu0 %v273
    %689 = vmatmul.f32.gmra.mxu0 %v671
    %v690 = vpop.f32.mrf.mxu0
    %v691 = vadd.f32 0.0, %v690
    %692 = vdwg.mxu0
    %v694 = vrot.slane %v691, 6
    %v696 = vadd.f32 %v309, %v694
    %v697 = vxor.u32 %v696, 2147483648
    %v698 = vmul.f32 %v697, 1.442695
    %v699 = vpow.pop %v698
    %v700 = vadd.f32 %v699, 1.0
    %v701 = vrcp.pop %v700
    %v702 = vmul.f32 %v700, %v701
    %v703 = vsub.f32 1.0, %v702
    %v704 = vmul.f32 %v701, %v703
    %v705 = vadd.f32 %v701, %v704
    %vm706 = vweird.f32 %v700
    %vm707 = vweird.f32 %v701
    %vm708 = vmor %vm706, %vm707
    %v709 = vsel %vm708, %v701, %v705
    %v710 = vand.u32 2147483647, %v700
    %vm711 = vcmp.eq.f32.partialorder %v710, 8.507059e+37
    %v712 = vand.u32 %v700, 2147483648
    %v713 = vor.u32 1.1754944e-38, %v712
    %v714 = vsel %vm711, %v713, %v709
    %v715 = vmul.f32 1.0, %v714
    %v716 = vtanh.pop %v696
    %v718 = vrot.slane %v659, 6
    %v720 = vmul.f32 %v715, %v718
    %722 = vrot.lane.b32.xlu0 %v716, 96
    %v723 = vpop.permute.xlu0 %722
    %v725 = vmul.f32 %v715, %v723
    %727 = vrot.lane.b32.xlu0 %v725, 16
    %v728 = vpop.permute.xlu0 %727
    %v730 = vadd.f32 %v720, %v728
    %v731 = vtanh.pop %v730
    %733 = vrot.lane.b32.xlu0 %v731, 32
    %v734 = vpop.permute.xlu0 %733
    %v736 = vmul.f32 %v715, %v734
    %738 = vrot.lane.b32.xlu0 %v736, 80
    %v739 = vpop.permute.xlu0 %738
    %741 = vst.msk [vmem:[#allocation2 + $0x8] sm:$0xc] %vm448, %v739
    %v742 = vrot.slane %v736, 2
    %743 = vrot.lane.b32.xlu0 %v742, 80
    %v744 = vpop.permute.xlu0 %743
    %v745 = vsel %vm40, %v744, 0
    %747 = vmatpush.msra.mxu0 0.0
    %748 = vmatpush.msra.mxu0 0.0
    %749 = vmatpush.msra.mxu0 0.0
    %750 = vmatpush.msra.mxu0 0.0
    %751 = vmatpush.msra.mxu0 0.0
    %752 = vmatpush.msra.mxu0 0.0
    %753 = vmatpush.msra.mxu0 0.0
    %754 = vmatpush.msra.mxu0 0.0
    %755 = vmatpush.msra.mxu0 0.0
    %756 = vmatpush.msra.mxu0 0.0
    %757 = vmatpush.msra.mxu0 0.0
    %758 = vmatpush.msra.mxu0 0.0
    %759 = vmatpush.msra.mxu0 0.0
    %760 = vmatpush.msra.mxu0 0.0
    %761 = vmatpush.msra.mxu0 %v274
    %762 = vmatpush.msra.mxu0 %v273
    %763 = vmatmul.f32.gmra.mxu0 %v745
    %v764 = vpop.f32.mrf.mxu0
    %v765 = vadd.f32 0.0, %v764
    %766 = vdwg.mxu0
    %v768 = vrot.slane %v765, 4
    %v770 = vadd.f32 %v309, %v768
    %v771 = vxor.u32 %v770, 2147483648
    %v772 = vmul.f32 %v771, 1.442695
    %v773 = vpow.pop %v772
    %v774 = vadd.f32 %v773, 1.0
    %v775 = vrcp.pop %v774
    %v776 = vmul.f32 %v774, %v775
    %v777 = vsub.f32 1.0, %v776
    %v778 = vmul.f32 %v775, %v777
    %v779 = vadd.f32 %v775, %v778
    %vm780 = vweird.f32 %v774
    %vm781 = vweird.f32 %v775
    %vm782 = vmor %vm780, %vm781
    %v783 = vsel %vm782, %v775, %v779
    %v784 = vand.u32 2147483647, %v774
    %vm785 = vcmp.eq.f32.partialorder %v784, 8.507059e+37
    %v786 = vand.u32 %v774, 2147483648
    %v787 = vor.u32 1.1754944e-38, %v786
    %v788 = vsel %vm785, %v787, %v783
    %v789 = vmul.f32 1.0, %v788
    %v790 = vtanh.pop %v770
    %v792 = vrot.slane %v730, 6
    %v794 = vmul.f32 %v789, %v792
    %796 = vrot.lane.b32.xlu0 %v790, 96
    %v797 = vpop.permute.xlu0 %796
    %v799 = vmul.f32 %v789, %v797
    %801 = vrot.lane.b32.xlu0 %v799, 16
    %v802 = vpop.permute.xlu0 %801
    %v804 = vadd.f32 %v794, %v802
    %v805 = vtanh.pop %v804
    %807 = vrot.lane.b32.xlu0 %v805, 32
    %v808 = vpop.permute.xlu0 %807
    %v810 = vmul.f32 %v789, %v808
    %812 = vrot.lane.b32.xlu0 %v810, 80
    %v813 = vpop.permute.xlu0 %812
    %815 = vst.msk [vmem:[#allocation2 + $0x8] sm:$0x30] %vm523, %v813
    %v816 = vrot.slane %v810, 4
    %817 = vrot.lane.b32.xlu0 %v816, 80
    %v818 = vpop.permute.xlu0 %817
    %v819 = vsel %vm40, %v818, 0
    %821 = vmatpush.msra.mxu0 0.0
    %822 = vmatpush.msra.mxu0 0.0
    %823 = vmatpush.msra.mxu0 0.0
    %824 = vmatpush.msra.mxu0 0.0
    %825 = vmatpush.msra.mxu0 0.0
    %826 = vmatpush.msra.mxu0 0.0
    %827 = vmatpush.msra.mxu0 0.0
    %828 = vmatpush.msra.mxu0 0.0
    %829 = vmatpush.msra.mxu0 0.0
    %830 = vmatpush.msra.mxu0 0.0
    %831 = vmatpush.msra.mxu0 0.0
    %832 = vmatpush.msra.mxu0 0.0
    %833 = vmatpush.msra.mxu0 0.0
    %834 = vmatpush.msra.mxu0 0.0
    %835 = vmatpush.msra.mxu0 %v274
    %836 = vmatpush.msra.mxu0 %v273
    %837 = vmatmul.f32.gmra.mxu0 %v819
    %v838 = vpop.f32.mrf.mxu0
    %v839 = vadd.f32 0.0, %v838
    %840 = vdwg.mxu0
    %v842 = vrot.slane %v839, 2
    %v844 = vadd.f32 %v309, %v842
    %v845 = vxor.u32 %v844, 2147483648
    %v846 = vmul.f32 %v845, 1.442695
    %v847 = vpow.pop %v846
    %v848 = vadd.f32 %v847, 1.0
    %v849 = vrcp.pop %v848
    %v850 = vmul.f32 %v848, %v849
    %v851 = vsub.f32 1.0, %v850
    %v852 = vmul.f32 %v849, %v851
    %v853 = vadd.f32 %v849, %v852
    %vm854 = vweird.f32 %v848
    %vm855 = vweird.f32 %v849
    %vm856 = vmor %vm854, %vm855
    %v857 = vsel %vm856, %v849, %v853
    %v858 = vand.u32 2147483647, %v848
    %vm859 = vcmp.eq.f32.partialorder %v858, 8.507059e+37
    %v860 = vand.u32 %v848, 2147483648
    %v861 = vor.u32 1.1754944e-38, %v860
    %v862 = vsel %vm859, %v861, %v857
    %v863 = vmul.f32 1.0, %v862
    %v864 = vtanh.pop %v844
    %v866 = vrot.slane %v804, 6
    %v868 = vmul.f32 %v863, %v866
    %870 = vrot.lane.b32.xlu0 %v864, 96
    %v871 = vpop.permute.xlu0 %870
    %v873 = vmul.f32 %v863, %v871
    %875 = vrot.lane.b32.xlu0 %v873, 16
    %v876 = vpop.permute.xlu0 %875
    %v878 = vadd.f32 %v868, %v876
    %v879 = vtanh.pop %v878
    %881 = vrot.lane.b32.xlu0 %v879, 32
    %v882 = vpop.permute.xlu0 %881
    %v884 = vmul.f32 %v863, %v882
    %886 = vrot.lane.b32.xlu0 %v884, 80
    %v887 = vpop.permute.xlu0 %886
    %889 = vst.msk [vmem:[#allocation2 + $0x8] sm:$0xc0] %vm598, %v887
    %v890 = vld [vmem:[#allocation2] sm:$0xff]
    %v891 = vld [vmem:[#allocation2 + $0x8] sm:$0xff]
    %v892 = vperm.slane %v280, 0
    %v894 = vsel %vm40, %v890, 0
    %v897 = vsel %vm40, %v891, 0
    %899 = vmatpush.msra.mxu0 0.0
    %900 = vmatpush.msra.mxu0 0.0
    %901 = vmatpush.msra.mxu0 0.0
    %902 = vmatpush.msra.mxu0 0.0
    %903 = vmatpush.msra.mxu0 0.0
    %904 = vmatpush.msra.mxu0 0.0
    %905 = vmatpush.msra.mxu0 0.0
    %906 = vmatpush.msra.mxu0 0.0
    %907 = vmatpush.msra.mxu0 0.0
    %908 = vmatpush.msra.mxu0 0.0
    %909 = vmatpush.msra.mxu0 0.0
    %910 = vmatpush.msra.mxu0 0.0
    %911 = vmatpush.msra.mxu0 0.0
    %912 = vmatpush.msra.mxu0 0.0
    %913 = vmatpush.msra.mxu0 %v277
    %914 = vmatpush.msra.mxu0 %v276
    %915 = vmatmul.f32.gmra.mxu0 %v894
    %v916 = vpop.f32.mrf.mxu0
    %v917 = vadd.f32 %v892, %v916
    %918 = vmatmul.f32.gmra.mxu0 %v897
    %v919 = vpop.f32.mrf.mxu0
    %v920 = vadd.f32 %v892, %v919
    %921 = vdwg.mxu0
    %922 = vmatpush.msra.mxu0 0.0
    %923 = vmatpush.msra.mxu0 0.0
    %924 = vmatpush.msra.mxu0 0.0
    %925 = vmatpush.msra.mxu0 0.0
    %926 = vmatpush.msra.mxu0 0.0
    %927 = vmatpush.msra.mxu0 0.0
    %928 = vmatpush.msra.mxu0 0.0
    %929 = vmatpush.msra.mxu0 0.0
    %930 = vmatpush.msra.mxu0 0.0
    %931 = vmatpush.msra.mxu0 0.0
    %932 = vmatpush.msra.mxu0 0.0
    %933 = vmatpush.msra.mxu0 0.0
    %934 = vmatpush.msra.mxu0 0.0
    %935 = vmatpush.msra.mxu0 0.0
    %936 = vmatpush.msra.mxu0 %v279
    %937 = vmatpush.msra.mxu0 %v278
    %938 = vmatmul.f32.gmra.mxu0 %v312
    %v939 = vpop.f32.mrf.mxu0
    %v940 = vadd.f32 0.0, %v939
    %941 = vdwg.mxu0
    %v942 = vadd.f32 %v917, %v940
    %v943 = vxor.u32 %v942, 2147483648
    %v944 = vmul.f32 %v943, 1.442695
    %v945 = vpow.pop %v944
    %v946 = vadd.f32 %v945, 1.0
    %v947 = vrcp.pop %v946
    %v948 = vmul.f32 %v946, %v947
    %v949 = vsub.f32 1.0, %v948
    %v950 = vmul.f32 %v947, %v949
    %v951 = vadd.f32 %v947, %v950
    %vm952 = vweird.f32 %v946
    %vm953 = vweird.f32 %v947
    %vm954 = vmor %vm952, %vm953
    %v955 = vsel %vm954, %v947, %v951
    %v956 = vand.u32 2147483647, %v946
    %vm957 = vcmp.eq.f32.partialorder %v956, 8.507059e+37
    %v958 = vand.u32 %v946, 2147483648
    %v959 = vor.u32 1.1754944e-38, %v958
    %v960 = vsel %vm957, %v959, %v955
    %v961 = vmul.f32 1.0, %v960
    %v962 = vtanh.pop %v942
    %v963 = vmul.f32 %v961, 0.0
    %965 = vrot.lane.b32.xlu0 %v962, 96
    %v966 = vpop.permute.xlu0 %965
    %v968 = vmul.f32 %v961, %v966
    %970 = vrot.lane.b32.xlu0 %v968, 16
    %v971 = vpop.permute.xlu0 %970
    %v973 = vadd.f32 %v963, %v971
    %v974 = vtanh.pop %v973
    %976 = vrot.lane.b32.xlu0 %v974, 32
    %v977 = vpop.permute.xlu0 %976
    %v979 = vmul.f32 %v961, %v977
    %981 = vrot.lane.b32.xlu0 %v979, 80
    %v982 = vpop.permute.xlu0 %981
    %v983 = vsel %vm40, %v982, 0
    %985 = vmatpush.msra.mxu0 0.0
    %986 = vmatpush.msra.mxu0 0.0
    %987 = vmatpush.msra.mxu0 0.0
    %988 = vmatpush.msra.mxu0 0.0
    %989 = vmatpush.msra.mxu0 0.0
    %990 = vmatpush.msra.mxu0 0.0
    %991 = vmatpush.msra.mxu0 0.0
    %992 = vmatpush.msra.mxu0 0.0
    %993 = vmatpush.msra.mxu0 0.0
    %994 = vmatpush.msra.mxu0 0.0
    %995 = vmatpush.msra.mxu0 0.0
    %996 = vmatpush.msra.mxu0 0.0
    %997 = vmatpush.msra.mxu0 0.0
    %998 = vmatpush.msra.mxu0 0.0
    %999 = vmatpush.msra.mxu0 %v279
    %1000 = vmatpush.msra.mxu0 %v278
    %1001 = vmatmul.f32.gmra.mxu0 %v983
    %v1002 = vpop.f32.mrf.mxu0
    %v1003 = vadd.f32 0.0, %v1002
    %1004 = vdwg.mxu0
    %v1006 = vrot.slane %v1003, 6
    %v1008 = vadd.f32 %v917, %v1006
    %v1009 = vxor.u32 %v1008, 2147483648
    %v1010 = vmul.f32 %v1009, 1.442695
    %v1011 = vpow.pop %v1010
    %v1012 = vadd.f32 %v1011, 1.0
    %v1013 = vrcp.pop %v1012
    %v1014 = vmul.f32 %v1012, %v1013
    %v1015 = vsub.f32 1.0, %v1014
    %v1016 = vmul.f32 %v1013, %v1015
    %v1017 = vadd.f32 %v1013, %v1016
    %vm1018 = vweird.f32 %v1012
    %vm1019 = vweird.f32 %v1013
    %vm1020 = vmor %vm1018, %vm1019
    %v1021 = vsel %vm1020, %v1013, %v1017
    %v1022 = vand.u32 2147483647, %v1012
    %vm1023 = vcmp.eq.f32.partialorder %v1022, 8.507059e+37
    %v1024 = vand.u32 %v1012, 2147483648
    %v1025 = vor.u32 1.1754944e-38, %v1024
    %v1026 = vsel %vm1023, %v1025, %v1021
    %v1027 = vmul.f32 1.0, %v1026
    %v1028 = vtanh.pop %v1008
    %v1030 = vrot.slane %v973, 6
    %v1032 = vmul.f32 %v1027, %v1030
    %1034 = vrot.lane.b32.xlu0 %v1028, 96
    %v1035 = vpop.permute.xlu0 %1034
    %v1037 = vmul.f32 %v1027, %v1035
    %1039 = vrot.lane.b32.xlu0 %v1037, 16
    %v1040 = vpop.permute.xlu0 %1039
    %v1042 = vadd.f32 %v1032, %v1040
    %v1043 = vtanh.pop %v1042
    %1045 = vrot.lane.b32.xlu0 %v1043, 32
    %v1046 = vpop.permute.xlu0 %1045
    %v1048 = vmul.f32 %v1027, %v1046
    %v1050 = vrot.slane %v1048, 2
    %1051 = vrot.lane.b32.xlu0 %v1050, 80
    %v1052 = vpop.permute.xlu0 %1051
    %v1053 = vsel %vm40, %v1052, 0
    %1055 = vmatpush.msra.mxu0 0.0
    %1056 = vmatpush.msra.mxu0 0.0
    %1057 = vmatpush.msra.mxu0 0.0
    %1058 = vmatpush.msra.mxu0 0.0
    %1059 = vmatpush.msra.mxu0 0.0
    %1060 = vmatpush.msra.mxu0 0.0
    %1061 = vmatpush.msra.mxu0 0.0
    %1062 = vmatpush.msra.mxu0 0.0
    %1063 = vmatpush.msra.mxu0 0.0
    %1064 = vmatpush.msra.mxu0 0.0
    %1065 = vmatpush.msra.mxu0 0.0
    %1066 = vmatpush.msra.mxu0 0.0
    %1067 = vmatpush.msra.mxu0 0.0
    %1068 = vmatpush.msra.mxu0 0.0
    %1069 = vmatpush.msra.mxu0 %v279
    %1070 = vmatpush.msra.mxu0 %v278
    %1071 = vmatmul.f32.gmra.mxu0 %v1053
    %v1072 = vpop.f32.mrf.mxu0
    %v1073 = vadd.f32 0.0, %v1072
    %1074 = vdwg.mxu0
    %v1076 = vrot.slane %v1073, 4
    %v1078 = vadd.f32 %v917, %v1076
    %v1079 = vxor.u32 %v1078, 2147483648
    %v1080 = vmul.f32 %v1079, 1.442695
    %v1081 = vpow.pop %v1080
    %v1082 = vadd.f32 %v1081, 1.0
    %v1083 = vrcp.pop %v1082
    %v1084 = vmul.f32 %v1082, %v1083
    %v1085 = vsub.f32 1.0, %v1084
    %v1086 = vmul.f32 %v1083, %v1085
    %v1087 = vadd.f32 %v1083, %v1086
    %vm1088 = vweird.f32 %v1082
    %vm1089 = vweird.f32 %v1083
    %vm1090 = vmor %vm1088, %vm1089
    %v1091 = vsel %vm1090, %v1083, %v1087
    %v1092 = vand.u32 2147483647, %v1082
    %vm1093 = vcmp.eq.f32.partialorder %v1092, 8.507059e+37
    %v1094 = vand.u32 %v1082, 2147483648
    %v1095 = vor.u32 1.1754944e-38, %v1094
    %v1096 = vsel %vm1093, %v1095, %v1091
    %v1097 = vmul.f32 1.0, %v1096
    %v1098 = vtanh.pop %v1078
    %v1100 = vrot.slane %v1042, 6
    %v1102 = vmul.f32 %v1097, %v1100
    %1104 = vrot.lane.b32.xlu0 %v1098, 96
    %v1105 = vpop.permute.xlu0 %1104
    %v1107 = vmul.f32 %v1097, %v1105
    %1109 = vrot.lane.b32.xlu0 %v1107, 16
    %v1110 = vpop.permute.xlu0 %1109
    %v1112 = vadd.f32 %v1102, %v1110
    %v1113 = vtanh.pop %v1112
    %1115 = vrot.lane.b32.xlu0 %v1113, 32
    %v1116 = vpop.permute.xlu0 %1115
    %v1118 = vmul.f32 %v1097, %v1116
    %v1120 = vrot.slane %v1118, 4
    %1121 = vrot.lane.b32.xlu0 %v1120, 80
    %v1122 = vpop.permute.xlu0 %1121
    %v1123 = vsel %vm40, %v1122, 0
    %1125 = vmatpush.msra.mxu0 0.0
    %1126 = vmatpush.msra.mxu0 0.0
    %1127 = vmatpush.msra.mxu0 0.0
    %1128 = vmatpush.msra.mxu0 0.0
    %1129 = vmatpush.msra.mxu0 0.0
    %1130 = vmatpush.msra.mxu0 0.0
    %1131 = vmatpush.msra.mxu0 0.0
    %1132 = vmatpush.msra.mxu0 0.0
    %1133 = vmatpush.msra.mxu0 0.0
    %1134 = vmatpush.msra.mxu0 0.0
    %1135 = vmatpush.msra.mxu0 0.0
    %1136 = vmatpush.msra.mxu0 0.0
    %1137 = vmatpush.msra.mxu0 0.0
    %1138 = vmatpush.msra.mxu0 0.0
    %1139 = vmatpush.msra.mxu0 %v279
    %1140 = vmatpush.msra.mxu0 %v278
    %1141 = vmatmul.f32.gmra.mxu0 %v1123
    %v1142 = vpop.f32.mrf.mxu0
    %v1143 = vadd.f32 0.0, %v1142
    %1144 = vdwg.mxu0
    %v1146 = vrot.slane %v1143, 2
    %v1148 = vadd.f32 %v917, %v1146
    %v1149 = vxor.u32 %v1148, 2147483648
    %v1150 = vmul.f32 %v1149, 1.442695
    %v1151 = vpow.pop %v1150
    %v1152 = vadd.f32 %v1151, 1.0
    %v1153 = vrcp.pop %v1152
    %v1154 = vmul.f32 %v1152, %v1153
    %v1155 = vsub.f32 1.0, %v1154
    %v1156 = vmul.f32 %v1153, %v1155
    %v1157 = vadd.f32 %v1153, %v1156
    %vm1158 = vweird.f32 %v1152
    %vm1159 = vweird.f32 %v1153
    %vm1160 = vmor %vm1158, %vm1159
    %v1161 = vsel %vm1160, %v1153, %v1157
    %v1162 = vand.u32 2147483647, %v1152
    %vm1163 = vcmp.eq.f32.partialorder %v1162, 8.507059e+37
    %v1164 = vand.u32 %v1152, 2147483648
    %v1165 = vor.u32 1.1754944e-38, %v1164
    %v1166 = vsel %vm1163, %v1165, %v1161
    %v1167 = vmul.f32 1.0, %v1166
    %v1168 = vtanh.pop %v1148
    %v1170 = vrot.slane %v1112, 6
    %v1172 = vmul.f32 %v1167, %v1170
    %1174 = vrot.lane.b32.xlu0 %v1168, 96
    %v1175 = vpop.permute.xlu0 %1174
    %v1177 = vmul.f32 %v1167, %v1175
    %1179 = vrot.lane.b32.xlu0 %v1177, 16
    %v1180 = vpop.permute.xlu0 %1179
    %v1182 = vadd.f32 %v1172, %v1180
    %v1183 = vtanh.pop %v1182
    %1185 = vrot.lane.b32.xlu0 %v1183, 32
    %v1186 = vpop.permute.xlu0 %1185
    %v1188 = vmul.f32 %v1167, %v1186
    %v1190 = vrot.slane %v1188, 6
    %1191 = vrot.lane.b32.xlu0 %v1190, 80
    %v1192 = vpop.permute.xlu0 %1191
    %v1193 = vsel %vm40, %v1192, 0
    %1195 = vmatpush.msra.mxu0 0.0
    %1196 = vmatpush.msra.mxu0 0.0
    %1197 = vmatpush.msra.mxu0 0.0
    %1198 = vmatpush.msra.mxu0 0.0
    %1199 = vmatpush.msra.mxu0 0.0
    %1200 = vmatpush.msra.mxu0 0.0
    %1201 = vmatpush.msra.mxu0 0.0
    %1202 = vmatpush.msra.mxu0 0.0
    %1203 = vmatpush.msra.mxu0 0.0
    %1204 = vmatpush.msra.mxu0 0.0
    %1205 = vmatpush.msra.mxu0 0.0
    %1206 = vmatpush.msra.mxu0 0.0
    %1207 = vmatpush.msra.mxu0 0.0
    %1208 = vmatpush.msra.mxu0 0.0
    %1209 = vmatpush.msra.mxu0 %v279
    %1210 = vmatpush.msra.mxu0 %v278
    %1211 = vmatmul.f32.gmra.mxu0 %v1193
    %v1212 = vpop.f32.mrf.mxu0
    %v1213 = vadd.f32 0.0, %v1212
    %1214 = vdwg.mxu0
    %v1215 = vadd.f32 %v920, %v1213
    %v1216 = vxor.u32 %v1215, 2147483648
    %v1217 = vmul.f32 %v1216, 1.442695
    %v1218 = vpow.pop %v1217
    %v1219 = vadd.f32 %v1218, 1.0
    %v1220 = vrcp.pop %v1219
    %v1221 = vmul.f32 %v1219, %v1220
    %v1222 = vsub.f32 1.0, %v1221
    %v1223 = vmul.f32 %v1220, %v1222
    %v1224 = vadd.f32 %v1220, %v1223
    %vm1225 = vweird.f32 %v1219
    %vm1226 = vweird.f32 %v1220
    %vm1227 = vmor %vm1225, %vm1226
    %v1228 = vsel %vm1227, %v1220, %v1224
    %v1229 = vand.u32 2147483647, %v1219
    %vm1230 = vcmp.eq.f32.partialorder %v1229, 8.507059e+37
    %v1231 = vand.u32 %v1219, 2147483648
    %v1232 = vor.u32 1.1754944e-38, %v1231
    %v1233 = vsel %vm1230, %v1232, %v1228
    %v1234 = vmul.f32 1.0, %v1233
    %v1235 = vtanh.pop %v1215
    %v1237 = vrot.slane %v1182, 6
    %v1239 = vmul.f32 %v1234, %v1237
    %1241 = vrot.lane.b32.xlu0 %v1235, 96
    %v1242 = vpop.permute.xlu0 %1241
    %v1244 = vmul.f32 %v1234, %v1242
    %1246 = vrot.lane.b32.xlu0 %v1244, 16
    %v1247 = vpop.permute.xlu0 %1246
    %v1249 = vadd.f32 %v1239, %v1247
    %v1250 = vtanh.pop %v1249
    %1252 = vrot.lane.b32.xlu0 %v1250, 32
    %v1253 = vpop.permute.xlu0 %1252
    %v1255 = vmul.f32 %v1234, %v1253
    %1257 = vrot.lane.b32.xlu0 %v1255, 80
    %v1258 = vpop.permute.xlu0 %1257
    %v1259 = vsel %vm40, %v1258, 0
    %1261 = vmatpush.msra.mxu0 0.0
    %1262 = vmatpush.msra.mxu0 0.0
    %1263 = vmatpush.msra.mxu0 0.0
    %1264 = vmatpush.msra.mxu0 0.0
    %1265 = vmatpush.msra.mxu0 0.0
    %1266 = vmatpush.msra.mxu0 0.0
    %1267 = vmatpush.msra.mxu0 0.0
    %1268 = vmatpush.msra.mxu0 0.0
    %1269 = vmatpush.msra.mxu0 0.0
    %1270 = vmatpush.msra.mxu0 0.0
    %1271 = vmatpush.msra.mxu0 0.0
    %1272 = vmatpush.msra.mxu0 0.0
    %1273 = vmatpush.msra.mxu0 0.0
    %1274 = vmatpush.msra.mxu0 0.0
    %1275 = vmatpush.msra.mxu0 %v279
    %1276 = vmatpush.msra.mxu0 %v278
    %1277 = vmatmul.f32.gmra.mxu0 %v1259
    %v1278 = vpop.f32.mrf.mxu0
    %v1279 = vadd.f32 0.0, %v1278
    %1280 = vdwg.mxu0
    %v1282 = vrot.slane %v1279, 6
    %v1284 = vadd.f32 %v920, %v1282
    %v1285 = vxor.u32 %v1284, 2147483648
    %v1286 = vmul.f32 %v1285, 1.442695
    %v1287 = vpow.pop %v1286
    %v1288 = vadd.f32 %v1287, 1.0
    %v1289 = vrcp.pop %v1288
    %v1290 = vmul.f32 %v1288, %v1289
    %v1291 = vsub.f32 1.0, %v1290
    %v1292 = vmul.f32 %v1289, %v1291
    %v1293 = vadd.f32 %v1289, %v1292
    %vm1294 = vweird.f32 %v1288
    %vm1295 = vweird.f32 %v1289
    %vm1296 = vmor %vm1294, %vm1295
    %v1297 = vsel %vm1296, %v1289, %v1293
    %v1298 = vand.u32 2147483647, %v1288
    %vm1299 = vcmp.eq.f32.partialorder %v1298, 8.507059e+37
    %v1300 = vand.u32 %v1288, 2147483648
    %v1301 = vor.u32 1.1754944e-38, %v1300
    %v1302 = vsel %vm1299, %v1301, %v1297
    %v1303 = vmul.f32 1.0, %v1302
    %v1304 = vtanh.pop %v1284
    %v1306 = vrot.slane %v1249, 6
    %v1308 = vmul.f32 %v1303, %v1306
    %1310 = vrot.lane.b32.xlu0 %v1304, 96
    %v1311 = vpop.permute.xlu0 %1310
    %v1313 = vmul.f32 %v1303, %v1311
    %1315 = vrot.lane.b32.xlu0 %v1313, 16
    %v1316 = vpop.permute.xlu0 %1315
    %v1318 = vadd.f32 %v1308, %v1316
    %v1319 = vtanh.pop %v1318
    %1321 = vrot.lane.b32.xlu0 %v1319, 32
    %v1322 = vpop.permute.xlu0 %1321
    %v1324 = vmul.f32 %v1303, %v1322
    %v1326 = vrot.slane %v1324, 2
    %1327 = vrot.lane.b32.xlu0 %v1326, 80
    %v1328 = vpop.permute.xlu0 %1327
    %v1329 = vsel %vm40, %v1328, 0
    %1331 = vmatpush.msra.mxu0 0.0
    %1332 = vmatpush.msra.mxu0 0.0
    %1333 = vmatpush.msra.mxu0 0.0
    %1334 = vmatpush.msra.mxu0 0.0
    %1335 = vmatpush.msra.mxu0 0.0
    %1336 = vmatpush.msra.mxu0 0.0
    %1337 = vmatpush.msra.mxu0 0.0
    %1338 = vmatpush.msra.mxu0 0.0
    %1339 = vmatpush.msra.mxu0 0.0
    %1340 = vmatpush.msra.mxu0 0.0
    %1341 = vmatpush.msra.mxu0 0.0
    %1342 = vmatpush.msra.mxu0 0.0
    %1343 = vmatpush.msra.mxu0 0.0
    %1344 = vmatpush.msra.mxu0 0.0
    %1345 = vmatpush.msra.mxu0 %v279
    %1346 = vmatpush.msra.mxu0 %v278
    %1347 = vmatmul.f32.gmra.mxu0 %v1329
    %v1348 = vpop.f32.mrf.mxu0
    %v1349 = vadd.f32 0.0, %v1348
    %1350 = vdwg.mxu0
    %v1352 = vrot.slane %v1349, 4
    %v1354 = vadd.f32 %v920, %v1352
    %v1355 = vxor.u32 %v1354, 2147483648
    %v1356 = vmul.f32 %v1355, 1.442695
    %v1357 = vpow.pop %v1356
    %v1358 = vadd.f32 %v1357, 1.0
    %v1359 = vrcp.pop %v1358
    %v1360 = vmul.f32 %v1358, %v1359
    %v1361 = vsub.f32 1.0, %v1360
    %v1362 = vmul.f32 %v1359, %v1361
    %v1363 = vadd.f32 %v1359, %v1362
    %vm1364 = vweird.f32 %v1358
    %vm1365 = vweird.f32 %v1359
    %vm1366 = vmor %vm1364, %vm1365
    %v1367 = vsel %vm1366, %v1359, %v1363
    %v1368 = vand.u32 2147483647, %v1358
    %vm1369 = vcmp.eq.f32.partialorder %v1368, 8.507059e+37
    %v1370 = vand.u32 %v1358, 2147483648
    %v1371 = vor.u32 1.1754944e-38, %v1370
    %v1372 = vsel %vm1369, %v1371, %v1367
    %v1373 = vmul.f32 1.0, %v1372
    %v1374 = vtanh.pop %v1354
    %v1376 = vrot.slane %v1318, 6
    %v1378 = vmul.f32 %v1373, %v1376
    %1380 = vrot.lane.b32.xlu0 %v1374, 96
    %v1381 = vpop.permute.xlu0 %1380
    %v1383 = vmul.f32 %v1373, %v1381
    %1385 = vrot.lane.b32.xlu0 %v1383, 16
    %v1386 = vpop.permute.xlu0 %1385
    %v1388 = vadd.f32 %v1378, %v1386
    %v1389 = vtanh.pop %v1388
    %1391 = vrot.lane.b32.xlu0 %v1389, 32
    %v1392 = vpop.permute.xlu0 %1391
    %v1394 = vmul.f32 %v1373, %v1392
    %v1396 = vrot.slane %v1394, 4
    %1397 = vrot.lane.b32.xlu0 %v1396, 80
    %v1398 = vpop.permute.xlu0 %1397
    %v1399 = vsel %vm40, %v1398, 0
    %1401 = vmatpush.msra.mxu0 0.0
    %1402 = vmatpush.msra.mxu0 0.0
    %1403 = vmatpush.msra.mxu0 0.0
    %1404 = vmatpush.msra.mxu0 0.0
    %1405 = vmatpush.msra.mxu0 0.0
    %1406 = vmatpush.msra.mxu0 0.0
    %1407 = vmatpush.msra.mxu0 0.0
    %1408 = vmatpush.msra.mxu0 0.0
    %1409 = vmatpush.msra.mxu0 0.0
    %1410 = vmatpush.msra.mxu0 0.0
    %1411 = vmatpush.msra.mxu0 0.0
    %1412 = vmatpush.msra.mxu0 0.0
    %1413 = vmatpush.msra.mxu0 0.0
    %1414 = vmatpush.msra.mxu0 0.0
    %1415 = vmatpush.msra.mxu0 %v279
    %1416 = vmatpush.msra.mxu0 %v278
    %1417 = vmatmul.f32.gmra.mxu0 %v1399
    %v1418 = vpop.f32.mrf.mxu0
    %v1419 = vadd.f32 0.0, %v1418
    %1420 = vdwg.mxu0
    %v1422 = vrot.slane %v1419, 2
    %v1424 = vadd.f32 %v920, %v1422
    %v1425 = vxor.u32 %v1424, 2147483648
    %v1426 = vmul.f32 %v1425, 1.442695
    %v1427 = vpow.pop %v1426
    %v1428 = vadd.f32 %v1427, 1.0
    %v1429 = vrcp.pop %v1428
    %v1430 = vmul.f32 %v1428, %v1429
    %v1431 = vsub.f32 1.0, %v1430
    %v1432 = vmul.f32 %v1429, %v1431
    %v1433 = vadd.f32 %v1429, %v1432
    %vm1434 = vweird.f32 %v1428
    %vm1435 = vweird.f32 %v1429
    %vm1436 = vmor %vm1434, %vm1435
    %v1437 = vsel %vm1436, %v1429, %v1433
    %v1438 = vand.u32 2147483647, %v1428
    %vm1439 = vcmp.eq.f32.partialorder %v1438, 8.507059e+37
    %v1440 = vand.u32 %v1428, 2147483648
    %v1441 = vor.u32 1.1754944e-38, %v1440
    %v1442 = vsel %vm1439, %v1441, %v1437
    %v1443 = vmul.f32 1.0, %v1442
    %v1444 = vtanh.pop %v1424
    %v1446 = vrot.slane %v1388, 6
    %v1448 = vmul.f32 %v1443, %v1446
    %1450 = vrot.lane.b32.xlu0 %v1444, 96
    %v1451 = vpop.permute.xlu0 %1450
    %v1453 = vmul.f32 %v1443, %v1451
    %1455 = vrot.lane.b32.xlu0 %v1453, 16
    %v1456 = vpop.permute.xlu0 %1455
    %v1458 = vadd.f32 %v1448, %v1456
    %v1459 = vtanh.pop %v1458
    %1461 = vrot.lane.b32.xlu0 %v1459, 32
    %v1462 = vpop.permute.xlu0 %1461
    %v1464 = vmul.f32 %v1443, %v1462
    %v1465 = vld [vmem:[%s1 + $0x88] sm:$0xff]
    %v1466 = vld [vmem:[%s1 + $0x90] sm:$0xff]
    %v1467 = vld [vmem:[%s1 + $0x98] sm:$0xff]
    %v1468 = vld [vmem:[%s1 + $0xa0] sm:$0xff]
    %v1469 = vld [vmem:[%s1 + $0xa8] sm:$0xff]
    %v1470 = vld [vmem:[%s1 + $0xb0] sm:$0xff]
    %v1471 = vld [vmem:[%s1 + $0xb8] sm:$0xff]
    %v1472 = vld [vmem:[%s1 + $0xc0] sm:$0xff]
    %v1473 = vld [vmem:[%s1 + $0xc8] sm:$0xff]
    %v1474 = vld [vmem:[%s1 + $0xd0] sm:$0xff]
    %v1475 = vld [vmem:[%s1 + $0xd8] sm:$0xff]
    %v1476 = vld [vmem:[%s1 + $0xe0] sm:$0xff]
    %v1477 = vld [vmem:[%s1 + $0xe8] sm:$0xff]
    %v1478 = vld [vmem:[%s1 + $0xf0] sm:$0xff]
    %v1479 = vld [vmem:[%s1 + $0xf8] sm:$0xff]
    %v1480 = vld [vmem:[%s1 + $0x100] sm:$0xff]
    %v1481 = vld [vmem:[%s1 + $0x108] sm:$0xff]
    %v1482 = vld [vmem:[%s1 + $0x110] sm:$0xff]
    %vm1483 = vcmp.ge.f32.partialorder %v1464, -2.2
    %vm1484 = vcmp.lt.f32.partialorder %v1464, -1.8
    %vm1485 = vmand %vm1483, %vm1484
    %v1486 = vsel %vm1485, 1, 0
    %v1487 = vcvt.s32.f32 %v1486
    %vm1488 = vcmp.ge.f32.partialorder %v1464, -1.8
    %vm1489 = vcmp.lt.f32.partialorder %v1464, -1.4
    %vm1490 = vmand %vm1488, %vm1489
    %v1491 = vsel %vm1490, 1, 0
    %v1492 = vcvt.s32.f32 %v1491
    %vm1493 = vcmp.ge.f32.partialorder %v1464, -1.4
    %vm1494 = vcmp.lt.f32.partialorder %v1464, -1.0
    %vm1495 = vmand %vm1493, %vm1494
    %v1496 = vsel %vm1495, 1, 0
    %v1497 = vcvt.s32.f32 %v1496
    %vm1498 = vcmp.ge.f32.partialorder %v1464, -1.0
    %vm1499 = vcmp.lt.f32.partialorder %v1464, -0.6
    %vm1500 = vmand %vm1498, %vm1499
    %v1501 = vsel %vm1500, 1, 0
    %v1502 = vcvt.s32.f32 %v1501
    %vm1503 = vcmp.ge.f32.partialorder %v1464, -0.6
    %vm1504 = vcmp.lt.f32.partialorder %v1464, -0.2
    %vm1505 = vmand %vm1503, %vm1504
    %v1506 = vsel %vm1505, 1, 0
    %v1507 = vcvt.s32.f32 %v1506
    %vm1508 = vcmp.ge.f32.partialorder %v1464, -0.2
    %vm1509 = vcmp.lt.f32.partialorder %v1464, 0.2
    %vm1510 = vmand %vm1508, %vm1509
    %v1511 = vsel %vm1510, 1, 0
    %v1512 = vcvt.s32.f32 %v1511
    %vm1513 = vcmp.ge.f32.partialorder %v1464, 0.2
    %vm1514 = vcmp.lt.f32.partialorder %v1464, 0.6
    %vm1515 = vmand %vm1513, %vm1514
    %v1516 = vsel %vm1515, 1, 0
    %v1517 = vcvt.s32.f32 %v1516
    %vm1518 = vcmp.ge.f32.partialorder %v1464, 0.6
    %vm1519 = vcmp.lt.f32.partialorder %v1464, 1.0
    %vm1520 = vmand %vm1518, %vm1519
    %v1521 = vsel %vm1520, 1, 0
    %v1522 = vcvt.s32.f32 %v1521
    %vm1523 = vcmp.ge.f32.partialorder %v1464, 1.0
    %vm1524 = vcmp.lt.f32.partialorder %v1464, 1.4
    %vm1525 = vmand %vm1523, %vm1524
    %v1526 = vsel %vm1525, 1, 0
    %v1527 = vcvt.s32.f32 %v1526
    %vm1528 = vcmp.ge.f32.partialorder %v1464, 1.4
    %vm1529 = vcmp.lt.f32.partialorder %v1464, 1.8
    %vm1530 = vmand %vm1528, %vm1529
    %v1531 = vsel %vm1530, 1, 0
    %v1532 = vcvt.s32.f32 %v1531
    %vm1533 = vcmp.ge.f32.partialorder %v1464, 1.8
    %vm1534 = vcmp.lt.f32.partialorder %v1464, 2.2
    %vm1535 = vmand %vm1533, %vm1534
    %v1536 = vsel %vm1535, 1, 0
    %v1537 = vcvt.s32.f32 %v1536
    %v1538 = vsub.f32 %v1464, -2.2
    %v1539 = vmul.f32 %v1538, 2.5
    %v1540 = vmul.f32 %v1539, %v1487
    %v1541 = vsub.f32 -1.4, %v1464
    %v1542 = vmul.f32 %v1541, 2.5
    %v1543 = vmul.f32 %v1542, %v1492
    %v1544 = vadd.f32 %v1540, %v1543
    %v1545 = vsub.f32 %v1464, -1.8
    %v1546 = vmul.f32 %v1545, 2.5
    %v1547 = vmul.f32 %v1546, %v1492
    %v1548 = vsub.f32 -1.0, %v1464
    %v1549 = vmul.f32 %v1548, 2.5
    %v1550 = vmul.f32 %v1549, %v1497
    %v1551 = vadd.f32 %v1547, %v1550
    %v1552 = vsub.f32 %v1464, -1.4
    %v1553 = vmul.f32 %v1552, 2.5
    %v1554 = vmul.f32 %v1553, %v1497
    %v1555 = vsub.f32 -0.6, %v1464
    %v1556 = vmul.f32 %v1555, 2.5
    %v1557 = vmul.f32 %v1556, %v1502
    %v1558 = vadd.f32 %v1554, %v1557
    %v1559 = vsub.f32 %v1464, -1.0
    %v1560 = vmul.f32 %v1559, 2.5
    %v1561 = vmul.f32 %v1560, %v1502
    %v1562 = vsub.f32 -0.2, %v1464
    %v1563 = vmul.f32 %v1562, 2.5
    %v1564 = vmul.f32 %v1563, %v1507
    %v1565 = vadd.f32 %v1561, %v1564
    %v1566 = vsub.f32 %v1464, -0.6
    %v1567 = vmul.f32 %v1566, 2.5
    %v1568 = vmul.f32 %v1567, %v1507
    %v1569 = vsub.f32 0.2, %v1464
    %v1570 = vmul.f32 %v1569, 2.5
    %v1571 = vmul.f32 %v1570, %v1512
    %v1572 = vadd.f32 %v1568, %v1571
    %v1573 = vsub.f32 %v1464, -0.2
    %v1574 = vmul.f32 %v1573, 2.5
    %v1575 = vmul.f32 %v1574, %v1512
    %v1576 = vsub.f32 0.6, %v1464
    %v1577 = vmul.f32 %v1576, 2.5
    %v1578 = vmul.f32 %v1577, %v1517
    %v1579 = vadd.f32 %v1575, %v1578
    %v1580 = vsub.f32 %v1464, 0.2
    %v1581 = vmul.f32 %v1580, 2.5
    %v1582 = vmul.f32 %v1581, %v1517
    %v1583 = vsub.f32 1.0, %v1464
    %v1584 = vmul.f32 %v1583, 2.5
    %v1585 = vmul.f32 %v1584, %v1522
    %v1586 = vadd.f32 %v1582, %v1585
    %v1587 = vsub.f32 %v1464, 0.6
    %v1588 = vmul.f32 %v1587, 2.5
    %v1589 = vmul.f32 %v1588, %v1522
    %v1590 = vsub.f32 1.4, %v1464
    %v1591 = vmul.f32 %v1590, 2.5
    %v1592 = vmul.f32 %v1591, %v1527
    %v1593 = vadd.f32 %v1589, %v1592
    %v1594 = vsub.f32 %v1464, 1.0
    %v1595 = vmul.f32 %v1594, 2.5
    %v1596 = vmul.f32 %v1595, %v1527
    %v1597 = vsub.f32 1.8, %v1464
    %v1598 = vmul.f32 %v1597, 2.5
    %v1599 = vmul.f32 %v1598, %v1532
    %v1600 = vadd.f32 %v1596, %v1599
    %v1601 = vsub.f32 %v1464, 1.4
    %v1602 = vmul.f32 %v1601, 2.5
    %v1603 = vmul.f32 %v1602, %v1532
    %v1604 = vsub.f32 2.2, %v1464
    %v1605 = vmul.f32 %v1604, 2.5
    %v1606 = vmul.f32 %v1605, %v1537
    %v1607 = vadd.f32 %v1603, %v1606
    %v1608 = vmul.f32 %v1538, 1.25
    %v1609 = vmul.f32 %v1608, %v1544
    %v1610 = vmul.f32 %v1548, 1.25
    %v1611 = vmul.f32 %v1610, %v1551
    %v1612 = vadd.f32 %v1609, %v1611
    %v1613 = vmul.f32 %v1545, 1.25
    %v1614 = vmul.f32 %v1613, %v1551
    %v1615 = vmul.f32 %v1555, 1.25
    %v1616 = vmul.f32 %v1615, %v1558
    %v1617 = vadd.f32 %v1614, %v1616
    %v1618 = vmul.f32 %v1552, 1.25
    %v1619 = vmul.f32 %v1618, %v1558
    %v1620 = vmul.f32 %v1562, 1.25
    %v1621 = vmul.f32 %v1620, %v1565
    %v1622 = vadd.f32 %v1619, %v1621
    %v1623 = vmul.f32 %v1559, 1.25
    %v1624 = vmul.f32 %v1623, %v1565
    %v1625 = vmul.f32 %v1569, 1.25
    %v1626 = vmul.f32 %v1625, %v1572
    %v1627 = vadd.f32 %v1624, %v1626
    %v1628 = vmul.f32 %v1566, 1.25
    %v1629 = vmul.f32 %v1628, %v1572
    %v1630 = vmul.f32 %v1576, 1.25
    %v1631 = vmul.f32 %v1630, %v1579
    %v1632 = vadd.f32 %v1629, %v1631
    %v1633 = vmul.f32 %v1573, 1.25
    %v1634 = vmul.f32 %v1633, %v1579
    %v1635 = vmul.f32 %v1583, 1.25
    %v1636 = vmul.f32 %v1635, %v1586
    %v1637 = vadd.f32 %v1634, %v1636
    %v1638 = vmul.f32 %v1580, 1.25
    %v1639 = vmul.f32 %v1638, %v1586
    %v1640 = vmul.f32 %v1590, 1.25
    %v1641 = vmul.f32 %v1640, %v1593
    %v1642 = vadd.f32 %v1639, %v1641
    %v1643 = vmul.f32 %v1587, 1.25
    %v1644 = vmul.f32 %v1643, %v1593
    %v1645 = vmul.f32 %v1597, 1.25
    %v1646 = vmul.f32 %v1645, %v1600
    %v1647 = vadd.f32 %v1644, %v1646
    %v1648 = vmul.f32 %v1594, 1.25
    %v1649 = vmul.f32 %v1648, %v1600
    %v1650 = vmul.f32 %v1604, 1.25
    %v1651 = vmul.f32 %v1650, %v1607
    %v1652 = vadd.f32 %v1649, %v1651
    %v1653 = vmul.f32 %v1538, 0.8333333
    %v1654 = vmul.f32 %v1653, %v1612
    %v1655 = vmul.f32 %v1555, 0.8333333
    %v1656 = vmul.f32 %v1655, %v1617
    %v1657 = vadd.f32 %v1654, %v1656
    %v1658 = vmul.f32 %v1545, 0.8333333
    %v1659 = vmul.f32 %v1658, %v1617
    %v1660 = vmul.f32 %v1562, 0.8333333
    %v1661 = vmul.f32 %v1660, %v1622
    %v1662 = vadd.f32 %v1659, %v1661
    %v1663 = vmul.f32 %v1552, 0.8333333
    %v1664 = vmul.f32 %v1663, %v1622
    %v1665 = vmul.f32 %v1569, 0.8333333
    %v1666 = vmul.f32 %v1665, %v1627
    %v1667 = vadd.f32 %v1664, %v1666
    %v1668 = vmul.f32 %v1559, 0.8333333
    %v1669 = vmul.f32 %v1668, %v1627
    %v1670 = vmul.f32 %v1576, 0.8333333
    %v1671 = vmul.f32 %v1670, %v1632
    %v1672 = vadd.f32 %v1669, %v1671
    %v1673 = vmul.f32 %v1566, 0.8333333
    %v1674 = vmul.f32 %v1673, %v1632
    %v1675 = vmul.f32 %v1583, 0.8333333
    %v1676 = vmul.f32 %v1675, %v1637
    %v1677 = vadd.f32 %v1674, %v1676
    %v1678 = vmul.f32 %v1573, 0.8333333
    %v1679 = vmul.f32 %v1678, %v1637
    %v1680 = vmul.f32 %v1590, 0.8333333
    %v1681 = vmul.f32 %v1680, %v1642
    %v1682 = vadd.f32 %v1679, %v1681
    %v1683 = vmul.f32 %v1580, 0.8333333
    %v1684 = vmul.f32 %v1683, %v1642
    %v1685 = vmul.f32 %v1597, 0.8333333
    %v1686 = vmul.f32 %v1685, %v1647
    %v1687 = vadd.f32 %v1684, %v1686
    %v1688 = vmul.f32 %v1587, 0.8333333
    %v1689 = vmul.f32 %v1688, %v1647
    %v1690 = vmul.f32 %v1604, 0.8333333
    %v1691 = vmul.f32 %v1690, %v1652
    %v1692 = vadd.f32 %v1689, %v1691
    %v1693 = vxor.u32 %v1464, 2147483648
    %v1694 = vmul.f32 %v1693, 1.442695
    %v1695 = vpow.pop %v1694
    %v1696 = vadd.f32 %v1695, 1.0
    %v1697 = vrcp.pop %v1696
    %v1698 = vmul.f32 %v1696, %v1697
    %v1699 = vsub.f32 1.0, %v1698
    %v1700 = vmul.f32 %v1697, %v1699
    %v1701 = vadd.f32 %v1697, %v1700
    %vm1702 = vweird.f32 %v1696
    %vm1703 = vweird.f32 %v1697
    %vm1704 = vmor %vm1702, %vm1703
    %v1705 = vsel %vm1704, %v1697, %v1701
    %v1706 = vand.u32 2147483647, %v1696
    %vm1707 = vcmp.eq.f32.partialorder %v1706, 8.507059e+37
    %v1708 = vand.u32 %v1696, 2147483648
    %v1709 = vor.u32 1.1754944e-38, %v1708
    %v1710 = vsel %vm1707, %v1709, %v1705
    %v1711 = vmul.f32 1.0, %v1710
    %v1712 = vmul.f32 %v1464, %v1711
    %1714 = vrot.lane.b32.xlu0 %v1712, 80
    %v1715 = vpop.permute.xlu0 %1714
    %1718 = vrot.lane.b32.xlu0 %v1657, 96
    %v1719 = vpop.permute.xlu0 %1718
    %1722 = vrot.lane.b32.xlu0 %v1662, 112
    %v1723 = vpop.permute.xlu0 %1722
    %1726 = vrot.lane.b32.xlu0 %v1672, 16
    %v1727 = vpop.permute.xlu0 %1726
    %1730 = vrot.lane.b32.xlu0 %v1677, 32
    %v1731 = vpop.permute.xlu0 %1730
    %1734 = vrot.lane.b32.xlu0 %v1682, 48
    %v1735 = vpop.permute.xlu0 %1734
    %1738 = vrot.lane.b32.xlu0 %v1687, 64
    %v1739 = vpop.permute.xlu0 %1738
    %1742 = vrot.lane.b32.xlu0 %v1692, 80
    %v1743 = vpop.permute.xlu0 %1742
    %v1744 = vsel %vm40, %v1715, %v1719
    %v1745 = vsel %vm123, %v1744, %v1723
    %vm1746 = vcmask 392192
    %v1747 = vsel %vm1746, %v1745, %v1667
    %vm1748 = vcmask 523264
    %v1749 = vsel %vm1748, %v1747, %v1727
    %vm1750 = vcmask 654336
    %v1751 = vsel %vm1750, %v1749, %v1731
    %vm1752 = vcmask 785408
    %v1753 = vsel %vm1752, %v1751, %v1735
    %vm1754 = vcmask 916480
    %v1755 = vsel %vm1754, %v1753, %v1739
    %v1757 = vrot.slane %v1755, 6
    %v1758 = vrot.slane %v1743, 6
    %v1760 = vsel %vm40, %v1758, 0
    %1762 = vmatpush.msra.mxu0 %v1480
    %1763 = vmatpush.msra.mxu0 %v1479
    %1764 = vmatpush.msra.mxu0 %v1478
    %1765 = vmatpush.msra.mxu0 %v1477
    %1766 = vmatpush.msra.mxu0 %v1476
    %1767 = vmatpush.msra.mxu0 %v1475
    %1768 = vmatpush.msra.mxu0 %v1474
    %1769 = vmatpush.msra.mxu0 %v1473
    %1770 = vmatpush.msra.mxu0 %v1472
    %1771 = vmatpush.msra.mxu0 %v1471
    %1772 = vmatpush.msra.mxu0 %v1470
    %1773 = vmatpush.msra.mxu0 %v1469
    %1774 = vmatpush.msra.mxu0 %v1468
    %1775 = vmatpush.msra.mxu0 %v1467
    %1776 = vmatpush.msra.mxu0 %v1466
    %1777 = vmatpush.msra.mxu0 %v1465
    %1778 = vmatmul.f32.gmra.mxu0 %v1757
    %v1779 = vpop.f32.mrf.mxu0
    %v1780 = vadd.f32 0.0, %v1779
    %1781 = vdwg.mxu0
    %1782 = vmatpush.msra.mxu0 0.0
    %1783 = vmatpush.msra.mxu0 0.0
    %1784 = vmatpush.msra.mxu0 0.0
    %1785 = vmatpush.msra.mxu0 0.0
    %1786 = vmatpush.msra.mxu0 0.0
    %1787 = vmatpush.msra.mxu0 0.0
    %1788 = vmatpush.msra.mxu0 0.0
    %1789 = vmatpush.msra.mxu0 0.0
    %1790 = vmatpush.msra.mxu0 0.0
    %1791 = vmatpush.msra.mxu0 0.0
    %1792 = vmatpush.msra.mxu0 0.0
    %1793 = vmatpush.msra.mxu0 0.0
    %1794 = vmatpush.msra.mxu0 0.0
    %1795 = vmatpush.msra.mxu0 0.0
    %1796 = vmatpush.msra.mxu0 %v1482
    %1797 = vmatpush.msra.mxu0 %v1481
    %1798 = vmatmul.f32.gmra.mxu0 %v1760
    %v1799 = vpop.f32.mrf.mxu0
    %v1800 = vadd.f32 %v1780, %v1799
    %1801 = vdwg.mxu0
    %vm1802 = vcmp.ge.f32.partialorder %v1800, -2.2
    %vm1803 = vcmp.lt.f32.partialorder %v1800, -1.8
    %vm1804 = vmand %vm1802, %vm1803
    %v1805 = vsel %vm1804, 1, 0
    %v1806 = vcvt.s32.f32 %v1805
    %vm1807 = vcmp.ge.f32.partialorder %v1800, -1.8
    %vm1808 = vcmp.lt.f32.partialorder %v1800, -1.4
    %vm1809 = vmand %vm1807, %vm1808
    %v1810 = vsel %vm1809, 1, 0
    %v1811 = vcvt.s32.f32 %v1810
    %vm1812 = vcmp.ge.f32.partialorder %v1800, -1.4
    %vm1813 = vcmp.lt.f32.partialorder %v1800, -1.0
    %vm1814 = vmand %vm1812, %vm1813
    %v1815 = vsel %vm1814, 1, 0
    %v1816 = vcvt.s32.f32 %v1815
    %vm1817 = vcmp.ge.f32.partialorder %v1800, -1.0
    %vm1818 = vcmp.lt.f32.partialorder %v1800, -0.6
    %vm1819 = vmand %vm1817, %vm1818
    %v1820 = vsel %vm1819, 1, 0
    %v1821 = vcvt.s32.f32 %v1820
    %vm1822 = vcmp.ge.f32.partialorder %v1800, -0.6
    %vm1823 = vcmp.lt.f32.partialorder %v1800, -0.2
    %vm1824 = vmand %vm1822, %vm1823
    %v1825 = vsel %vm1824, 1, 0
    %v1826 = vcvt.s32.f32 %v1825
    %vm1827 = vcmp.ge.f32.partialorder %v1800, -0.2
    %vm1828 = vcmp.lt.f32.partialorder %v1800, 0.2
    %vm1829 = vmand %vm1827, %vm1828
    %v1830 = vsel %vm1829, 1, 0
    %v1831 = vcvt.s32.f32 %v1830
    %vm1832 = vcmp.ge.f32.partialorder %v1800, 0.2
    %vm1833 = vcmp.lt.f32.partialorder %v1800, 0.6
    %vm1834 = vmand %vm1832, %vm1833
    %v1835 = vsel %vm1834, 1, 0
    %v1836 = vcvt.s32.f32 %v1835
    %vm1837 = vcmp.ge.f32.partialorder %v1800, 0.6
    %vm1838 = vcmp.lt.f32.partialorder %v1800, 1.0
    %vm1839 = vmand %vm1837, %vm1838
    %v1840 = vsel %vm1839, 1, 0
    %v1841 = vcvt.s32.f32 %v1840
    %vm1842 = vcmp.ge.f32.partialorder %v1800, 1.0
    %vm1843 = vcmp.lt.f32.partialorder %v1800, 1.4
    %vm1844 = vmand %vm1842, %vm1843
    %v1845 = vsel %vm1844, 1, 0
    %v1846 = vcvt.s32.f32 %v1845
    %vm1847 = vcmp.ge.f32.partialorder %v1800, 1.4
    %vm1848 = vcmp.lt.f32.partialorder %v1800, 1.8
    %vm1849 = vmand %vm1847, %vm1848
    %v1850 = vsel %vm1849, 1, 0
    %v1851 = vcvt.s32.f32 %v1850
    %vm1852 = vcmp.ge.f32.partialorder %v1800, 1.8
    %vm1853 = vcmp.lt.f32.partialorder %v1800, 2.2
    %vm1854 = vmand %vm1852, %vm1853
    %v1855 = vsel %vm1854, 1, 0
    %v1856 = vcvt.s32.f32 %v1855
    %v1857 = vsub.f32 %v1800, -2.2
    %v1858 = vmul.f32 %v1857, 2.5
    %v1859 = vmul.f32 %v1858, %v1806
    %v1860 = vsub.f32 -1.4, %v1800
    %v1861 = vmul.f32 %v1860, 2.5
    %v1862 = vmul.f32 %v1861, %v1811
    %v1863 = vadd.f32 %v1859, %v1862
    %v1864 = vsub.f32 %v1800, -1.8
    %v1865 = vmul.f32 %v1864, 2.5
    %v1866 = vmul.f32 %v1865, %v1811
    %v1867 = vsub.f32 -1.0, %v1800
    %v1868 = vmul.f32 %v1867, 2.5
    %v1869 = vmul.f32 %v1868, %v1816
    %v1870 = vadd.f32 %v1866, %v1869
    %v1871 = vsub.f32 %v1800, -1.4
    %v1872 = vmul.f32 %v1871, 2.5
    %v1873 = vmul.f32 %v1872, %v1816
    %v1874 = vsub.f32 -0.6, %v1800
    %v1875 = vmul.f32 %v1874, 2.5
    %v1876 = vmul.f32 %v1875, %v1821
    %v1877 = vadd.f32 %v1873, %v1876
    %v1878 = vsub.f32 %v1800, -1.0
    %v1879 = vmul.f32 %v1878, 2.5
    %v1880 = vmul.f32 %v1879, %v1821
    %v1881 = vsub.f32 -0.2, %v1800
    %v1882 = vmul.f32 %v1881, 2.5
    %v1883 = vmul.f32 %v1882, %v1826
    %v1884 = vadd.f32 %v1880, %v1883
    %v1885 = vsub.f32 %v1800, -0.6
    %v1886 = vmul.f32 %v1885, 2.5
    %v1887 = vmul.f32 %v1886, %v1826
    %v1888 = vsub.f32 0.2, %v1800
    %v1889 = vmul.f32 %v1888, 2.5
    %v1890 = vmul.f32 %v1889, %v1831
    %v1891 = vadd.f32 %v1887, %v1890
    %v1892 = vsub.f32 %v1800, -0.2
    %v1893 = vmul.f32 %v1892, 2.5
    %v1894 = vmul.f32 %v1893, %v1831
    %v1895 = vsub.f32 0.6, %v1800
    %v1896 = vmul.f32 %v1895, 2.5
    %v1897 = vmul.f32 %v1896, %v1836
    %v1898 = vadd.f32 %v1894, %v1897
    %v1899 = vsub.f32 %v1800, 0.2
    %v1900 = vmul.f32 %v1899, 2.5
    %v1901 = vmul.f32 %v1900, %v1836
    %v1902 = vsub.f32 1.0, %v1800
    %v1903 = vmul.f32 %v1902, 2.5
    %v1904 = vmul.f32 %v1903, %v1841
    %v1905 = vadd.f32 %v1901, %v1904
    %v1906 = vsub.f32 %v1800, 0.6
    %v1907 = vmul.f32 %v1906, 2.5
    %v1908 = vmul.f32 %v1907, %v1841
    %v1909 = vsub.f32 1.4, %v1800
    %v1910 = vmul.f32 %v1909, 2.5
    %v1911 = vmul.f32 %v1910, %v1846
    %v1912 = vadd.f32 %v1908, %v1911
    %v1913 = vsub.f32 %v1800, 1.0
    %v1914 = vmul.f32 %v1913, 2.5
    %v1915 = vmul.f32 %v1914, %v1846
    %v1916 = vsub.f32 1.8, %v1800
    %v1917 = vmul.f32 %v1916, 2.5
    %v1918 = vmul.f32 %v1917, %v1851
    %v1919 = vadd.f32 %v1915, %v1918
    %v1920 = vsub.f32 %v1800, 1.4
    %v1921 = vmul.f32 %v1920, 2.5
    %v1922 = vmul.f32 %v1921, %v1851
    %v1923 = vsub.f32 2.2, %v1800
    %v1924 = vmul.f32 %v1923, 2.5
    %v1925 = vmul.f32 %v1924, %v1856
    %v1926 = vadd.f32 %v1922, %v1925
    %v1927 = vmul.f32 %v1857, 1.25
    %v1928 = vmul.f32 %v1927, %v1863
    %v1929 = vmul.f32 %v1867, 1.25
    %v1930 = vmul.f32 %v1929, %v1870
    %v1931 = vadd.f32 %v1928, %v1930
    %v1932 = vmul.f32 %v1864, 1.25
    %v1933 = vmul.f32 %v1932, %v1870
    %v1934 = vmul.f32 %v1874, 1.25
    %v1935 = vmul.f32 %v1934, %v1877
    %v1936 = vadd.f32 %v1933, %v1935
    %v1937 = vmul.f32 %v1871, 1.25
    %v1938 = vmul.f32 %v1937, %v1877
    %v1939 = vmul.f32 %v1881, 1.25
    %v1940 = vmul.f32 %v1939, %v1884
    %v1941 = vadd.f32 %v1938, %v1940
    %v1942 = vmul.f32 %v1878, 1.25
    %v1943 = vmul.f32 %v1942, %v1884
    %v1944 = vmul.f32 %v1888, 1.25
    %v1945 = vmul.f32 %v1944, %v1891
    %v1946 = vadd.f32 %v1943, %v1945
    %v1947 = vmul.f32 %v1885, 1.25
    %v1948 = vmul.f32 %v1947, %v1891
    %v1949 = vmul.f32 %v1895, 1.25
    %v1950 = vmul.f32 %v1949, %v1898
    %v1951 = vadd.f32 %v1948, %v1950
    %v1952 = vmul.f32 %v1892, 1.25
    %v1953 = vmul.f32 %v1952, %v1898
    %v1954 = vmul.f32 %v1902, 1.25
    %v1955 = vmul.f32 %v1954, %v1905
    %v1956 = vadd.f32 %v1953, %v1955
    %v1957 = vmul.f32 %v1899, 1.25
    %v1958 = vmul.f32 %v1957, %v1905
    %v1959 = vmul.f32 %v1909, 1.25
    %v1960 = vmul.f32 %v1959, %v1912
    %v1961 = vadd.f32 %v1958, %v1960
    %v1962 = vmul.f32 %v1906, 1.25
    %v1963 = vmul.f32 %v1962, %v1912
    %v1964 = vmul.f32 %v1916, 1.25
    %v1965 = vmul.f32 %v1964, %v1919
    %v1966 = vadd.f32 %v1963, %v1965
    %v1967 = vmul.f32 %v1913, 1.25
    %v1968 = vmul.f32 %v1967, %v1919
    %v1969 = vmul.f32 %v1923, 1.25
    %v1970 = vmul.f32 %v1969, %v1926
    %v1971 = vadd.f32 %v1968, %v1970
    %v1972 = vmul.f32 %v1857, 0.8333333
    %v1973 = vmul.f32 %v1972, %v1931
    %v1974 = vmul.f32 %v1874, 0.8333333
    %v1975 = vmul.f32 %v1974, %v1936
    %v1976 = vadd.f32 %v1973, %v1975
    %v1977 = vmul.f32 %v1864, 0.8333333
    %v1978 = vmul.f32 %v1977, %v1936
    %v1979 = vmul.f32 %v1881, 0.8333333
    %v1980 = vmul.f32 %v1979, %v1941
    %v1981 = vadd.f32 %v1978, %v1980
    %v1982 = vmul.f32 %v1871, 0.8333333
    %v1983 = vmul.f32 %v1982, %v1941
    %v1984 = vmul.f32 %v1888, 0.8333333
    %v1985 = vmul.f32 %v1984, %v1946
    %v1986 = vadd.f32 %v1983, %v1985
    %v1987 = vmul.f32 %v1878, 0.8333333
    %v1988 = vmul.f32 %v1987, %v1946
    %v1989 = vmul.f32 %v1895, 0.8333333
    %v1990 = vmul.f32 %v1989, %v1951
    %v1991 = vadd.f32 %v1988, %v1990
    %v1992 = vmul.f32 %v1885, 0.8333333
    %v1993 = vmul.f32 %v1992, %v1951
    %v1994 = vmul.f32 %v1902, 0.8333333
    %v1995 = vmul.f32 %v1994, %v1956
    %v1996 = vadd.f32 %v1993, %v1995
    %v1997 = vmul.f32 %v1892, 0.8333333
    %v1998 = vmul.f32 %v1997, %v1956
    %v1999 = vmul.f32 %v1909, 0.8333333
    %v2000 = vmul.f32 %v1999, %v1961
    %v2001 = vadd.f32 %v1998, %v2000
    %v2002 = vmul.f32 %v1899, 0.8333333
    %v2003 = vmul.f32 %v2002, %v1961
    %v2004 = vmul.f32 %v1916, 0.8333333
    %v2005 = vmul.f32 %v2004, %v1966
    %v2006 = vadd.f32 %v2003, %v2005
    %v2007 = vmul.f32 %v1906, 0.8333333
    %v2008 = vmul.f32 %v2007, %v1966
    %v2009 = vmul.f32 %v1923, 0.8333333
    %v2010 = vmul.f32 %v2009, %v1971
    %v2011 = vadd.f32 %v2008, %v2010
    %v2012 = vxor.u32 %v1800, 2147483648
    %v2013 = vmul.f32 %v2012, 1.442695
    %v2014 = vpow.pop %v2013
    %v2015 = vadd.f32 %v2014, 1.0
    %v2016 = vrcp.pop %v2015
    %v2017 = vmul.f32 %v2015, %v2016
    %v2018 = vsub.f32 1.0, %v2017
    %v2019 = vmul.f32 %v2016, %v2018
    %v2020 = vadd.f32 %v2016, %v2019
    %vm2021 = vweird.f32 %v2015
    %vm2022 = vweird.f32 %v2016
    %vm2023 = vmor %vm2021, %vm2022
    %v2024 = vsel %vm2023, %v2016, %v2020
    %v2025 = vand.u32 2147483647, %v2015
    %vm2026 = vcmp.eq.f32.partialorder %v2025, 8.507059e+37
    %v2027 = vand.u32 %v2015, 2147483648
    %v2028 = vor.u32 1.1754944e-38, %v2027
    %v2029 = vsel %vm2026, %v2028, %v2024
    %v2030 = vmul.f32 1.0, %v2029
    %v2031 = vmul.f32 %v1800, %v2030
    %v2032 = vld [vmem:[#allocation3] sm:$0xff]
    %v2033 = vld [vmem:[#allocation3 + $0x8] sm:$0xff]
    %v2034 = vld [vmem:[#allocation3 + $0x10] sm:$0xff]
    %v2035 = vld [vmem:[#allocation3 + $0x18] sm:$0xff]
    %v2036 = vld [vmem:[#allocation3 + $0x20] sm:$0xff]
    %v2037 = vld [vmem:[#allocation3 + $0x28] sm:$0xff]
    %v2038 = vld [vmem:[#allocation3 + $0x30] sm:$0xff]
    %v2039 = vld [vmem:[#allocation3 + $0x38] sm:$0xff]
    %v2040 = vld [vmem:[#allocation3 + $0x40] sm:$0xff]
    %v2041 = vld [vmem:[#allocation3 + $0x48] sm:$0xff]
    %v2042 = vld [vmem:[#allocation3 + $0x50] sm:$0xff]
    %v2043 = vld [vmem:[#allocation3 + $0x58] sm:$0xff]
    %v2044 = vld [vmem:[#allocation3 + $0x60] sm:$0xff]
    %v2045 = vld [vmem:[#allocation3 + $0x68] sm:$0xff]
    %v2046 = vld [vmem:[#allocation3 + $0x70] sm:$0xff]
    %v2047 = vld [vmem:[#allocation3 + $0x78] sm:$0xff]
    %v2048 = vld [vmem:[#allocation3 + $0x80] sm:$0xff]
    %v2049 = vld [vmem:[#allocation3 + $0x88] sm:$0xff]
    %v2050 = vld [vmem:[#allocation3 + $0x90] sm:$0xff]
    %v2051 = vld [vmem:[#allocation3 + $0x98] sm:$0xff]
    %v2052 = vld [vmem:[#allocation3 + $0xa0] sm:$0xff]
    %v2053 = vld [vmem:[#allocation3 + $0xa8] sm:$0xff]
    %v2054 = vld [vmem:[#allocation3 + $0xb0] sm:$0xff]
    %v2055 = vld [vmem:[#allocation3 + $0xb8] sm:$0xff]
    %v2056 = vld [vmem:[#allocation3 + $0xc0] sm:$0xff]
    %v2057 = vld [vmem:[#allocation3 + $0xc8] sm:$0xff]
    %v2058 = vld [vmem:[#allocation3 + $0xd0] sm:$0xff]
    %v2059 = vld [vmem:[#allocation3 + $0xd8] sm:$0xff]
    %v2060 = vld [vmem:[#allocation3 + $0xe0] sm:$0xff]
    %v2061 = vld [vmem:[#allocation3 + $0xe8] sm:$0xff]
    %v2062 = vld [vmem:[#allocation3 + $0xf0] sm:$0xff]
    %v2063 = vld [vmem:[#allocation3 + $0xf8] sm:$0xff]
    %v2064 = vld [vmem:[#allocation3 + $0x100] sm:$0xff]
    %v2065 = vld [vmem:[#allocation3 + $0x108] sm:$0xff]
    %v2066 = vld [vmem:[#allocation3 + $0x110] sm:$0xff]
    %v2067 = vld [vmem:[#allocation3 + $0x118] sm:$0xff]
    %v2068 = vld [vmem:[#allocation3 + $0x120] sm:$0xff]
    %v2069 = vld [vmem:[#allocation3 + $0x128] sm:$0xff]
    %v2070 = vld [vmem:[#allocation3 + $0x130] sm:$0xff]
    %v2071 = vld [vmem:[#allocation3 + $0x138] sm:$0xff]
    %v2072 = vld [vmem:[#allocation3 + $0x140] sm:$0xff]
    %v2073 = vld [vmem:[#allocation3 + $0x148] sm:$0xff]
    %v2074 = vld [vmem:[#allocation3 + $0x150] sm:$0xff]
    %v2075 = vld [vmem:[#allocation3 + $0x158] sm:$0xff]
    %v2076 = vld [vmem:[#allocation3 + $0x160] sm:$0xff]
    %v2077 = vld [vmem:[#allocation3 + $0x168] sm:$0xff]
    %v2078 = vld [vmem:[#allocation3 + $0x170] sm:$0xff]
    %v2079 = vld [vmem:[#allocation3 + $0x178] sm:$0xff]
    %v2080 = vld [vmem:[#allocation3 + $0x180] sm:$0xff]
    %v2081 = vld [vmem:[#allocation3 + $0x188] sm:$0xff]
    %v2082 = vld [vmem:[#allocation3 + $0x190] sm:$0xff]
    %v2083 = vld [vmem:[#allocation3 + $0x198] sm:$0xff]
    %v2084 = vld [vmem:[#allocation3 + $0x1a0] sm:$0xff]
    %v2085 = vld [vmem:[#allocation3 + $0x1a8] sm:$0xff]
    %v2086 = vld [vmem:[#allocation3 + $0x1b0] sm:$0xff]
    %v2087 = vld [vmem:[#allocation3 + $0x1b8] sm:$0xff]
    %v2088 = vld [vmem:[#allocation3 + $0x1c0] sm:$0xff]
    %v2089 = vld [vmem:[#allocation3 + $0x1c8] sm:$0xff]
    %v2090 = vld [vmem:[#allocation3 + $0x1d0] sm:$0xff]
    %v2091 = vld [vmem:[#allocation3 + $0x1d8] sm:$0xff]
    %v2092 = vld [vmem:[#allocation3 + $0x1e0] sm:$0xff]
    %v2093 = vld [vmem:[#allocation3 + $0x1e8] sm:$0xff]
    %v2094 = vld [vmem:[#allocation3 + $0x1f0] sm:$0xff]
    %v2095 = vld [vmem:[#allocation3 + $0x1f8] sm:$0xff]
    %v2096 = vld [vmem:[#allocation3 + $0x200] sm:$0xff]
    %v2097 = vld [vmem:[#allocation3 + $0x208] sm:$0xff]
    %v2098 = vld [vmem:[#allocation3 + $0x210] sm:$0xff]
    %v2099 = vld [vmem:[#allocation3 + $0x218] sm:$0xff]
    %v2100 = vld [vmem:[#allocation3 + $0x220] sm:$0xff]
    %v2101 = vld [vmem:[#allocation3 + $0x228] sm:$0xff]
    %v2102 = vld [vmem:[#allocation3 + $0x230] sm:$0xff]
    %v2103 = vld [vmem:[#allocation3 + $0x238] sm:$0xff]
    %v2104 = vld [vmem:[#allocation3 + $0x240] sm:$0xff]
    %v2105 = vld [vmem:[#allocation3 + $0x248] sm:$0xff]
    %v2106 = vld [vmem:[#allocation3 + $0x250] sm:$0xff]
    %v2107 = vld [vmem:[#allocation3 + $0x258] sm:$0xff]
    %v2108 = vld [vmem:[#allocation3 + $0x260] sm:$0xff]
    %v2109 = vld [vmem:[#allocation3 + $0x268] sm:$0xff]
    %v2110 = vld [vmem:[#allocation3 + $0x270] sm:$0xff]
    %v2111 = vld [vmem:[#allocation3 + $0x278] sm:$0xff]
    %v2112 = vld [vmem:[#allocation3 + $0x280] sm:$0xff]
    %v2113 = vld [vmem:[#allocation3 + $0x288] sm:$0xff]
    %v2114 = vld [vmem:[#allocation3 + $0x290] sm:$0xff]
    %v2115 = vld [vmem:[#allocation3 + $0x298] sm:$0xff]
    %v2116 = vld [vmem:[#allocation3 + $0x2a0] sm:$0xff]
    %v2117 = vld [vmem:[#allocation3 + $0x2a8] sm:$0xff]
    %v2118 = vld [vmem:[#allocation3 + $0x2b0] sm:$0xff]
    %v2119 = vld [vmem:[#allocation3 + $0x2b8] sm:$0xff]
    %v2120 = vld [vmem:[#allocation3 + $0x2c0] sm:$0xff]
    %v2121 = vld [vmem:[#allocation3 + $0x2c8] sm:$0xff]
    %v2122 = vld [vmem:[#allocation3 + $0x2d0] sm:$0xff]
    %v2123 = vld [vmem:[#allocation3 + $0x2d8] sm:$0xff]
    %v2124 = vld [vmem:[#allocation3 + $0x2e0] sm:$0xff]
    %v2125 = vld [vmem:[#allocation3 + $0x2e8] sm:$0xff]
    %v2126 = vld [vmem:[#allocation3 + $0x2f0] sm:$0xff]
    %v2127 = vld [vmem:[#allocation3 + $0x2f8] sm:$0xff]
    %v2128 = vld [vmem:[#allocation3 + $0x300] sm:$0xff]
    %v2129 = vld [vmem:[#allocation3 + $0x308] sm:$0xff]
    %v2130 = vld [vmem:[#allocation3 + $0x310] sm:$0xff]
    %v2131 = vld [vmem:[#allocation3 + $0x318] sm:$0xff]
    %v2132 = vld [vmem:[#allocation3 + $0x320] sm:$0xff]
    %v2133 = vld [vmem:[#allocation3 + $0x328] sm:$0xff]
    %v2134 = vld [vmem:[#allocation3 + $0x330] sm:$0xff]
    %v2135 = vld [vmem:[#allocation3 + $0x338] sm:$0xff]
    %v2136 = vld [vmem:[#allocation3 + $0x340] sm:$0xff]
    %v2137 = vld [vmem:[#allocation3 + $0x348] sm:$0xff]
    %v2138 = vld [vmem:[#allocation3 + $0x350] sm:$0xff]
    %v2139 = vld [vmem:[#allocation3 + $0x358] sm:$0xff]
    %v2140 = vld [vmem:[#allocation3 + $0x360] sm:$0xff]
    %v2141 = vld [vmem:[#allocation3 + $0x368] sm:$0xff]
    %v2142 = vld [vmem:[#allocation3 + $0x370] sm:$0xff]
    %v2143 = vld [vmem:[#allocation3 + $0x378] sm:$0xff]
    %v2144 = vld [vmem:[#allocation3 + $0x380] sm:$0xff]
    %v2145 = vld [vmem:[#allocation3 + $0x388] sm:$0xff]
    %v2146 = vld [vmem:[#allocation3 + $0x390] sm:$0xff]
    %v2147 = vld [vmem:[#allocation3 + $0x398] sm:$0xff]
    %v2148 = vld [vmem:[#allocation3 + $0x3a0] sm:$0xff]
    %v2149 = vld [vmem:[#allocation3 + $0x3a8] sm:$0xff]
    %v2150 = vld [vmem:[#allocation3 + $0x3b0] sm:$0xff]
    %v2151 = vld [vmem:[#allocation3 + $0x3b8] sm:$0xff]
    %v2152 = vld [vmem:[#allocation3 + $0x3c0] sm:$0xff]
    %v2153 = vld [vmem:[#allocation3 + $0x3c8] sm:$0xff]
    %v2154 = vld [vmem:[#allocation3 + $0x3d0] sm:$0xff]
    %v2155 = vld [vmem:[#allocation3 + $0x3d8] sm:$0xff]
    %v2156 = vld [vmem:[#allocation3 + $0x3e0] sm:$0xff]
    %v2157 = vld [vmem:[#allocation3 + $0x3e8] sm:$0xff]
    %v2158 = vld [vmem:[#allocation3 + $0x3f0] sm:$0xff]
    %v2159 = vld [vmem:[#allocation3 + $0x3f8] sm:$0xff]
    %v2160 = vld [vmem:[#allocation3 + $0x400] sm:$0xff]
    %v2161 = vld [vmem:[#allocation3 + $0x408] sm:$0xff]
    %v2162 = vld [vmem:[#allocation3 + $0x410] sm:$0xff]
    %v2163 = vld [vmem:[#allocation3 + $0x418] sm:$0xff]
    %v2164 = vld [vmem:[#allocation3 + $0x420] sm:$0xff]
    %v2165 = vld [vmem:[#allocation3 + $0x428] sm:$0xff]
    %v2166 = vld [vmem:[#allocation3 + $0x430] sm:$0xff]
    %v2167 = vld [vmem:[#allocation3 + $0x438] sm:$0xff]
    %v2168 = vld [vmem:[#allocation3 + $0x440] sm:$0xff]
    %v2169 = vld [vmem:[#allocation3 + $0x448] sm:$0xff]
    %v2170 = vld [vmem:[#allocation3 + $0x450] sm:$0xff]
    %v2171 = vld [vmem:[#allocation3 + $0x458] sm:$0xff]
    %v2172 = vld [vmem:[#allocation3 + $0x460] sm:$0xff]
    %v2173 = vld [vmem:[#allocation3 + $0x468] sm:$0xff]
    %v2174 = vld [vmem:[#allocation3 + $0x470] sm:$0xff]
    %v2175 = vld [vmem:[#allocation3 + $0x478] sm:$0xff]
    %2176 = vmatpush.msra.mxu0 %v2047
    %2177 = vmatpush.msra.mxu0 %v2046
    %2178 = vmatpush.msra.mxu0 %v2045
    %2179 = vmatpush.msra.mxu0 %v2044
    %2180 = vmatpush.msra.mxu0 %v2043
    %2181 = vmatpush.msra.mxu0 %v2042
    %2182 = vmatpush.msra.mxu0 %v2041
    %2183 = vmatpush.msra.mxu0 %v2040
    %2184 = vmatpush.msra.mxu0 %v2039
    %2185 = vmatpush.msra.mxu0 %v2038
    %2186 = vmatpush.msra.mxu0 %v2037
    %2187 = vmatpush.msra.mxu0 %v2036
    %2188 = vmatpush.msra.mxu0 %v2035
    %2189 = vmatpush.msra.mxu0 %v2034
    %2190 = vmatpush.msra.mxu0 %v2033
    %2191 = vmatpush.msra.mxu0 %v2032
    %2192 = vmatmul.f32.gmra.mxu0 %v2031
    %v2193 = vpop.f32.mrf.mxu0
    %v2194 = vadd.f32 0.0, %v2193
    %2195 = vdwg.mxu0
    %2196 = vmatpush.msra.mxu0 %v2063
    %2197 = vmatpush.msra.mxu0 %v2062
    %2198 = vmatpush.msra.mxu0 %v2061
    %2199 = vmatpush.msra.mxu0 %v2060
    %2200 = vmatpush.msra.mxu0 %v2059
    %2201 = vmatpush.msra.mxu0 %v2058
    %2202 = vmatpush.msra.mxu0 %v2057
    %2203 = vmatpush.msra.mxu0 %v2056
    %2204 = vmatpush.msra.mxu0 %v2055
    %2205 = vmatpush.msra.mxu0 %v2054
    %2206 = vmatpush.msra.mxu0 %v2053
    %2207 = vmatpush.msra.mxu0 %v2052
    %2208 = vmatpush.msra.mxu0 %v2051
    %2209 = vmatpush.msra.mxu0 %v2050
    %2210 = vmatpush.msra.mxu0 %v2049
    %2211 = vmatpush.msra.mxu0 %v2048
    %2212 = vmatmul.f32.gmra.mxu0 %v1976
    %v2213 = vpop.f32.mrf.mxu0
    %v2214 = vadd.f32 %v2194, %v2213
    %2215 = vdwg.mxu0
    %2216 = vmatpush.msra.mxu0 %v2079
    %2217 = vmatpush.msra.mxu0 %v2078
    %2218 = vmatpush.msra.mxu0 %v2077
    %2219 = vmatpush.msra.mxu0 %v2076
    %2220 = vmatpush.msra.mxu0 %v2075
    %2221 = vmatpush.msra.mxu0 %v2074
    %2222 = vmatpush.msra.mxu0 %v2073
    %2223 = vmatpush.msra.mxu0 %v2072
    %2224 = vmatpush.msra.mxu0 %v2071
    %2225 = vmatpush.msra.mxu0 %v2070
    %2226 = vmatpush.msra.mxu0 %v2069
    %2227 = vmatpush.msra.mxu0 %v2068
    %2228 = vmatpush.msra.mxu0 %v2067
    %2229 = vmatpush.msra.mxu0 %v2066
    %2230 = vmatpush.msra.mxu0 %v2065
    %2231 = vmatpush.msra.mxu0 %v2064
    %2232 = vmatmul.f32.gmra.mxu0 %v1981
    %v2233 = vpop.f32.mrf.mxu0
    %v2234 = vadd.f32 %v2214, %v2233
    %2235 = vdwg.mxu0
    %2236 = vmatpush.msra.mxu0 %v2095
    %2237 = vmatpush.msra.mxu0 %v2094
    %2238 = vmatpush.msra.mxu0 %v2093
    %2239 = vmatpush.msra.mxu0 %v2092
    %2240 = vmatpush.msra.mxu0 %v2091
    %2241 = vmatpush.msra.mxu0 %v2090
    %2242 = vmatpush.msra.mxu0 %v2089
    %2243 = vmatpush.msra.mxu0 %v2088
    %2244 = vmatpush.msra.mxu0 %v2087
    %2245 = vmatpush.msra.mxu0 %v2086
    %2246 = vmatpush.msra.mxu0 %v2085
    %2247 = vmatpush.msra.mxu0 %v2084
    %2248 = vmatpush.msra.mxu0 %v2083
    %2249 = vmatpush.msra.mxu0 %v2082
    %2250 = vmatpush.msra.mxu0 %v2081
    %2251 = vmatpush.msra.mxu0 %v2080
    %2252 = vmatmul.f32.gmra.mxu0 %v1986
    %v2253 = vpop.f32.mrf.mxu0
    %v2254 = vadd.f32 %v2234, %v2253
    %2255 = vdwg.mxu0
    %2256 = vmatpush.msra.mxu0 %v2111
    %2257 = vmatpush.msra.mxu0 %v2110
    %2258 = vmatpush.msra.mxu0 %v2109
    %2259 = vmatpush.msra.mxu0 %v2108
    %2260 = vmatpush.msra.mxu0 %v2107
    %2261 = vmatpush.msra.mxu0 %v2106
    %2262 = vmatpush.msra.mxu0 %v2105
    %2263 = vmatpush.msra.mxu0 %v2104
    %2264 = vmatpush.msra.mxu0 %v2103
    %2265 = vmatpush.msra.mxu0 %v2102
    %2266 = vmatpush.msra.mxu0 %v2101
    %2267 = vmatpush.msra.mxu0 %v2100
    %2268 = vmatpush.msra.mxu0 %v2099
    %2269 = vmatpush.msra.mxu0 %v2098
    %2270 = vmatpush.msra.mxu0 %v2097
    %2271 = vmatpush.msra.mxu0 %v2096
    %2272 = vmatmul.f32.gmra.mxu0 %v1991
    %v2273 = vpop.f32.mrf.mxu0
    %v2274 = vadd.f32 %v2254, %v2273
    %2275 = vdwg.mxu0
    %2276 = vmatpush.msra.mxu0 %v2127
    %2277 = vmatpush.msra.mxu0 %v2126
    %2278 = vmatpush.msra.mxu0 %v2125
    %2279 = vmatpush.msra.mxu0 %v2124
    %2280 = vmatpush.msra.mxu0 %v2123
    %2281 = vmatpush.msra.mxu0 %v2122
    %2282 = vmatpush.msra.mxu0 %v2121
    %2283 = vmatpush.msra.mxu0 %v2120
    %2284 = vmatpush.msra.mxu0 %v2119
    %2285 = vmatpush.msra.mxu0 %v2118
    %2286 = vmatpush.msra.mxu0 %v2117
    %2287 = vmatpush.msra.mxu0 %v2116
    %2288 = vmatpush.msra.mxu0 %v2115
    %2289 = vmatpush.msra.mxu0 %v2114
    %2290 = vmatpush.msra.mxu0 %v2113
    %2291 = vmatpush.msra.mxu0 %v2112
    %2292 = vmatmul.f32.gmra.mxu0 %v1996
    %v2293 = vpop.f32.mrf.mxu0
    %v2294 = vadd.f32 %v2274, %v2293
    %2295 = vdwg.mxu0
    %2296 = vmatpush.msra.mxu0 %v2143
    %2297 = vmatpush.msra.mxu0 %v2142
    %2298 = vmatpush.msra.mxu0 %v2141
    %2299 = vmatpush.msra.mxu0 %v2140
    %2300 = vmatpush.msra.mxu0 %v2139
    %2301 = vmatpush.msra.mxu0 %v2138
    %2302 = vmatpush.msra.mxu0 %v2137
    %2303 = vmatpush.msra.mxu0 %v2136
    %2304 = vmatpush.msra.mxu0 %v2135
    %2305 = vmatpush.msra.mxu0 %v2134
    %2306 = vmatpush.msra.mxu0 %v2133
    %2307 = vmatpush.msra.mxu0 %v2132
    %2308 = vmatpush.msra.mxu0 %v2131
    %2309 = vmatpush.msra.mxu0 %v2130
    %2310 = vmatpush.msra.mxu0 %v2129
    %2311 = vmatpush.msra.mxu0 %v2128
    %2312 = vmatmul.f32.gmra.mxu0 %v2001
    %v2313 = vpop.f32.mrf.mxu0
    %v2314 = vadd.f32 %v2294, %v2313
    %2315 = vdwg.mxu0
    %2316 = vmatpush.msra.mxu0 %v2159
    %2317 = vmatpush.msra.mxu0 %v2158
    %2318 = vmatpush.msra.mxu0 %v2157
    %2319 = vmatpush.msra.mxu0 %v2156
    %2320 = vmatpush.msra.mxu0 %v2155
    %2321 = vmatpush.msra.mxu0 %v2154
    %2322 = vmatpush.msra.mxu0 %v2153
    %2323 = vmatpush.msra.mxu0 %v2152
    %2324 = vmatpush.msra.mxu0 %v2151
    %2325 = vmatpush.msra.mxu0 %v2150
    %2326 = vmatpush.msra.mxu0 %v2149
    %2327 = vmatpush.msra.mxu0 %v2148
    %2328 = vmatpush.msra.mxu0 %v2147
    %2329 = vmatpush.msra.mxu0 %v2146
    %2330 = vmatpush.msra.mxu0 %v2145
    %2331 = vmatpush.msra.mxu0 %v2144
    %2332 = vmatmul.f32.gmra.mxu0 %v2006
    %v2333 = vpop.f32.mrf.mxu0
    %v2334 = vadd.f32 %v2314, %v2333
    %2335 = vdwg.mxu0
    %2336 = vmatpush.msra.mxu0 %v2175
    %2337 = vmatpush.msra.mxu0 %v2174
    %2338 = vmatpush.msra.mxu0 %v2173
    %2339 = vmatpush.msra.mxu0 %v2172
    %2340 = vmatpush.msra.mxu0 %v2171
    %2341 = vmatpush.msra.mxu0 %v2170
    %2342 = vmatpush.msra.mxu0 %v2169
    %2343 = vmatpush.msra.mxu0 %v2168
    %2344 = vmatpush.msra.mxu0 %v2167
    %2345 = vmatpush.msra.mxu0 %v2166
    %2346 = vmatpush.msra.mxu0 %v2165
    %2347 = vmatpush.msra.mxu0 %v2164
    %2348 = vmatpush.msra.mxu0 %v2163
    %2349 = vmatpush.msra.mxu0 %v2162
    %2350 = vmatpush.msra.mxu0 %v2161
    %2351 = vmatpush.msra.mxu0 %v2160
    %2352 = vmatmul.f32.gmra.mxu0 %v2011
    %v2353 = vpop.f32.mrf.mxu0
    %v2354 = vadd.f32 %v2334, %v2353
    %2355 = vdwg.mxu0
    %2356 = vst [vmem:[#allocation7] sm:$0x3] %v2354
    // Predicated region
    $region18: #{vqvae_pallas.1} parent=1 // pred_check
      _
    $region19: #{vqvae_pallas.1} parent=1 // pred_check_branch
      %2358 = sbr.rel (0) target = $region21
    $region20: #{vqvae_pallas.1} parent=1 // pred_region
      %2360 = vsyncadd [#allocation5], 0
      %s2362 = sshll.u32 [#allocation7], 4
      %s2363 = int_to_ptr.vmem [resolvable:$true] %s2362
      %s2364 = sshll.u32 %s3, 4
      %s2365 = int_to_ptr.hbm [resolvable:$true] %s2364
      %2367 = dma.vmem_to_hbm [thread:$0]  %s2363, 32, %s2365, [#allocation5]
    $region21: #{vqvae_pallas.1} parent=1 // pred_fallthru
      _
    // Predicated region
    $region22: #{vqvae_pallas.1} parent=1 // pred_check
      _
    $region23: #{vqvae_pallas.1} parent=1 // pred_check_branch
      %2369 = sbr.rel (0) target = $region25
    $region24: #{vqvae_pallas.1} parent=1 // pred_region
      %2371 = vsyncadd [#allocation6], 0
      %s2373 = sshll.u32 %s4, 4
      %s2374 = int_to_ptr.vmem [resolvable:$true] %s2373
      %2376 = dma.smem_to_vmem [#allocation8], 16, %s2374, [#allocation6]
    $region25: #{vqvae_pallas.1} parent=1 // pred_fallthru
      _
    // Predicated region
    $region26: #{vqvae_pallas.1} parent=1 // pred_check
      _
    $region27: #{vqvae_pallas.1} parent=1 // pred_check_branch
      %2378 = sbr.rel (0) target = $region29
    $region28: #{vqvae_pallas.1} parent=1 // pred_region
      %2380 = dma.done [#allocation5], 32
    $region29: #{vqvae_pallas.1} parent=1 // pred_fallthru
      _
    // Predicated region
    $region30: #{vqvae_pallas.1} parent=1 // pred_check
      _
    $region31: #{vqvae_pallas.1} parent=1 // pred_check_branch
      %2382 = sbr.rel (0) target = $region33
    $region32: #{vqvae_pallas.1} parent=1 // pred_region
      %2384 = dma.done [#allocation6], 16
    $region33: #{vqvae_pallas.1} parent=1 // pred_fallthru
      _
    %2385 = sfence
    %2386 = vsyncpa [#allocation4], 1
    %2387 = vsyncpa [#allocation5], 1
    %2388 = vsyncpa [#allocation6], 1

</llo_original>
